<compile_context>
chip_gen: v5e
topology: v5e:2x2
jax: 0.10.0
libtpu: 0.0.40
codegen_flags: <defaults>
</compile_context>

<pallas_src>
import math

import jax
import jax.numpy as jnp
from jax import lax
from jax.experimental import pallas as pl
from jax.experimental.pallas import tpu as pltpu


def _round_up(v, m):
    return ((v + m - 1) // m) * m


def _vmem_limit_bytes():
    # v5e/v6e: 128 MiB physical VMEM -> ~96 MiB scoped; v7x: 64 MiB -> ~48 MiB.
    try:
        cap = pltpu.get_tpu_info().vmem_capacity_bytes
        return int(min(cap * 3 // 4, 100 * 1024 * 1024))
    except Exception:
        return 64 * 1024 * 1024


# --------------------- BatchNorm statistics (tiled reduction) ----------------

def bn_stats(x2d, *, row_block=512, vmem_limit=None):
    """Per-feature [sum; sum-of-squares] over the rows of x2d (M, F) -> (2, F)."""
    m, f = x2d.shape
    tr = m if m <= row_block else row_block
    n_blocks = pl.cdiv(m, tr)
    has_tail = (m % tr) != 0

    def kernel(x_ref, stat_ref):
        i = pl.program_id(0)

        @pl.when(i == 0)
        def _():
            stat_ref[...] = jnp.zeros_like(stat_ref)

        x = x_ref[...]
        if has_tail:
            rows = lax.broadcasted_iota(jnp.int32, x.shape, 0)
            x = jnp.where(rows < (m - i * tr), x, 0.0)
        stat_ref[...] += jnp.concatenate(
            [jnp.sum(x, axis=0, keepdims=True),
             jnp.sum(x * x, axis=0, keepdims=True)], axis=0)

    return pl.pallas_call(
        kernel,
        out_shape=jax.ShapeDtypeStruct((2, f), jnp.float32),
        grid_spec=pltpu.PrefetchScalarGridSpec(
            num_scalar_prefetch=0,
            grid=(n_blocks,),
            in_specs=[pl.BlockSpec((tr, f), lambda i: (i, 0))],
            out_specs=pl.BlockSpec((2, f), lambda i: (0, 0)),
        ),
        compiler_params=pltpu.CompilerParams(
            dimension_semantics=("arbitrary",),
            vmem_limit_bytes=vmem_limit or _vmem_limit_bytes()),
    )(x2d)


# ----------- fused (input projection + LSTM recurrence) kernel ---------------

def lstm_recurrence(x_pad, bias, w_eff, w_hh_t, *, hidden_pad, time_block,
                    t_real, bidirectional, vmem_limit=None):
    """Fused BN-folded input projection + LSTM recurrence for all timesteps.

    x_pad:  (Tp, Bp, Fp)     padded input (lane/sublane aligned)
    bias:   (nd, 1, 4Hp)     BN shift folded through W_ih (padded slots = 0)
    w_eff:  (nd, Fp, 4Hp)    BN scale folded into W_ih^T (HBM resident)
    w_hh_t: (nd, Hp, 4Hp)    transposed recurrent weights (HBM resident)
    Returns a tuple of per-direction outputs, each (Tp, Bp, Hp) float32.
    """
    t_pad, bp, fp = x_pad.shape
    hp = hidden_pad
    g = 4 * hp
    tt = time_block
    assert t_pad % tt == 0
    n_t = t_pad // tt
    num_dirs = 2 if bidirectional else 1
    needs_tmask = (t_pad != t_real)
    unroll = min(tt, 8)            # partial unroll keeps vreg pressure bounded

    def kernel(*refs):
        if bidirectional:
            (xf_ref, xb_ref, bias_ref, weff_hbm, whh_hbm,
             outf_ref, outb_ref,
             weff_f_v, whh_f_v, weff_b_v, whh_b_v,
             gxf_v, gxb_v, hf_v, cf_v, hb_v, cb_v, sem) = refs
        else:
            (xf_ref, bias_ref, weff_hbm, whh_hbm, outf_ref,
             weff_f_v, whh_f_v, gxf_v, hf_v, cf_v, sem) = refs

        t = pl.program_id(0)

        @pl.when(t == 0)
        def _():
            # Single-buffered weights: DMA'd once per call, resident thereafter
            # (one-time cost; no per-step refetch, half the VMEM of a
            #  double-buffered BlockSpec input).
            cps = [pltpu.make_async_copy(weff_hbm.at[0], weff_f_v, sem.at[0]),
                   pltpu.make_async_copy(whh_hbm.at[0], whh_f_v, sem.at[1])]
            if bidirectional:
                cps += [pltpu.make_async_copy(weff_hbm.at[1], weff_b_v, sem.at[2]),
                        pltpu.make_async_copy(whh_hbm.at[1], whh_b_v, sem.at[3])]
            for cp in cps:
                cp.start()
            for cp in cps:
                cp.wait()
            hf_v[...] = jnp.zeros_like(hf_v)
            cf_v[...] = jnp.zeros_like(cf_v)
            if bidirectional:
                hb_v[...] = jnp.zeros_like(hb_v)
                cb_v[...] = jnp.zeros_like(cb_v)

        # ---- fused input projection for this time block (gx never hits HBM) -
        xf = xf_ref[...].reshape(tt * bp, fp)
        gxf_v[...] = (jnp.dot(xf, weff_f_v[...],
                              preferred_element_type=jnp.float32)
                      + bias_ref[0]).reshape(tt, bp, g)
        if bidirectional:
            xb = xb_ref[...].reshape(tt * bp, fp)
            gxb_v[...] = (jnp.dot(xb, weff_b_v[...],
                                  preferred_element_type=jnp.float32)
                          + bias_ref[1]).reshape(tt, bp, g)

        whh_f = whh_f_v[...]
        if bidirectional:
            whh_b = whh_b_v[...]
            blk_b = n_t - 1 - t            # backward time-block index

        def lstm_cell(gates, c_prev):
            # Hp is a multiple of 128 -> lane-aligned gate slices.
            i_g = jax.nn.sigmoid(gates[:, 0 * hp:1 * hp])
            f_g = jax.nn.sigmoid(gates[:, 1 * hp:2 * hp])
            g_g = jnp.tanh(gates[:, 2 * hp:3 * hp])
            o_g = jax.nn.sigmoid(gates[:, 3 * hp:4 * hp])
            c_new = f_g * c_prev + i_g * g_g
            h_new = o_g * jnp.tanh(c_new)
            return h_new, c_new

        def step(s, carry):
            if bidirectional:
                h_f, c_f, h_b, c_b = carry
            else:
                h_f, c_f = carry

            # forward direction: in-block local time = s
            gates_f = gxf_v[s] + jnp.dot(h_f, whh_f,
                                         preferred_element_type=jnp.float32)
            h_f, c_f = lstm_cell(gates_f, c_f)
            outf_ref[s] = h_f

            if not bidirectional:
                return (h_f, c_f)

            # backward direction: in-block local time = tt-1-s (reverse sweep)
            lb = tt - 1 - s
            gates_b = gxb_v[lb] + jnp.dot(h_b, whh_b,
                                          preferred_element_type=jnp.float32)
            h_b_new, c_b_new = lstm_cell(gates_b, c_b)
            if needs_tmask:
                # Padded tail timesteps must not advance the backward carry.
                valid = (blk_b * tt + lb) < t_real
                h_b_new = jnp.where(valid, h_b_new, h_b)
                c_b_new = jnp.where(valid, c_b_new, c_b)
            outb_ref[lb] = h_b_new
            return (h_f, c_f, h_b_new, c_b_new)

        init = (hf_v[...], cf_v[...])
        if bidirectional:
            init = init + (hb_v[...], cb_v[...])
        carry = lax.fori_loop(0, tt, step, init, unroll=unroll)
        hf_v[...] = carry[0]
        cf_v[...] = carry[1]
        if bidirectional:
            hb_v[...] = carry[2]
            cb_v[...] = carry[3]

    # ---- specs ---------------------------------------------------------------
    in_specs = [pl.BlockSpec((tt, bp, fp), lambda t: (t, 0, 0))]          # x fwd
    if bidirectional:
        in_specs.append(
            pl.BlockSpec((tt, bp, fp), lambda t: (n_t - 1 - t, 0, 0)))    # x bwd
    in_specs += [
        pl.BlockSpec((num_dirs, 1, g), lambda t: (0, 0, 0)),  # bias (resident)
        pl.BlockSpec(memory_space=pl.ANY),                    # W_eff  (HBM)
        pl.BlockSpec(memory_space=pl.ANY),                    # W_hh^T (HBM)
    ]

    out_shape = [jax.ShapeDtypeStruct((t_pad, bp, hp), jnp.float32)]
    out_specs = [pl.BlockSpec((tt, bp, hp), lambda t: (t, 0, 0))]
    if bidirectional:
        out_shape.append(jax.ShapeDtypeStruct((t_pad, bp, hp), jnp.float32))
        out_specs.append(pl.BlockSpec((tt, bp, hp), lambda t: (n_t - 1 - t, 0, 0)))

    scratch_shapes = [
        pltpu.VMEM((fp, g), jnp.float32),      # W_eff  fwd (single-buffered)
        pltpu.VMEM((hp, g), jnp.float32),      # W_hh^T fwd
    ]
    if bidirectional:
        scratch_shapes += [
            pltpu.VMEM((fp, g), jnp.float32),  # W_eff  bwd
            pltpu.VMEM((hp, g), jnp.float32),  # W_hh^T bwd
        ]
    scratch_shapes += [pltpu.VMEM((tt, bp, g), jnp.float32)]        # gates_x fwd
    if bidirectional:
        scratch_shapes += [pltpu.VMEM((tt, bp, g), jnp.float32)]    # gates_x bwd
    scratch_shapes += [pltpu.VMEM((bp, hp), jnp.float32),           # h fwd
                       pltpu.VMEM((bp, hp), jnp.float32)]           # c fwd
    if bidirectional:
        scratch_shapes += [pltpu.VMEM((bp, hp), jnp.float32),       # h bwd
                           pltpu.VMEM((bp, hp), jnp.float32)]       # c bwd
    scratch_shapes += [pltpu.SemaphoreType.DMA((2 * num_dirs,))]

    operands = [x_pad]
    if bidirectional:
        operands.append(x_pad)
    operands += [bias, w_eff, w_hh_t]

    return pl.pallas_call(
        kernel,
        out_shape=tuple(out_shape),
        grid_spec=pltpu.PrefetchScalarGridSpec(
            num_scalar_prefetch=0,
            grid=(n_t,),
            in_specs=in_specs,
            out_specs=out_specs,
            scratch_shapes=scratch_shapes,
        ),
        compiler_params=pltpu.CompilerParams(
            dimension_semantics=("arbitrary",),
            vmem_limit_bytes=vmem_limit or _vmem_limit_bytes()),
    )(*operands)


# ------------------------------ BatchRNN forward -----------------------------

def batch_rnn_forward(x, params, *, bidirectional, time_block=None):
    """Pallas implementation of BatchRNN.forward on a dense (T, B, F) input."""
    t_len, b, f = x.shape
    h = params["w_hh_f"].shape[1]
    eps = 1e-5
    vmem_limit = _vmem_limit_bytes()

    # --- BatchNorm statistics over the flattened (T*B, F) "data" tensor ------
    # (training-mode forward: biased variance, eps=1e-5).
    # TODO(synk): E[x^2]-E[x]^2 can cancel for features with large |mean|/std;
    # a shifted two-pass variance would be more robust for such inputs.
    x2d = x.reshape(t_len * b, f)
    m = t_len * b
    stats = bn_stats(x2d, vmem_limit=vmem_limit)       # (2, F): sum, sum of sq
    mean = stats[0] / m
    var = stats[1] / m - mean * mean
    scale = params["bn_gamma"] * lax.rsqrt(var + eps)  # per-feature affine
    shift = params["bn_beta"] - mean * scale

    # --- lane/sublane-friendly padding ----------------------------------------
    hp = _round_up(h, 128)     # lane-aligned gate slices & lane-dense stores
    bp = _round_up(b, 8)       # sublane-aligned rows
    fp = _round_up(f, 128)     # lane-dense matmul contraction
    if time_block is None:
        time_block = min(16, t_len)
    tt = time_block
    t_pad = _round_up(t_len, tt)

    # --- Fold BN into padded input-projection weights (exact: BN is affine) ---
    def fold_w_ih(w_ih):                                # (4H, F) -> (Fp, 4Hp)
        w_t = (scale[:, None] * w_ih.T).reshape(f, 4, h)
        return jnp.pad(w_t, ((0, fp - f), (0, 0), (0, hp - h))).reshape(fp, 4 * hp)

    def fold_bias(w_ih):                                # -> (1, 4Hp)
        bvec = (shift @ w_ih.T).reshape(4, h)
        return jnp.pad(bvec, ((0, 0), (0, hp - h))).reshape(1, 4 * hp)

    def pad_w_hh(w_hh):                                 # (4H, H) -> (Hp, 4Hp)
        w_t = w_hh.T.reshape(h, 4, h)
        return jnp.pad(w_t, ((0, hp - h), (0, 0), (0, hp - h))).reshape(hp, 4 * hp)

    w_ih_list = [params["w_ih_f"]] + ([params["w_ih_b"]] if bidirectional else [])
    w_hh_list = [params["w_hh_f"]] + ([params["w_hh_b"]] if bidirectional else [])
    w_eff = jnp.stack([fold_w_ih(w) for w in w_ih_list], axis=0)   # (nd, Fp, 4Hp)
    bias = jnp.stack([fold_bias(w) for w in w_ih_list], axis=0)    # (nd, 1, 4Hp)
    w_hh_t = jnp.stack([pad_w_hh(w) for w in w_hh_list], axis=0)   # (nd, Hp, 4Hp)

    x_pad = jnp.pad(x, ((0, t_pad - t_len), (0, bp - b), (0, fp - f)))

    outs = lstm_recurrence(x_pad, bias, w_eff, w_hh_t,
                           hidden_pad=hp, time_block=tt, t_real=t_len,
                           bidirectional=bidirectional, vmem_limit=vmem_limit)

    # Bidirectional sum (x.data[:, :H] + x.data[:, H:]) and un-pad.
    out = outs[0] + outs[1] if bidirectional else outs[0]
    return out[:t_len, :b, :h]


# ------------------------------- pure-JAX reference --------------------------

def _ref_forward(x, params, *, bidirectional):
    T, B, F = x.shape
    H = params["w_hh_f"].shape[1]
    x2d = x.reshape(T * B, F)
    mean = jnp.mean(x2d, axis=0, keepdims=True)
    var = jnp.mean((x2d - mean) ** 2, axis=0, keepdims=True)
    xn = ((x2d - mean) / jnp.sqrt(var + 1e-5) * params["bn_gamma"]
          + params["bn_beta"]).reshape(T, B, F)

    def run(xs, w_ih, w_hh):
        def step(carry, x_t):
            h, c = carry
            gates = x_t @ w_ih.T + h @ w_hh.T
            i, f, g, o = jnp.split(gates, 4, axis=-1)
            c = jax.nn.sigmoid(f) * c + jax.nn.sigmoid(i) * jnp.tanh(g)
            h = jax.nn.sigmoid(o) * jnp.tanh(c)
            return (h, c), h
        init = (jnp.zeros((B, H)), jnp.zeros((B, H)))
        _, ys = jax.lax.scan(step, init, xs)
        return ys

    out = run(xn, params["w_ih_f"], params["w_hh_f"])
    if bidirectional:
        out = out + run(xn[::-1], params["w_ih_b"], params["w_hh_b"])[::-1]
    return out


# ------------------------------------ main -----------------------------------

if __name__ == "__main__":
    T, B, input_size, hidden_size = 8, 2, 16, 32
    bidirectional = True

    key = jax.random.PRNGKey(0)
    k_x, k1, k2, k3, k4 = jax.random.split(key, 5)

    x = jax.random.normal(k_x, (T, B, input_size), dtype=jnp.float32)

    k = 1.0 / math.sqrt(hidden_size)                 # PyTorch LSTM default init
    params = {
        "bn_gamma": jnp.ones((input_size,), jnp.float32),   # BatchNorm1d defaults
        "bn_beta": jnp.zeros((input_size,), jnp.float32),
        "w_ih_f": jax.random.uniform(k1, (4 * hidden_size, input_size),
                                     jnp.float32, -k, k),
        "w_hh_f": jax.random.uniform(k2, (4 * hidden_size, hidden_size),
                                     jnp.float32, -k, k),
        "w_ih_b": jax.random.uniform(k3, (4 * hidden_size, input_size),
                                     jnp.float32, -k, k),
        "w_hh_b": jax.random.uniform(k4, (4 * hidden_size, hidden_size),
                                     jnp.float32, -k, k),
    }

    fwd = jax.jit(lambda xx: batch_rnn_forward(xx, params,
                                               bidirectional=bidirectional))
    out = jax.block_until_ready(fwd(x))

    ref = _ref_forward(x, params, bidirectional=bidirectional)
    assert out.shape == (T, B, hidden_size), out.shape
    assert jnp.allclose(out, ref, atol=1e-4, rtol=1e-4), \
        float(jnp.max(jnp.abs(out - ref)))

    print("KERNEL_OK")
</pallas_src>

<mosaic_0001>
module attributes {stable_mosaic.version = 11 : i64} {
  func.func @kernel(%arg0: i32, %arg1: memref<16x16xf32, #tpu.memory_space<vmem>>, %arg2: memref<2x16xf32, #tpu.memory_space<vmem>>) attributes {dimension_semantics = [#tpu.dimension_semantics<arbitrary>], iteration_bounds = array<i64: 1>, scalar_prefetch = 0 : i64, scratch_operands = 0 : i64, tpu.core_type = #tpu.core_type<tc>, window_params = [{transform_indices = @transform_0, window_bounds = array<i64: 16, 16>}, {pipeline_mode = #tpu.pipeline_mode<synchronous>, transform_indices = @transform_1, window_bounds = array<i64: 2, 16>}]} {
    %c0_i32 = arith.constant 0 : i32
    %0 = arith.cmpi eq, %arg0, %c0_i32 : i32
    %1 = arith.extui %0 : i1 to i32
    %c0_i32_0 = arith.constant 0 : i32
    %2 = arith.cmpi ne, %1, %c0_i32_0 : i32
    scf.if %2 {
      %cst_7 = arith.constant 0.000000e+00 : f32
      %13 = vector.broadcast %cst_7 : f32 to vector<2x16xf32>
      %c0_8 = arith.constant 0 : index
      %c0_9 = arith.constant 0 : index
      %14 = vector.load %arg2[%c0_8, %c0_9] : memref<2x16xf32, #tpu.memory_space<vmem>>, vector<2x16xf32>
      tpu.vector_store %arg2[%c0_8, %c0_9], %13 {strides = array<i32>} : memref<2x16xf32, #tpu.memory_space<vmem>>, vector<2x16xf32>,
    } else {
    }
    %c0 = arith.constant 0 : index
    %c0_1 = arith.constant 0 : index
    %3 = vector.load %arg1[%c0, %c0_1] : memref<16x16xf32, #tpu.memory_space<vmem>>, vector<16x16xf32>
    %c0_2 = arith.constant 0 : index
    %c0_3 = arith.constant 0 : index
    %4 = vector.load %arg2[%c0_2, %c0_3] : memref<2x16xf32, #tpu.memory_space<vmem>>, vector<2x16xf32>
    %cst = arith.constant dense<0.000000e+00> : vector<16xf32>
    %5 = vector.multi_reduction <add>, %3, %cst [0] : vector<16x16xf32> to vector<16xf32>
    %6 = vector.shape_cast %5 : vector<16xf32> to vector<1x16xf32>
    %7 = arith.mulf %3, %3 : vector<16x16xf32>
    %cst_4 = arith.constant dense<0.000000e+00> : vector<16xf32>
    %8 = vector.multi_reduction <add>, %7, %cst_4 [0] : vector<16x16xf32> to vector<16xf32>
    %9 = vector.shape_cast %8 : vector<16xf32> to vector<1x16xf32>
    %10 = tpu.concatenate %6, %9 in 0 : vector<1x16xf32>, vector<1x16xf32> -> vector<2x16xf32>
    %11 = arith.addf %4, %10 : vector<2x16xf32>
    %c0_5 = arith.constant 0 : index
    %c0_6 = arith.constant 0 : index
    %12 = vector.load %arg2[%c0_5, %c0_6] : memref<2x16xf32, #tpu.memory_space<vmem>>, vector<2x16xf32>
    tpu.vector_store %arg2[%c0_5, %c0_6], %11 {strides = array<i32>} : memref<2x16xf32, #tpu.memory_space<vmem>>, vector<2x16xf32>,
    return
  }
  func.func @transform_0(%arg0: i32) -> (i32, i32) {
    %c0_i32 = arith.constant 0 : i32
    %c0_i32_0 = arith.constant 0 : i32
    return %arg0, %c0_i32 : i32, i32
  }
  func.func @transform_1(%arg0: i32) -> (i32, i32) {
    %c0_i32 = arith.constant 0 : i32
    %c0_i32_0 = arith.constant 0 : i32
    %c0_i32_1 = arith.constant 0 : i32
    return %c0_i32, %c0_i32_0 : i32, i32
  }
}

module attributes {stable_mosaic.version = 11 : i64} {
  func.func @kernel(%arg0: i32, %arg1: memref<8x8x128xf32, #tpu.memory_space<vmem>>, %arg2: memref<8x8x128xf32, #tpu.memory_space<vmem>>, %arg3: memref<2x1x512xf32, #tpu.memory_space<vmem>>, %arg4: memref<2x128x512xf32, #tpu.memory_space<any>>, %arg5: memref<2x128x512xf32, #tpu.memory_space<any>>, %arg6: memref<8x8x128xf32, #tpu.memory_space<vmem>>, %arg7: memref<8x8x128xf32, #tpu.memory_space<vmem>>, %arg8: memref<128x512xf32, #tpu.memory_space<vmem>>, %arg9: memref<128x512xf32, #tpu.memory_space<vmem>>, %arg10: memref<128x512xf32, #tpu.memory_space<vmem>>, %arg11: memref<128x512xf32, #tpu.memory_space<vmem>>, %arg12: memref<8x8x512xf32, #tpu.memory_space<vmem>>, %arg13: memref<8x8x512xf32, #tpu.memory_space<vmem>>, %arg14: memref<8x128xf32, #tpu.memory_space<vmem>>, %arg15: memref<8x128xf32, #tpu.memory_space<vmem>>, %arg16: memref<8x128xf32, #tpu.memory_space<vmem>>, %arg17: memref<8x128xf32, #tpu.memory_space<vmem>>, %arg18: memref<4x!tpu.dma_semaphore, #tpu.memory_space<semaphore_mem>>) attributes {dimension_semantics = [#tpu.dimension_semantics<arbitrary>], iteration_bounds = array<i64: 1>, scalar_prefetch = 0 : i64, scratch_operands = 11 : i64, tpu.core_type = #tpu.core_type<tc>, window_params = [{transform_indices = @transform_0, window_bounds = array<i64: 8, 8, 128>}, {transform_indices = @transform_1, window_bounds = array<i64: 8, 8, 128>}, {pipeline_mode = #tpu.pipeline_mode<synchronous>, transform_indices = @transform_2, window_bounds = array<i64: 2, 1, 512>}, {}, {}, {transform_indices = @transform_5, window_bounds = array<i64: 8, 8, 128>}, {transform_indices = @transform_6, window_bounds = array<i64: 8, 8, 128>}]} {
    %c0_i32 = arith.constant 0 : i32
    %0 = arith.cmpi eq, %arg0, %c0_i32 : i32
    %1 = arith.extui %0 : i1 to i32
    %c0_i32_0 = arith.constant 0 : i32
    %2 = arith.cmpi ne, %1, %c0_i32_0 : i32
    scf.if %2 {
      %c0_i32_179 = arith.constant 0 : i32
      %c0_i32_180 = arith.constant 0 : i32
      %c0_i32_181 = arith.constant 0 : i32
      %c0_i32_182 = arith.constant 0 : i32
      %585 = tpu.memref_slice %arg4[%c0_i32_179, %c0_i32_181, %c0_i32_182] : memref<2x128x512xf32, #tpu.memory_space<any>> -> memref<1x128x512xf32, #tpu.memory_space<any>>
      %586 = tpu.memref_squeeze %585 : memref<1x128x512xf32, #tpu.memory_space<any>> -> memref<128x512xf32, #tpu.memory_space<any>>
      %587 = tpu.memref_slice %arg18[%c0_i32_180] : memref<4x!tpu.dma_semaphore, #tpu.memory_space<semaphore_mem>> -> memref<1x!tpu.dma_semaphore, #tpu.memory_space<semaphore_mem>>
      %588 = tpu.memref_squeeze %587 : memref<1x!tpu.dma_semaphore, #tpu.memory_space<semaphore_mem>> -> memref<!tpu.dma_semaphore, #tpu.memory_space<semaphore_mem>>
      tpu.enqueue_dma source(%586 : memref<128x512xf32, #tpu.memory_space<any>>) target(%arg8 : memref<128x512xf32, #tpu.memory_space<vmem>>) target_semaphore(%588 : memref<!tpu.dma_semaphore, #tpu.memory_space<semaphore_mem>>)
      %c0_i32_183 = arith.constant 0 : i32
      %c1_i32_184 = arith.constant 1 : i32
      %c0_i32_185 = arith.constant 0 : i32
      %c0_i32_186 = arith.constant 0 : i32
      %589 = tpu.memref_slice %arg5[%c0_i32_183, %c0_i32_185, %c0_i32_186] : memref<2x128x512xf32, #tpu.memory_space<any>> -> memref<1x128x512xf32, #tpu.memory_space<any>>
      %590 = tpu.memref_squeeze %589 : memref<1x128x512xf32, #tpu.memory_space<any>> -> memref<128x512xf32, #tpu.memory_space<any>>
      %591 = tpu.memref_slice %arg18[%c1_i32_184] : memref<4x!tpu.dma_semaphore, #tpu.memory_space<semaphore_mem>> -> memref<1x!tpu.dma_semaphore, #tpu.memory_space<semaphore_mem>>
      %592 = tpu.memref_squeeze %591 : memref<1x!tpu.dma_semaphore, #tpu.memory_space<semaphore_mem>> -> memref<!tpu.dma_semaphore, #tpu.memory_space<semaphore_mem>>
      tpu.enqueue_dma source(%590 : memref<128x512xf32, #tpu.memory_space<any>>) target(%arg9 : memref<128x512xf32, #tpu.memory_space<vmem>>) target_semaphore(%592 : memref<!tpu.dma_semaphore, #tpu.memory_space<semaphore_mem>>)
      %c1_i32_187 = arith.constant 1 : i32
      %c2_i32_188 = arith.constant 2 : i32
      %c0_i32_189 = arith.constant 0 : i32
      %c0_i32_190 = arith.constant 0 : i32
      %593 = tpu.memref_slice %arg4[%c1_i32_187, %c0_i32_189, %c0_i32_190] : memref<2x128x512xf32, #tpu.memory_space<any>> -> memref<1x128x512xf32, #tpu.memory_space<any>>
      %594 = tpu.memref_squeeze %593 : memref<1x128x512xf32, #tpu.memory_space<any>> -> memref<128x512xf32, #tpu.memory_space<any>>
      %595 = tpu.memref_slice %arg18[%c2_i32_188] : memref<4x!tpu.dma_semaphore, #tpu.memory_space<semaphore_mem>> -> memref<1x!tpu.dma_semaphore, #tpu.memory_space<semaphore_mem>>
      %596 = tpu.memref_squeeze %595 : memref<1x!tpu.dma_semaphore, #tpu.memory_space<semaphore_mem>> -> memref<!tpu.dma_semaphore, #tpu.memory_space<semaphore_mem>>
      tpu.enqueue_dma source(%594 : memref<128x512xf32, #tpu.memory_space<any>>) target(%arg10 : memref<128x512xf32, #tpu.memory_space<vmem>>) target_semaphore(%596 : memref<!tpu.dma_semaphore, #tpu.memory_space<semaphore_mem>>)
      %c1_i32_191 = arith.constant 1 : i32
      %c3_i32_192 = arith.constant 3 : i32
      %c0_i32_193 = arith.constant 0 : i32
      %c0_i32_194 = arith.constant 0 : i32
      %597 = tpu.memref_slice %arg5[%c1_i32_191, %c0_i32_193, %c0_i32_194] : memref<2x128x512xf32, #tpu.memory_space<any>> -> memref<1x128x512xf32, #tpu.memory_space<any>>
      %598 = tpu.memref_squeeze %597 : memref<1x128x512xf32, #tpu.memory_space<any>> -> memref<128x512xf32, #tpu.memory_space<any>>
      %599 = tpu.memref_slice %arg18[%c3_i32_192] : memref<4x!tpu.dma_semaphore, #tpu.memory_space<semaphore_mem>> -> memref<1x!tpu.dma_semaphore, #tpu.memory_space<semaphore_mem>>
      %600 = tpu.memref_squeeze %599 : memref<1x!tpu.dma_semaphore, #tpu.memory_space<semaphore_mem>> -> memref<!tpu.dma_semaphore, #tpu.memory_space<semaphore_mem>>
      tpu.enqueue_dma source(%598 : memref<128x512xf32, #tpu.memory_space<any>>) target(%arg11 : memref<128x512xf32, #tpu.memory_space<vmem>>) target_semaphore(%600 : memref<!tpu.dma_semaphore, #tpu.memory_space<semaphore_mem>>)
      %c0_i32_195 = arith.constant 0 : i32
      %c0_i32_196 = arith.constant 0 : i32
      %c0_i32_197 = arith.constant 0 : i32
      %c0_i32_198 = arith.constant 0 : i32
      %601 = tpu.memref_slice %arg4[%c0_i32_195, %c0_i32_197, %c0_i32_198] : memref<2x128x512xf32, #tpu.memory_space<any>> -> memref<1x128x512xf32, #tpu.memory_space<any>>
      %602 = tpu.memref_squeeze %601 : memref<1x128x512xf32, #tpu.memory_space<any>> -> memref<128x512xf32, #tpu.memory_space<any>>
      %603 = tpu.memref_slice %arg18[%c0_i32_196] : memref<4x!tpu.dma_semaphore, #tpu.memory_space<semaphore_mem>> -> memref<1x!tpu.dma_semaphore, #tpu.memory_space<semaphore_mem>>
      %604 = tpu.memref_squeeze %603 : memref<1x!tpu.dma_semaphore, #tpu.memory_space<semaphore_mem>> -> memref<!tpu.dma_semaphore, #tpu.memory_space<semaphore_mem>>
      tpu.wait_dma2 semaphore(%604 : memref<!tpu.dma_semaphore, #tpu.memory_space<semaphore_mem>>) src(%602 : memref<128x512xf32, #tpu.memory_space<any>>) dst(%arg8 : memref<128x512xf32, #tpu.memory_space<vmem>>)
      %c0_i32_199 = arith.constant 0 : i32
      %c1_i32_200 = arith.constant 1 : i32
      %c0_i32_201 = arith.constant 0 : i32
      %c0_i32_202 = arith.constant 0 : i32
      %605 = tpu.memref_slice %arg5[%c0_i32_199, %c0_i32_201, %c0_i32_202] : memref<2x128x512xf32, #tpu.memory_space<any>> -> memref<1x128x512xf32, #tpu.memory_space<any>>
      %606 = tpu.memref_squeeze %605 : memref<1x128x512xf32, #tpu.memory_space<any>> -> memref<128x512xf32, #tpu.memory_space<any>>
      %607 = tpu.memref_slice %arg18[%c1_i32_200] : memref<4x!tpu.dma_semaphore, #tpu.memory_space<semaphore_mem>> -> memref<1x!tpu.dma_semaphore, #tpu.memory_space<semaphore_mem>>
      %608 = tpu.memref_squeeze %607 : memref<1x!tpu.dma_semaphore, #tpu.memory_space<semaphore_mem>> -> memref<!tpu.dma_semaphore, #tpu.memory_space<semaphore_mem>>
      tpu.wait_dma2 semaphore(%608 : memref<!tpu.dma_semaphore, #tpu.memory_space<semaphore_mem>>) src(%606 : memref<128x512xf32, #tpu.memory_space<any>>) dst(%arg9 : memref<128x512xf32, #tpu.memory_space<vmem>>)
      %c1_i32_203 = arith.constant 1 : i32
      %c2_i32_204 = arith.constant 2 : i32
      %c0_i32_205 = arith.constant 0 : i32
      %c0_i32_206 = arith.constant 0 : i32
      %609 = tpu.memref_slice %arg4[%c1_i32_203, %c0_i32_205, %c0_i32_206] : memref<2x128x512xf32, #tpu.memory_space<any>> -> memref<1x128x512xf32, #tpu.memory_space<any>>
      %610 = tpu.memref_squeeze %609 : memref<1x128x512xf32, #tpu.memory_space<any>> -> memref<128x512xf32, #tpu.memory_space<any>>
      %611 = tpu.memref_slice %arg18[%c2_i32_204] : memref<4x!tpu.dma_semaphore, #tpu.memory_space<semaphore_mem>> -> memref<1x!tpu.dma_semaphore, #tpu.memory_space<semaphore_mem>>
      %612 = tpu.memref_squeeze %611 : memref<1x!tpu.dma_semaphore, #tpu.memory_space<semaphore_mem>> -> memref<!tpu.dma_semaphore, #tpu.memory_space<semaphore_mem>>
      tpu.wait_dma2 semaphore(%612 : memref<!tpu.dma_semaphore, #tpu.memory_space<semaphore_mem>>) src(%610 : memref<128x512xf32, #tpu.memory_space<any>>) dst(%arg10 : memref<128x512xf32, #tpu.memory_space<vmem>>)
      %c1_i32_207 = arith.constant 1 : i32
      %c3_i32_208 = arith.constant 3 : i32
      %c0_i32_209 = arith.constant 0 : i32
      %c0_i32_210 = arith.constant 0 : i32
      %613 = tpu.memref_slice %arg5[%c1_i32_207, %c0_i32_209, %c0_i32_210] : memref<2x128x512xf32, #tpu.memory_space<any>> -> memref<1x128x512xf32, #tpu.memory_space<any>>
      %614 = tpu.memref_squeeze %613 : memref<1x128x512xf32, #tpu.memory_space<any>> -> memref<128x512xf32, #tpu.memory_space<any>>
      %615 = tpu.memref_slice %arg18[%c3_i32_208] : memref<4x!tpu.dma_semaphore, #tpu.memory_space<semaphore_mem>> -> memref<1x!tpu.dma_semaphore, #tpu.memory_space<semaphore_mem>>
      %616 = tpu.memref_squeeze %615 : memref<1x!tpu.dma_semaphore, #tpu.memory_space<semaphore_mem>> -> memref<!tpu.dma_semaphore, #tpu.memory_space<semaphore_mem>>
      tpu.wait_dma2 semaphore(%616 : memref<!tpu.dma_semaphore, #tpu.memory_space<semaphore_mem>>) src(%614 : memref<128x512xf32, #tpu.memory_space<any>>) dst(%arg11 : memref<128x512xf32, #tpu.memory_space<vmem>>)
      %cst_211 = arith.constant 0.000000e+00 : f32
      %617 = vector.broadcast %cst_211 : f32 to vector<8x128xf32>
      %c0_212 = arith.constant 0 : index
      %c0_213 = arith.constant 0 : index
      %618 = vector.load %arg14[%c0_212, %c0_213] : memref<8x128xf32, #tpu.memory_space<vmem>>, vector<8x128xf32>
      tpu.vector_store %arg14[%c0_212, %c0_213], %617 {strides = array<i32>} : memref<8x128xf32, #tpu.memory_space<vmem>>, vector<8x128xf32>,
      %cst_214 = arith.constant 0.000000e+00 : f32
      %619 = vector.broadcast %cst_214 : f32 to vector<8x128xf32>
      %c0_215 = arith.constant 0 : index
      %c0_216 = arith.constant 0 : index
      %620 = vector.load %arg15[%c0_215, %c0_216] : memref<8x128xf32, #tpu.memory_space<vmem>>, vector<8x128xf32>
      tpu.vector_store %arg15[%c0_215, %c0_216], %619 {strides = array<i32>} : memref<8x128xf32, #tpu.memory_space<vmem>>, vector<8x128xf32>,
      %cst_217 = arith.constant 0.000000e+00 : f32
      %621 = vector.broadcast %cst_217 : f32 to vector<8x128xf32>
      %c0_218 = arith.constant 0 : index
      %c0_219 = arith.constant 0 : index
      %622 = vector.load %arg16[%c0_218, %c0_219] : memref<8x128xf32, #tpu.memory_space<vmem>>, vector<8x128xf32>
      tpu.vector_store %arg16[%c0_218, %c0_219], %621 {strides = array<i32>} : memref<8x128xf32, #tpu.memory_space<vmem>>, vector<8x128xf32>,
      %cst_220 = arith.constant 0.000000e+00 : f32
      %623 = vector.broadcast %cst_220 : f32 to vector<8x128xf32>
      %c0_221 = arith.constant 0 : index
      %c0_222 = arith.constant 0 : index
      %624 = vector.load %arg17[%c0_221, %c0_222] : memref<8x128xf32, #tpu.memory_space<vmem>>, vector<8x128xf32>
      tpu.vector_store %arg17[%c0_221, %c0_222], %623 {strides = array<i32>} : memref<8x128xf32, #tpu.memory_space<vmem>>, vector<8x128xf32>,
    } else {
    }
    %c0 = arith.constant 0 : index
    %c0_1 = arith.constant 0 : index
    %c0_2 = arith.constant 0 : index
    %3 = vector.load %arg1[%c0, %c0_1, %c0_2] : memref<8x8x128xf32, #tpu.memory_space<vmem>>, vector<8x8x128xf32>
    %4 = vector.shape_cast %3 : vector<8x8x128xf32> to vector<64x128xf32>
    %c0_3 = arith.constant 0 : index
    %c0_4 = arith.constant 0 : index
    %5 = vector.load %arg8[%c0_3, %c0_4] : memref<128x512xf32, #tpu.memory_space<vmem>>, vector<128x512xf32>
    %cst = arith.constant dense<0.000000e+00> : vector<64x512xf32>
    %6 = tpu.matmul %4, %5, %cst {dimension_numbers = #tpu.dot_dimension_numbers<[1], [0], [0], [1], [0, 0, 1, 1], [], []>} : vector<64x128xf32>, vector<128x512xf32>, vector<64x512xf32> -> vector<64x512xf32>
    %c0_5 = arith.constant 0 : index
    %c0_6 = arith.constant 0 : index
    %c0_7 = arith.constant 0 : index
    %7 = vector.load %arg3[%c0_5, %c0_6, %c0_7] : memref<2x1x512xf32, #tpu.memory_space<vmem>>, vector<1x1x512xf32>
    %8 = vector.shape_cast %7 : vector<1x1x512xf32> to vector<1x512xf32>
    %9 = vector.broadcast %8 : vector<1x512xf32> to vector<64x512xf32>
    %10 = arith.addf %6, %9 : vector<64x512xf32>
    %11 = vector.shape_cast %10 : vector<64x512xf32> to vector<8x8x512xf32>
    %c0_8 = arith.constant 0 : index
    %c0_9 = arith.constant 0 : index
    %c0_10 = arith.constant 0 : index
    %12 = vector.load %arg12[%c0_8, %c0_9, %c0_10] : memref<8x8x512xf32, #tpu.memory_space<vmem>>, vector<8x8x512xf32>
    tpu.vector_store %arg12[%c0_8, %c0_9, %c0_10], %11 {strides = array<i32>} : memref<8x8x512xf32, #tpu.memory_space<vmem>>, vector<8x8x512xf32>,
    %c0_11 = arith.constant 0 : index
    %c0_12 = arith.constant 0 : index
    %c0_13 = arith.constant 0 : index
    %13 = vector.load %arg2[%c0_11, %c0_12, %c0_13] : memref<8x8x128xf32, #tpu.memory_space<vmem>>, vector<8x8x128xf32>
    %14 = vector.shape_cast %13 : vector<8x8x128xf32> to vector<64x128xf32>
    %c0_14 = arith.constant 0 : index
    %c0_15 = arith.constant 0 : index
    %15 = vector.load %arg10[%c0_14, %c0_15] : memref<128x512xf32, #tpu.memory_space<vmem>>, vector<128x512xf32>
    %cst_16 = arith.constant dense<0.000000e+00> : vector<64x512xf32>
    %16 = tpu.matmul %14, %15, %cst_16 {dimension_numbers = #tpu.dot_dimension_numbers<[1], [0], [0], [1], [0, 0, 1, 1], [], []>} : vector<64x128xf32>, vector<128x512xf32>, vector<64x512xf32> -> vector<64x512xf32>
    %c1 = arith.constant 1 : index
    %c0_17 = arith.constant 0 : index
    %c0_18 = arith.constant 0 : index
    %17 = vector.load %arg3[%c1, %c0_17, %c0_18] : memref<2x1x512xf32, #tpu.memory_space<vmem>>, vector<1x1x512xf32>
    %18 = vector.shape_cast %17 : vector<1x1x512xf32> to vector<1x512xf32>
    %19 = vector.broadcast %18 : vector<1x512xf32> to vector<64x512xf32>
    %20 = arith.addf %16, %19 : vector<64x512xf32>
    %21 = vector.shape_cast %20 : vector<64x512xf32> to vector<8x8x512xf32>
    %c0_19 = arith.constant 0 : index
    %c0_20 = arith.constant 0 : index
    %c0_21 = arith.constant 0 : index
    %22 = vector.load %arg13[%c0_19, %c0_20, %c0_21] : memref<8x8x512xf32, #tpu.memory_space<vmem>>, vector<8x8x512xf32>
    tpu.vector_store %arg13[%c0_19, %c0_20, %c0_21], %21 {strides = array<i32>} : memref<8x8x512xf32, #tpu.memory_space<vmem>>, vector<8x8x512xf32>,
    %c0_22 = arith.constant 0 : index
    %c0_23 = arith.constant 0 : index
    %23 = vector.load %arg9[%c0_22, %c0_23] : memref<128x512xf32, #tpu.memory_space<vmem>>, vector<128x512xf32>
    %c0_24 = arith.constant 0 : index
    %c0_25 = arith.constant 0 : index
    %24 = vector.load %arg11[%c0_24, %c0_25] : memref<128x512xf32, #tpu.memory_space<vmem>>, vector<128x512xf32>
    %c0_26 = arith.constant 0 : index
    %c0_27 = arith.constant 0 : index
    %25 = vector.load %arg14[%c0_26, %c0_27] : memref<8x128xf32, #tpu.memory_space<vmem>>, vector<8x128xf32>
    %c0_28 = arith.constant 0 : index
    %c0_29 = arith.constant 0 : index
    %26 = vector.load %arg15[%c0_28, %c0_29] : memref<8x128xf32, #tpu.memory_space<vmem>>, vector<8x128xf32>
    %c0_30 = arith.constant 0 : index
    %c0_31 = arith.constant 0 : index
    %27 = vector.load %arg16[%c0_30, %c0_31] : memref<8x128xf32, #tpu.memory_space<vmem>>, vector<8x128xf32>
    %c0_32 = arith.constant 0 : index
    %c0_33 = arith.constant 0 : index
    %28 = vector.load %arg17[%c0_32, %c0_33] : memref<8x128xf32, #tpu.memory_space<vmem>>, vector<8x128xf32>
    %c0_i32_34 = arith.constant 0 : i32
    %29 = arith.index_cast %c0_i32_34 : i32 to index
    %c0_35 = arith.constant 0 : index
    %c0_36 = arith.constant 0 : index
    %30 = vector.load %arg12[%29, %c0_35, %c0_36] : memref<8x8x512xf32, #tpu.memory_space<vmem>>, vector<1x8x512xf32>
    %31 = vector.shape_cast %30 : vector<1x8x512xf32> to vector<8x512xf32>
    %cst_37 = arith.constant dense<0.000000e+00> : vector<8x512xf32>
    %32 = tpu.matmul %25, %23, %cst_37 {dimension_numbers = #tpu.dot_dimension_numbers<[1], [0], [0], [1], [0, 0, 1, 1], [], []>} : vector<8x128xf32>, vector<128x512xf32>, vector<8x512xf32> -> vector<8x512xf32>
    %33 = arith.addf %31, %32 : vector<8x512xf32>
    %34 = vector.extract_strided_slice %33 {offsets = [0, 0], sizes = [8, 128], strides = [1, 1]} : vector<8x512xf32> to vector<8x128xf32>
    %35 = arith.negf %34 : vector<8x128xf32>
    %36 = math.exp %35 : vector<8x128xf32>
    %cst_38 = arith.constant 1.000000e+00 : f32
    %37 = vector.broadcast %cst_38 : f32 to vector<8x128xf32>
    %38 = arith.addf %37, %36 : vector<8x128xf32>
    %39 = arith.divf %37, %38 : vector<8x128xf32>
    %40 = vector.extract_strided_slice %33 {offsets = [0, 128], sizes = [8, 128], strides = [1, 1]} : vector<8x512xf32> to vector<8x128xf32>
    %41 = arith.negf %40 : vector<8x128xf32>
    %42 = math.exp %41 : vector<8x128xf32>
    %cst_39 = arith.constant 1.000000e+00 : f32
    %43 = vector.broadcast %cst_39 : f32 to vector<8x128xf32>
    %44 = arith.addf %43, %42 : vector<8x128xf32>
    %45 = arith.divf %43, %44 : vector<8x128xf32>
    %46 = vector.extract_strided_slice %33 {offsets = [0, 256], sizes = [8, 128], strides = [1, 1]} : vector<8x512xf32> to vector<8x128xf32>
    %47 = math.tanh %46 : vector<8x128xf32>
    %48 = vector.extract_strided_slice %33 {offsets = [0, 384], sizes = [8, 128], strides = [1, 1]} : vector<8x512xf32> to vector<8x128xf32>
    %49 = arith.negf %48 : vector<8x128xf32>
    %50 = math.exp %49 : vector<8x128xf32>
    %cst_40 = arith.constant 1.000000e+00 : f32
    %51 = vector.broadcast %cst_40 : f32 to vector<8x128xf32>
    %52 = arith.addf %51, %50 : vector<8x128xf32>
    %53 = arith.divf %51, %52 : vector<8x128xf32>
    %54 = arith.mulf %45, %26 : vector<8x128xf32>
    %55 = arith.mulf %39, %47 : vector<8x128xf32>
    %56 = arith.addf %54, %55 : vector<8x128xf32>
    %57 = math.tanh %56 : vector<8x128xf32>
    %58 = arith.mulf %53, %57 : vector<8x128xf32>
    %59 = arith.index_cast %c0_i32_34 : i32 to index
    %c0_41 = arith.constant 0 : index
    %c0_42 = arith.constant 0 : index
    %60 = vector.load %arg6[%59, %c0_41, %c0_42] : memref<8x8x128xf32, #tpu.memory_space<vmem>>, vector<1x8x128xf32>
    %61 = vector.shape_cast %60 : vector<1x8x128xf32> to vector<8x128xf32>
    %62 = vector.shape_cast %58 : vector<8x128xf32> to vector<1x8x128xf32>
    tpu.vector_store %arg6[%59, %c0_41, %c0_42], %62 {strides = array<i32>} : memref<8x8x128xf32, #tpu.memory_space<vmem>>, vector<1x8x128xf32>,
    %c7_i32 = arith.constant 7 : i32
    %63 = arith.subi %c7_i32, %c0_i32_34 : i32
    %64 = arith.index_cast %63 : i32 to index
    %c0_43 = arith.constant 0 : index
    %c0_44 = arith.constant 0 : index
    %65 = vector.load %arg13[%64, %c0_43, %c0_44] : memref<8x8x512xf32, #tpu.memory_space<vmem>>, vector<1x8x512xf32>
    %66 = vector.shape_cast %65 : vector<1x8x512xf32> to vector<8x512xf32>
    %cst_45 = arith.constant dense<0.000000e+00> : vector<8x512xf32>
    %67 = tpu.matmul %27, %24, %cst_45 {dimension_numbers = #tpu.dot_dimension_numbers<[1], [0], [0], [1], [0, 0, 1, 1], [], []>} : vector<8x128xf32>, vector<128x512xf32>, vector<8x512xf32> -> vector<8x512xf32>
    %68 = arith.addf %66, %67 : vector<8x512xf32>
    %69 = vector.extract_strided_slice %68 {offsets = [0, 0], sizes = [8, 128], strides = [1, 1]} : vector<8x512xf32> to vector<8x128xf32>
    %70 = arith.negf %69 : vector<8x128xf32>
    %71 = math.exp %70 : vector<8x128xf32>
    %cst_46 = arith.constant 1.000000e+00 : f32
    %72 = vector.broadcast %cst_46 : f32 to vector<8x128xf32>
    %73 = arith.addf %72, %71 : vector<8x128xf32>
    %74 = arith.divf %72, %73 : vector<8x128xf32>
    %75 = vector.extract_strided_slice %68 {offsets = [0, 128], sizes = [8, 128], strides = [1, 1]} : vector<8x512xf32> to vector<8x128xf32>
    %76 = arith.negf %75 : vector<8x128xf32>
    %77 = math.exp %76 : vector<8x128xf32>
    %cst_47 = arith.constant 1.000000e+00 : f32
    %78 = vector.broadcast %cst_47 : f32 to vector<8x128xf32>
    %79 = arith.addf %78, %77 : vector<8x128xf32>
    %80 = arith.divf %78, %79 : vector<8x128xf32>
    %81 = vector.extract_strided_slice %68 {offsets = [0, 256], sizes = [8, 128], strides = [1, 1]} : vector<8x512xf32> to vector<8x128xf32>
    %82 = math.tanh %81 : vector<8x128xf32>
    %83 = vector.extract_strided_slice %68 {offsets = [0, 384], sizes = [8, 128], strides = [1, 1]} : vector<8x512xf32> to vector<8x128xf32>
    %84 = arith.negf %83 : vector<8x128xf32>
    %85 = math.exp %84 : vector<8x128xf32>
    %cst_48 = arith.constant 1.000000e+00 : f32
    %86 = vector.broadcast %cst_48 : f32 to vector<8x128xf32>
    %87 = arith.addf %86, %85 : vector<8x128xf32>
    %88 = arith.divf %86, %87 : vector<8x128xf32>
    %89 = arith.mulf %80, %28 : vector<8x128xf32>
    %90 = arith.mulf %74, %82 : vector<8x128xf32>
    %91 = arith.addf %89, %90 : vector<8x128xf32>
    %92 = math.tanh %91 : vector<8x128xf32>
    %93 = arith.mulf %88, %92 : vector<8x128xf32>
    %94 = arith.index_cast %63 : i32 to index
    %c0_49 = arith.constant 0 : index
    %c0_50 = arith.constant 0 : index
    %95 = vector.load %arg7[%94, %c0_49, %c0_50] : memref<8x8x128xf32, #tpu.memory_space<vmem>>, vector<1x8x128xf32>
    %96 = vector.shape_cast %95 : vector<1x8x128xf32> to vector<8x128xf32>
    %97 = vector.shape_cast %93 : vector<8x128xf32> to vector<1x8x128xf32>
    tpu.vector_store %arg7[%94, %c0_49, %c0_50], %97 {strides = array<i32>} : memref<8x8x128xf32, #tpu.memory_space<vmem>>, vector<1x8x128xf32>,
    %c1_i32 = arith.constant 1 : i32
    %98 = arith.index_cast %c1_i32 : i32 to index
    %c0_51 = arith.constant 0 : index
    %c0_52 = arith.constant 0 : index
    %99 = vector.load %arg12[%98, %c0_51, %c0_52] : memref<8x8x512xf32, #tpu.memory_space<vmem>>, vector<1x8x512xf32>
    %100 = vector.shape_cast %99 : vector<1x8x512xf32> to vector<8x512xf32>
    %cst_53 = arith.constant dense<0.000000e+00> : vector<8x512xf32>
    %101 = tpu.matmul %58, %23, %cst_53 {dimension_numbers = #tpu.dot_dimension_numbers<[1], [0], [0], [1], [0, 0, 1, 1], [], []>} : vector<8x128xf32>, vector<128x512xf32>, vector<8x512xf32> -> vector<8x512xf32>
    %102 = arith.addf %100, %101 : vector<8x512xf32>
    %103 = vector.extract_strided_slice %102 {offsets = [0, 0], sizes = [8, 128], strides = [1, 1]} : vector<8x512xf32> to vector<8x128xf32>
    %104 = arith.negf %103 : vector<8x128xf32>
    %105 = math.exp %104 : vector<8x128xf32>
    %cst_54 = arith.constant 1.000000e+00 : f32
    %106 = vector.broadcast %cst_54 : f32 to vector<8x128xf32>
    %107 = arith.addf %106, %105 : vector<8x128xf32>
    %108 = arith.divf %106, %107 : vector<8x128xf32>
    %109 = vector.extract_strided_slice %102 {offsets = [0, 128], sizes = [8, 128], strides = [1, 1]} : vector<8x512xf32> to vector<8x128xf32>
    %110 = arith.negf %109 : vector<8x128xf32>
    %111 = math.exp %110 : vector<8x128xf32>
    %cst_55 = arith.constant 1.000000e+00 : f32
    %112 = vector.broadcast %cst_55 : f32 to vector<8x128xf32>
    %113 = arith.addf %112, %111 : vector<8x128xf32>
    %114 = arith.divf %112, %113 : vector<8x128xf32>
    %115 = vector.extract_strided_slice %102 {offsets = [0, 256], sizes = [8, 128], strides = [1, 1]} : vector<8x512xf32> to vector<8x128xf32>
    %116 = math.tanh %115 : vector<8x128xf32>
    %117 = vector.extract_strided_slice %102 {offsets = [0, 384], sizes = [8, 128], strides = [1, 1]} : vector<8x512xf32> to vector<8x128xf32>
    %118 = arith.negf %117 : vector<8x128xf32>
    %119 = math.exp %118 : vector<8x128xf32>
    %cst_56 = arith.constant 1.000000e+00 : f32
    %120 = vector.broadcast %cst_56 : f32 to vector<8x128xf32>
    %121 = arith.addf %120, %119 : vector<8x128xf32>
    %122 = arith.divf %120, %121 : vector<8x128xf32>
    %123 = arith.mulf %114, %56 : vector<8x128xf32>
    %124 = arith.mulf %108, %116 : vector<8x128xf32>
    %125 = arith.addf %123, %124 : vector<8x128xf32>
    %126 = math.tanh %125 : vector<8x128xf32>
    %127 = arith.mulf %122, %126 : vector<8x128xf32>
    %128 = arith.index_cast %c1_i32 : i32 to index
    %c0_57 = arith.constant 0 : index
    %c0_58 = arith.constant 0 : index
    %129 = vector.load %arg6[%128, %c0_57, %c0_58] : memref<8x8x128xf32, #tpu.memory_space<vmem>>, vector<1x8x128xf32>
    %130 = vector.shape_cast %129 : vector<1x8x128xf32> to vector<8x128xf32>
    %131 = vector.shape_cast %127 : vector<8x128xf32> to vector<1x8x128xf32>
    tpu.vector_store %arg6[%128, %c0_57, %c0_58], %131 {strides = array<i32>} : memref<8x8x128xf32, #tpu.memory_space<vmem>>, vector<1x8x128xf32>,
    %c7_i32_59 = arith.constant 7 : i32
    %132 = arith.subi %c7_i32_59, %c1_i32 : i32
    %133 = arith.index_cast %132 : i32 to index
    %c0_60 = arith.constant 0 : index
    %c0_61 = arith.constant 0 : index
    %134 = vector.load %arg13[%133, %c0_60, %c0_61] : memref<8x8x512xf32, #tpu.memory_space<vmem>>, vector<1x8x512xf32>
    %135 = vector.shape_cast %134 : vector<1x8x512xf32> to vector<8x512xf32>
    %cst_62 = arith.constant dense<0.000000e+00> : vector<8x512xf32>
    %136 = tpu.matmul %93, %24, %cst_62 {dimension_numbers = #tpu.dot_dimension_numbers<[1], [0], [0], [1], [0, 0, 1, 1], [], []>} : vector<8x128xf32>, vector<128x512xf32>, vector<8x512xf32> -> vector<8x512xf32>
    %137 = arith.addf %135, %136 : vector<8x512xf32>
    %138 = vector.extract_strided_slice %137 {offsets = [0, 0], sizes = [8, 128], strides = [1, 1]} : vector<8x512xf32> to vector<8x128xf32>
    %139 = arith.negf %138 : vector<8x128xf32>
    %140 = math.exp %139 : vector<8x128xf32>
    %cst_63 = arith.constant 1.000000e+00 : f32
    %141 = vector.broadcast %cst_63 : f32 to vector<8x128xf32>
    %142 = arith.addf %141, %140 : vector<8x128xf32>
    %143 = arith.divf %141, %142 : vector<8x128xf32>
    %144 = vector.extract_strided_slice %137 {offsets = [0, 128], sizes = [8, 128], strides = [1, 1]} : vector<8x512xf32> to vector<8x128xf32>
    %145 = arith.negf %144 : vector<8x128xf32>
    %146 = math.exp %145 : vector<8x128xf32>
    %cst_64 = arith.constant 1.000000e+00 : f32
    %147 = vector.broadcast %cst_64 : f32 to vector<8x128xf32>
    %148 = arith.addf %147, %146 : vector<8x128xf32>
    %149 = arith.divf %147, %148 : vector<8x128xf32>
    %150 = vector.extract_strided_slice %137 {offsets = [0, 256], sizes = [8, 128], strides = [1, 1]} : vector<8x512xf32> to vector<8x128xf32>
    %151 = math.tanh %150 : vector<8x128xf32>
    %152 = vector.extract_strided_slice %137 {offsets = [0, 384], sizes = [8, 128], strides = [1, 1]} : vector<8x512xf32> to vector<8x128xf32>
    %153 = arith.negf %152 : vector<8x128xf32>
    %154 = math.exp %153 : vector<8x128xf32>
    %cst_65 = arith.constant 1.000000e+00 : f32
    %155 = vector.broadcast %cst_65 : f32 to vector<8x128xf32>
    %156 = arith.addf %155, %154 : vector<8x128xf32>
    %157 = arith.divf %155, %156 : vector<8x128xf32>
    %158 = arith.mulf %149, %91 : vector<8x128xf32>
    %159 = arith.mulf %143, %151 : vector<8x128xf32>
    %160 = arith.addf %158, %159 : vector<8x128xf32>
    %161 = math.tanh %160 : vector<8x128xf32>
    %162 = arith.mulf %157, %161 : vector<8x128xf32>
    %163 = arith.index_cast %132 : i32 to index
    %c0_66 = arith.constant 0 : index
    %c0_67 = arith.constant 0 : index
    %164 = vector.load %arg7[%163, %c0_66, %c0_67] : memref<8x8x128xf32, #tpu.memory_space<vmem>>, vector<1x8x128xf32>
    %165 = vector.shape_cast %164 : vector<1x8x128xf32> to vector<8x128xf32>
    %166 = vector.shape_cast %162 : vector<8x128xf32> to vector<1x8x128xf32>
    tpu.vector_store %arg7[%163, %c0_66, %c0_67], %166 {strides = array<i32>} : memref<8x8x128xf32, #tpu.memory_space<vmem>>, vector<1x8x128xf32>,
    %c2_i32 = arith.constant 2 : i32
    %167 = arith.index_cast %c2_i32 : i32 to index
    %c0_68 = arith.constant 0 : index
    %c0_69 = arith.constant 0 : index
    %168 = vector.load %arg12[%167, %c0_68, %c0_69] : memref<8x8x512xf32, #tpu.memory_space<vmem>>, vector<1x8x512xf32>
    %169 = vector.shape_cast %168 : vector<1x8x512xf32> to vector<8x512xf32>
    %cst_70 = arith.constant dense<0.000000e+00> : vector<8x512xf32>
    %170 = tpu.matmul %127, %23, %cst_70 {dimension_numbers = #tpu.dot_dimension_numbers<[1], [0], [0], [1], [0, 0, 1, 1], [], []>} : vector<8x128xf32>, vector<128x512xf32>, vector<8x512xf32> -> vector<8x512xf32>
    %171 = arith.addf %169, %170 : vector<8x512xf32>
    %172 = vector.extract_strided_slice %171 {offsets = [0, 0], sizes = [8, 128], strides = [1, 1]} : vector<8x512xf32> to vector<8x128xf32>
    %173 = arith.negf %172 : vector<8x128xf32>
    %174 = math.exp %173 : vector<8x128xf32>
    %cst_71 = arith.constant 1.000000e+00 : f32
    %175 = vector.broadcast %cst_71 : f32 to vector<8x128xf32>
    %176 = arith.addf %175, %174 : vector<8x128xf32>
    %177 = arith.divf %175, %176 : vector<8x128xf32>
    %178 = vector.extract_strided_slice %171 {offsets = [0, 128], sizes = [8, 128], strides = [1, 1]} : vector<8x512xf32> to vector<8x128xf32>
    %179 = arith.negf %178 : vector<8x128xf32>
    %180 = math.exp %179 : vector<8x128xf32>
    %cst_72 = arith.constant 1.000000e+00 : f32
    %181 = vector.broadcast %cst_72 : f32 to vector<8x128xf32>
    %182 = arith.addf %181, %180 : vector<8x128xf32>
    %183 = arith.divf %181, %182 : vector<8x128xf32>
    %184 = vector.extract_strided_slice %171 {offsets = [0, 256], sizes = [8, 128], strides = [1, 1]} : vector<8x512xf32> to vector<8x128xf32>
    %185 = math.tanh %184 : vector<8x128xf32>
    %186 = vector.extract_strided_slice %171 {offsets = [0, 384], sizes = [8, 128], strides = [1, 1]} : vector<8x512xf32> to vector<8x128xf32>
    %187 = arith.negf %186 : vector<8x128xf32>
    %188 = math.exp %187 : vector<8x128xf32>
    %cst_73 = arith.constant 1.000000e+00 : f32
    %189 = vector.broadcast %cst_73 : f32 to vector<8x128xf32>
    %190 = arith.addf %189, %188 : vector<8x128xf32>
    %191 = arith.divf %189, %190 : vector<8x128xf32>
    %192 = arith.mulf %183, %125 : vector<8x128xf32>
    %193 = arith.mulf %177, %185 : vector<8x128xf32>
    %194 = arith.addf %192, %193 : vector<8x128xf32>
    %195 = math.tanh %194 : vector<8x128xf32>
    %196 = arith.mulf %191, %195 : vector<8x128xf32>
    %197 = arith.index_cast %c2_i32 : i32 to index
    %c0_74 = arith.constant 0 : index
    %c0_75 = arith.constant 0 : index
    %198 = vector.load %arg6[%197, %c0_74, %c0_75] : memref<8x8x128xf32, #tpu.memory_space<vmem>>, vector<1x8x128xf32>
    %199 = vector.shape_cast %198 : vector<1x8x128xf32> to vector<8x128xf32>
    %200 = vector.shape_cast %196 : vector<8x128xf32> to vector<1x8x128xf32>
    tpu.vector_store %arg6[%197, %c0_74, %c0_75], %200 {strides = array<i32>} : memref<8x8x128xf32, #tpu.memory_space<vmem>>, vector<1x8x128xf32>,
    %c7_i32_76 = arith.constant 7 : i32
    %201 = arith.subi %c7_i32_76, %c2_i32 : i32
    %202 = arith.index_cast %201 : i32 to index
    %c0_77 = arith.constant 0 : index
    %c0_78 = arith.constant 0 : index
    %203 = vector.load %arg13[%202, %c0_77, %c0_78] : memref<8x8x512xf32, #tpu.memory_space<vmem>>, vector<1x8x512xf32>
    %204 = vector.shape_cast %203 : vector<1x8x512xf32> to vector<8x512xf32>
    %cst_79 = arith.constant dense<0.000000e+00> : vector<8x512xf32>
    %205 = tpu.matmul %162, %24, %cst_79 {dimension_numbers = #tpu.dot_dimension_numbers<[1], [0], [0], [1], [0, 0, 1, 1], [], []>} : vector<8x128xf32>, vector<128x512xf32>, vector<8x512xf32> -> vector<8x512xf32>
    %206 = arith.addf %204, %205 : vector<8x512xf32>
    %207 = vector.extract_strided_slice %206 {offsets = [0, 0], sizes = [8, 128], strides = [1, 1]} : vector<8x512xf32> to vector<8x128xf32>
    %208 = arith.negf %207 : vector<8x128xf32>
    %209 = math.exp %208 : vector<8x128xf32>
    %cst_80 = arith.constant 1.000000e+00 : f32
    %210 = vector.broadcast %cst_80 : f32 to vector<8x128xf32>
    %211 = arith.addf %210, %209 : vector<8x128xf32>
    %212 = arith.divf %210, %211 : vector<8x128xf32>
    %213 = vector.extract_strided_slice %206 {offsets = [0, 128], sizes = [8, 128], strides = [1, 1]} : vector<8x512xf32> to vector<8x128xf32>
    %214 = arith.negf %213 : vector<8x128xf32>
    %215 = math.exp %214 : vector<8x128xf32>
    %cst_81 = arith.constant 1.000000e+00 : f32
    %216 = vector.broadcast %cst_81 : f32 to vector<8x128xf32>
    %217 = arith.addf %216, %215 : vector<8x128xf32>
    %218 = arith.divf %216, %217 : vector<8x128xf32>
    %219 = vector.extract_strided_slice %206 {offsets = [0, 256], sizes = [8, 128], strides = [1, 1]} : vector<8x512xf32> to vector<8x128xf32>
    %220 = math.tanh %219 : vector<8x128xf32>
    %221 = vector.extract_strided_slice %206 {offsets = [0, 384], sizes = [8, 128], strides = [1, 1]} : vector<8x512xf32> to vector<8x128xf32>
    %222 = arith.negf %221 : vector<8x128xf32>
    %223 = math.exp %222 : vector<8x128xf32>
    %cst_82 = arith.constant 1.000000e+00 : f32
    %224 = vector.broadcast %cst_82 : f32 to vector<8x128xf32>
    %225 = arith.addf %224, %223 : vector<8x128xf32>
    %226 = arith.divf %224, %225 : vector<8x128xf32>
    %227 = arith.mulf %218, %160 : vector<8x128xf32>
    %228 = arith.mulf %212, %220 : vector<8x128xf32>
    %229 = arith.addf %227, %228 : vector<8x128xf32>
    %230 = math.tanh %229 : vector<8x128xf32>
    %231 = arith.mulf %226, %230 : vector<8x128xf32>
    %232 = arith.index_cast %201 : i32 to index
    %c0_83 = arith.constant 0 : index
    %c0_84 = arith.constant 0 : index
    %233 = vector.load %arg7[%232, %c0_83, %c0_84] : memref<8x8x128xf32, #tpu.memory_space<vmem>>, vector<1x8x128xf32>
    %234 = vector.shape_cast %233 : vector<1x8x128xf32> to vector<8x128xf32>
    %235 = vector.shape_cast %231 : vector<8x128xf32> to vector<1x8x128xf32>
    tpu.vector_store %arg7[%232, %c0_83, %c0_84], %235 {strides = array<i32>} : memref<8x8x128xf32, #tpu.memory_space<vmem>>, vector<1x8x128xf32>,
    %c3_i32 = arith.constant 3 : i32
    %236 = arith.index_cast %c3_i32 : i32 to index
    %c0_85 = arith.constant 0 : index
    %c0_86 = arith.constant 0 : index
    %237 = vector.load %arg12[%236, %c0_85, %c0_86] : memref<8x8x512xf32, #tpu.memory_space<vmem>>, vector<1x8x512xf32>
    %238 = vector.shape_cast %237 : vector<1x8x512xf32> to vector<8x512xf32>
    %cst_87 = arith.constant dense<0.000000e+00> : vector<8x512xf32>
    %239 = tpu.matmul %196, %23, %cst_87 {dimension_numbers = #tpu.dot_dimension_numbers<[1], [0], [0], [1], [0, 0, 1, 1], [], []>} : vector<8x128xf32>, vector<128x512xf32>, vector<8x512xf32> -> vector<8x512xf32>
    %240 = arith.addf %238, %239 : vector<8x512xf32>
    %241 = vector.extract_strided_slice %240 {offsets = [0, 0], sizes = [8, 128], strides = [1, 1]} : vector<8x512xf32> to vector<8x128xf32>
    %242 = arith.negf %241 : vector<8x128xf32>
    %243 = math.exp %242 : vector<8x128xf32>
    %cst_88 = arith.constant 1.000000e+00 : f32
    %244 = vector.broadcast %cst_88 : f32 to vector<8x128xf32>
    %245 = arith.addf %244, %243 : vector<8x128xf32>
    %246 = arith.divf %244, %245 : vector<8x128xf32>
    %247 = vector.extract_strided_slice %240 {offsets = [0, 128], sizes = [8, 128], strides = [1, 1]} : vector<8x512xf32> to vector<8x128xf32>
    %248 = arith.negf %247 : vector<8x128xf32>
    %249 = math.exp %248 : vector<8x128xf32>
    %cst_89 = arith.constant 1.000000e+00 : f32
    %250 = vector.broadcast %cst_89 : f32 to vector<8x128xf32>
    %251 = arith.addf %250, %249 : vector<8x128xf32>
    %252 = arith.divf %250, %251 : vector<8x128xf32>
    %253 = vector.extract_strided_slice %240 {offsets = [0, 256], sizes = [8, 128], strides = [1, 1]} : vector<8x512xf32> to vector<8x128xf32>
    %254 = math.tanh %253 : vector<8x128xf32>
    %255 = vector.extract_strided_slice %240 {offsets = [0, 384], sizes = [8, 128], strides = [1, 1]} : vector<8x512xf32> to vector<8x128xf32>
    %256 = arith.negf %255 : vector<8x128xf32>
    %257 = math.exp %256 : vector<8x128xf32>
    %cst_90 = arith.constant 1.000000e+00 : f32
    %258 = vector.broadcast %cst_90 : f32 to vector<8x128xf32>
    %259 = arith.addf %258, %257 : vector<8x128xf32>
    %260 = arith.divf %258, %259 : vector<8x128xf32>
    %261 = arith.mulf %252, %194 : vector<8x128xf32>
    %262 = arith.mulf %246, %254 : vector<8x128xf32>
    %263 = arith.addf %261, %262 : vector<8x128xf32>
    %264 = math.tanh %263 : vector<8x128xf32>
    %265 = arith.mulf %260, %264 : vector<8x128xf32>
    %266 = arith.index_cast %c3_i32 : i32 to index
    %c0_91 = arith.constant 0 : index
    %c0_92 = arith.constant 0 : index
    %267 = vector.load %arg6[%266, %c0_91, %c0_92] : memref<8x8x128xf32, #tpu.memory_space<vmem>>, vector<1x8x128xf32>
    %268 = vector.shape_cast %267 : vector<1x8x128xf32> to vector<8x128xf32>
    %269 = vector.shape_cast %265 : vector<8x128xf32> to vector<1x8x128xf32>
    tpu.vector_store %arg6[%266, %c0_91, %c0_92], %269 {strides = array<i32>} : memref<8x8x128xf32, #tpu.memory_space<vmem>>, vector<1x8x128xf32>,
    %c7_i32_93 = arith.constant 7 : i32
    %270 = arith.subi %c7_i32_93, %c3_i32 : i32
    %271 = arith.index_cast %270 : i32 to index
    %c0_94 = arith.constant 0 : index
    %c0_95 = arith.constant 0 : index
    %272 = vector.load %arg13[%271, %c0_94, %c0_95] : memref<8x8x512xf32, #tpu.memory_space<vmem>>, vector<1x8x512xf32>
    %273 = vector.shape_cast %272 : vector<1x8x512xf32> to vector<8x512xf32>
    %cst_96 = arith.constant dense<0.000000e+00> : vector<8x512xf32>
    %274 = tpu.matmul %231, %24, %cst_96 {dimension_numbers = #tpu.dot_dimension_numbers<[1], [0], [0], [1], [0, 0, 1, 1], [], []>} : vector<8x128xf32>, vector<128x512xf32>, vector<8x512xf32> -> vector<8x512xf32>
    %275 = arith.addf %273, %274 : vector<8x512xf32>
    %276 = vector.extract_strided_slice %275 {offsets = [0, 0], sizes = [8, 128], strides = [1, 1]} : vector<8x512xf32> to vector<8x128xf32>
    %277 = arith.negf %276 : vector<8x128xf32>
    %278 = math.exp %277 : vector<8x128xf32>
    %cst_97 = arith.constant 1.000000e+00 : f32
    %279 = vector.broadcast %cst_97 : f32 to vector<8x128xf32>
    %280 = arith.addf %279, %278 : vector<8x128xf32>
    %281 = arith.divf %279, %280 : vector<8x128xf32>
    %282 = vector.extract_strided_slice %275 {offsets = [0, 128], sizes = [8, 128], strides = [1, 1]} : vector<8x512xf32> to vector<8x128xf32>
    %283 = arith.negf %282 : vector<8x128xf32>
    %284 = math.exp %283 : vector<8x128xf32>
    %cst_98 = arith.constant 1.000000e+00 : f32
    %285 = vector.broadcast %cst_98 : f32 to vector<8x128xf32>
    %286 = arith.addf %285, %284 : vector<8x128xf32>
    %287 = arith.divf %285, %286 : vector<8x128xf32>
    %288 = vector.extract_strided_slice %275 {offsets = [0, 256], sizes = [8, 128], strides = [1, 1]} : vector<8x512xf32> to vector<8x128xf32>
    %289 = math.tanh %288 : vector<8x128xf32>
    %290 = vector.extract_strided_slice %275 {offsets = [0, 384], sizes = [8, 128], strides = [1, 1]} : vector<8x512xf32> to vector<8x128xf32>
    %291 = arith.negf %290 : vector<8x128xf32>
    %292 = math.exp %291 : vector<8x128xf32>
    %cst_99 = arith.constant 1.000000e+00 : f32
    %293 = vector.broadcast %cst_99 : f32 to vector<8x128xf32>
    %294 = arith.addf %293, %292 : vector<8x128xf32>
    %295 = arith.divf %293, %294 : vector<8x128xf32>
    %296 = arith.mulf %287, %229 : vector<8x128xf32>
    %297 = arith.mulf %281, %289 : vector<8x128xf32>
    %298 = arith.addf %296, %297 : vector<8x128xf32>
    %299 = math.tanh %298 : vector<8x128xf32>
    %300 = arith.mulf %295, %299 : vector<8x128xf32>
    %301 = arith.index_cast %270 : i32 to index
    %c0_100 = arith.constant 0 : index
    %c0_101 = arith.constant 0 : index
    %302 = vector.load %arg7[%301, %c0_100, %c0_101] : memref<8x8x128xf32, #tpu.memory_space<vmem>>, vector<1x8x128xf32>
    %303 = vector.shape_cast %302 : vector<1x8x128xf32> to vector<8x128xf32>
    %304 = vector.shape_cast %300 : vector<8x128xf32> to vector<1x8x128xf32>
    tpu.vector_store %arg7[%301, %c0_100, %c0_101], %304 {strides = array<i32>} : memref<8x8x128xf32, #tpu.memory_space<vmem>>, vector<1x8x128xf32>,
    %c4_i32 = arith.constant 4 : i32
    %305 = arith.index_cast %c4_i32 : i32 to index
    %c0_102 = arith.constant 0 : index
    %c0_103 = arith.constant 0 : index
    %306 = vector.load %arg12[%305, %c0_102, %c0_103] : memref<8x8x512xf32, #tpu.memory_space<vmem>>, vector<1x8x512xf32>
    %307 = vector.shape_cast %306 : vector<1x8x512xf32> to vector<8x512xf32>
    %cst_104 = arith.constant dense<0.000000e+00> : vector<8x512xf32>
    %308 = tpu.matmul %265, %23, %cst_104 {dimension_numbers = #tpu.dot_dimension_numbers<[1], [0], [0], [1], [0, 0, 1, 1], [], []>} : vector<8x128xf32>, vector<128x512xf32>, vector<8x512xf32> -> vector<8x512xf32>
    %309 = arith.addf %307, %308 : vector<8x512xf32>
    %310 = vector.extract_strided_slice %309 {offsets = [0, 0], sizes = [8, 128], strides = [1, 1]} : vector<8x512xf32> to vector<8x128xf32>
    %311 = arith.negf %310 : vector<8x128xf32>
    %312 = math.exp %311 : vector<8x128xf32>
    %cst_105 = arith.constant 1.000000e+00 : f32
    %313 = vector.broadcast %cst_105 : f32 to vector<8x128xf32>
    %314 = arith.addf %313, %312 : vector<8x128xf32>
    %315 = arith.divf %313, %314 : vector<8x128xf32>
    %316 = vector.extract_strided_slice %309 {offsets = [0, 128], sizes = [8, 128], strides = [1, 1]} : vector<8x512xf32> to vector<8x128xf32>
    %317 = arith.negf %316 : vector<8x128xf32>
    %318 = math.exp %317 : vector<8x128xf32>
    %cst_106 = arith.constant 1.000000e+00 : f32
    %319 = vector.broadcast %cst_106 : f32 to vector<8x128xf32>
    %320 = arith.addf %319, %318 : vector<8x128xf32>
    %321 = arith.divf %319, %320 : vector<8x128xf32>
    %322 = vector.extract_strided_slice %309 {offsets = [0, 256], sizes = [8, 128], strides = [1, 1]} : vector<8x512xf32> to vector<8x128xf32>
    %323 = math.tanh %322 : vector<8x128xf32>
    %324 = vector.extract_strided_slice %309 {offsets = [0, 384], sizes = [8, 128], strides = [1, 1]} : vector<8x512xf32> to vector<8x128xf32>
    %325 = arith.negf %324 : vector<8x128xf32>
    %326 = math.exp %325 : vector<8x128xf32>
    %cst_107 = arith.constant 1.000000e+00 : f32
    %327 = vector.broadcast %cst_107 : f32 to vector<8x128xf32>
    %328 = arith.addf %327, %326 : vector<8x128xf32>
    %329 = arith.divf %327, %328 : vector<8x128xf32>
    %330 = arith.mulf %321, %263 : vector<8x128xf32>
    %331 = arith.mulf %315, %323 : vector<8x128xf32>
    %332 = arith.addf %330, %331 : vector<8x128xf32>
    %333 = math.tanh %332 : vector<8x128xf32>
    %334 = arith.mulf %329, %333 : vector<8x128xf32>
    %335 = arith.index_cast %c4_i32 : i32 to index
    %c0_108 = arith.constant 0 : index
    %c0_109 = arith.constant 0 : index
    %336 = vector.load %arg6[%335, %c0_108, %c0_109] : memref<8x8x128xf32, #tpu.memory_space<vmem>>, vector<1x8x128xf32>
    %337 = vector.shape_cast %336 : vector<1x8x128xf32> to vector<8x128xf32>
    %338 = vector.shape_cast %334 : vector<8x128xf32> to vector<1x8x128xf32>
    tpu.vector_store %arg6[%335, %c0_108, %c0_109], %338 {strides = array<i32>} : memref<8x8x128xf32, #tpu.memory_space<vmem>>, vector<1x8x128xf32>,
    %c7_i32_110 = arith.constant 7 : i32
    %339 = arith.subi %c7_i32_110, %c4_i32 : i32
    %340 = arith.index_cast %339 : i32 to index
    %c0_111 = arith.constant 0 : index
    %c0_112 = arith.constant 0 : index
    %341 = vector.load %arg13[%340, %c0_111, %c0_112] : memref<8x8x512xf32, #tpu.memory_space<vmem>>, vector<1x8x512xf32>
    %342 = vector.shape_cast %341 : vector<1x8x512xf32> to vector<8x512xf32>
    %cst_113 = arith.constant dense<0.000000e+00> : vector<8x512xf32>
    %343 = tpu.matmul %300, %24, %cst_113 {dimension_numbers = #tpu.dot_dimension_numbers<[1], [0], [0], [1], [0, 0, 1, 1], [], []>} : vector<8x128xf32>, vector<128x512xf32>, vector<8x512xf32> -> vector<8x512xf32>
    %344 = arith.addf %342, %343 : vector<8x512xf32>
    %345 = vector.extract_strided_slice %344 {offsets = [0, 0], sizes = [8, 128], strides = [1, 1]} : vector<8x512xf32> to vector<8x128xf32>
    %346 = arith.negf %345 : vector<8x128xf32>
    %347 = math.exp %346 : vector<8x128xf32>
    %cst_114 = arith.constant 1.000000e+00 : f32
    %348 = vector.broadcast %cst_114 : f32 to vector<8x128xf32>
    %349 = arith.addf %348, %347 : vector<8x128xf32>
    %350 = arith.divf %348, %349 : vector<8x128xf32>
    %351 = vector.extract_strided_slice %344 {offsets = [0, 128], sizes = [8, 128], strides = [1, 1]} : vector<8x512xf32> to vector<8x128xf32>
    %352 = arith.negf %351 : vector<8x128xf32>
    %353 = math.exp %352 : vector<8x128xf32>
    %cst_115 = arith.constant 1.000000e+00 : f32
    %354 = vector.broadcast %cst_115 : f32 to vector<8x128xf32>
    %355 = arith.addf %354, %353 : vector<8x128xf32>
    %356 = arith.divf %354, %355 : vector<8x128xf32>
    %357 = vector.extract_strided_slice %344 {offsets = [0, 256], sizes = [8, 128], strides = [1, 1]} : vector<8x512xf32> to vector<8x128xf32>
    %358 = math.tanh %357 : vector<8x128xf32>
    %359 = vector.extract_strided_slice %344 {offsets = [0, 384], sizes = [8, 128], strides = [1, 1]} : vector<8x512xf32> to vector<8x128xf32>
    %360 = arith.negf %359 : vector<8x128xf32>
    %361 = math.exp %360 : vector<8x128xf32>
    %cst_116 = arith.constant 1.000000e+00 : f32
    %362 = vector.broadcast %cst_116 : f32 to vector<8x128xf32>
    %363 = arith.addf %362, %361 : vector<8x128xf32>
    %364 = arith.divf %362, %363 : vector<8x128xf32>
    %365 = arith.mulf %356, %298 : vector<8x128xf32>
    %366 = arith.mulf %350, %358 : vector<8x128xf32>
    %367 = arith.addf %365, %366 : vector<8x128xf32>
    %368 = math.tanh %367 : vector<8x128xf32>
    %369 = arith.mulf %364, %368 : vector<8x128xf32>
    %370 = arith.index_cast %339 : i32 to index
    %c0_117 = arith.constant 0 : index
    %c0_118 = arith.constant 0 : index
    %371 = vector.load %arg7[%370, %c0_117, %c0_118] : memref<8x8x128xf32, #tpu.memory_space<vmem>>, vector<1x8x128xf32>
    %372 = vector.shape_cast %371 : vector<1x8x128xf32> to vector<8x128xf32>
    %373 = vector.shape_cast %369 : vector<8x128xf32> to vector<1x8x128xf32>
    tpu.vector_store %arg7[%370, %c0_117, %c0_118], %373 {strides = array<i32>} : memref<8x8x128xf32, #tpu.memory_space<vmem>>, vector<1x8x128xf32>,
    %c5_i32 = arith.constant 5 : i32
    %374 = arith.index_cast %c5_i32 : i32 to index
    %c0_119 = arith.constant 0 : index
    %c0_120 = arith.constant 0 : index
    %375 = vector.load %arg12[%374, %c0_119, %c0_120] : memref<8x8x512xf32, #tpu.memory_space<vmem>>, vector<1x8x512xf32>
    %376 = vector.shape_cast %375 : vector<1x8x512xf32> to vector<8x512xf32>
    %cst_121 = arith.constant dense<0.000000e+00> : vector<8x512xf32>
    %377 = tpu.matmul %334, %23, %cst_121 {dimension_numbers = #tpu.dot_dimension_numbers<[1], [0], [0], [1], [0, 0, 1, 1], [], []>} : vector<8x128xf32>, vector<128x512xf32>, vector<8x512xf32> -> vector<8x512xf32>
    %378 = arith.addf %376, %377 : vector<8x512xf32>
    %379 = vector.extract_strided_slice %378 {offsets = [0, 0], sizes = [8, 128], strides = [1, 1]} : vector<8x512xf32> to vector<8x128xf32>
    %380 = arith.negf %379 : vector<8x128xf32>
    %381 = math.exp %380 : vector<8x128xf32>
    %cst_122 = arith.constant 1.000000e+00 : f32
    %382 = vector.broadcast %cst_122 : f32 to vector<8x128xf32>
    %383 = arith.addf %382, %381 : vector<8x128xf32>
    %384 = arith.divf %382, %383 : vector<8x128xf32>
    %385 = vector.extract_strided_slice %378 {offsets = [0, 128], sizes = [8, 128], strides = [1, 1]} : vector<8x512xf32> to vector<8x128xf32>
    %386 = arith.negf %385 : vector<8x128xf32>
    %387 = math.exp %386 : vector<8x128xf32>
    %cst_123 = arith.constant 1.000000e+00 : f32
    %388 = vector.broadcast %cst_123 : f32 to vector<8x128xf32>
    %389 = arith.addf %388, %387 : vector<8x128xf32>
    %390 = arith.divf %388, %389 : vector<8x128xf32>
    %391 = vector.extract_strided_slice %378 {offsets = [0, 256], sizes = [8, 128], strides = [1, 1]} : vector<8x512xf32> to vector<8x128xf32>
    %392 = math.tanh %391 : vector<8x128xf32>
    %393 = vector.extract_strided_slice %378 {offsets = [0, 384], sizes = [8, 128], strides = [1, 1]} : vector<8x512xf32> to vector<8x128xf32>
    %394 = arith.negf %393 : vector<8x128xf32>
    %395 = math.exp %394 : vector<8x128xf32>
    %cst_124 = arith.constant 1.000000e+00 : f32
    %396 = vector.broadcast %cst_124 : f32 to vector<8x128xf32>
    %397 = arith.addf %396, %395 : vector<8x128xf32>
    %398 = arith.divf %396, %397 : vector<8x128xf32>
    %399 = arith.mulf %390, %332 : vector<8x128xf32>
    %400 = arith.mulf %384, %392 : vector<8x128xf32>
    %401 = arith.addf %399, %400 : vector<8x128xf32>
    %402 = math.tanh %401 : vector<8x128xf32>
    %403 = arith.mulf %398, %402 : vector<8x128xf32>
    %404 = arith.index_cast %c5_i32 : i32 to index
    %c0_125 = arith.constant 0 : index
    %c0_126 = arith.constant 0 : index
    %405 = vector.load %arg6[%404, %c0_125, %c0_126] : memref<8x8x128xf32, #tpu.memory_space<vmem>>, vector<1x8x128xf32>
    %406 = vector.shape_cast %405 : vector<1x8x128xf32> to vector<8x128xf32>
    %407 = vector.shape_cast %403 : vector<8x128xf32> to vector<1x8x128xf32>
    tpu.vector_store %arg6[%404, %c0_125, %c0_126], %407 {strides = array<i32>} : memref<8x8x128xf32, #tpu.memory_space<vmem>>, vector<1x8x128xf32>,
    %c7_i32_127 = arith.constant 7 : i32
    %408 = arith.subi %c7_i32_127, %c5_i32 : i32
    %409 = arith.index_cast %408 : i32 to index
    %c0_128 = arith.constant 0 : index
    %c0_129 = arith.constant 0 : index
    %410 = vector.load %arg13[%409, %c0_128, %c0_129] : memref<8x8x512xf32, #tpu.memory_space<vmem>>, vector<1x8x512xf32>
    %411 = vector.shape_cast %410 : vector<1x8x512xf32> to vector<8x512xf32>
    %cst_130 = arith.constant dense<0.000000e+00> : vector<8x512xf32>
    %412 = tpu.matmul %369, %24, %cst_130 {dimension_numbers = #tpu.dot_dimension_numbers<[1], [0], [0], [1], [0, 0, 1, 1], [], []>} : vector<8x128xf32>, vector<128x512xf32>, vector<8x512xf32> -> vector<8x512xf32>
    %413 = arith.addf %411, %412 : vector<8x512xf32>
    %414 = vector.extract_strided_slice %413 {offsets = [0, 0], sizes = [8, 128], strides = [1, 1]} : vector<8x512xf32> to vector<8x128xf32>
    %415 = arith.negf %414 : vector<8x128xf32>
    %416 = math.exp %415 : vector<8x128xf32>
    %cst_131 = arith.constant 1.000000e+00 : f32
    %417 = vector.broadcast %cst_131 : f32 to vector<8x128xf32>
    %418 = arith.addf %417, %416 : vector<8x128xf32>
    %419 = arith.divf %417, %418 : vector<8x128xf32>
    %420 = vector.extract_strided_slice %413 {offsets = [0, 128], sizes = [8, 128], strides = [1, 1]} : vector<8x512xf32> to vector<8x128xf32>
    %421 = arith.negf %420 : vector<8x128xf32>
    %422 = math.exp %421 : vector<8x128xf32>
    %cst_132 = arith.constant 1.000000e+00 : f32
    %423 = vector.broadcast %cst_132 : f32 to vector<8x128xf32>
    %424 = arith.addf %423, %422 : vector<8x128xf32>
    %425 = arith.divf %423, %424 : vector<8x128xf32>
    %426 = vector.extract_strided_slice %413 {offsets = [0, 256], sizes = [8, 128], strides = [1, 1]} : vector<8x512xf32> to vector<8x128xf32>
    %427 = math.tanh %426 : vector<8x128xf32>
    %428 = vector.extract_strided_slice %413 {offsets = [0, 384], sizes = [8, 128], strides = [1, 1]} : vector<8x512xf32> to vector<8x128xf32>
    %429 = arith.negf %428 : vector<8x128xf32>
    %430 = math.exp %429 : vector<8x128xf32>
    %cst_133 = arith.constant 1.000000e+00 : f32
    %431 = vector.broadcast %cst_133 : f32 to vector<8x128xf32>
    %432 = arith.addf %431, %430 : vector<8x128xf32>
    %433 = arith.divf %431, %432 : vector<8x128xf32>
    %434 = arith.mulf %425, %367 : vector<8x128xf32>
    %435 = arith.mulf %419, %427 : vector<8x128xf32>
    %436 = arith.addf %434, %435 : vector<8x128xf32>
    %437 = math.tanh %436 : vector<8x128xf32>
    %438 = arith.mulf %433, %437 : vector<8x128xf32>
    %439 = arith.index_cast %408 : i32 to index
    %c0_134 = arith.constant 0 : index
    %c0_135 = arith.constant 0 : index
    %440 = vector.load %arg7[%439, %c0_134, %c0_135] : memref<8x8x128xf32, #tpu.memory_space<vmem>>, vector<1x8x128xf32>
    %441 = vector.shape_cast %440 : vector<1x8x128xf32> to vector<8x128xf32>
    %442 = vector.shape_cast %438 : vector<8x128xf32> to vector<1x8x128xf32>
    tpu.vector_store %arg7[%439, %c0_134, %c0_135], %442 {strides = array<i32>} : memref<8x8x128xf32, #tpu.memory_space<vmem>>, vector<1x8x128xf32>,
    %c6_i32 = arith.constant 6 : i32
    %443 = arith.index_cast %c6_i32 : i32 to index
    %c0_136 = arith.constant 0 : index
    %c0_137 = arith.constant 0 : index
    %444 = vector.load %arg12[%443, %c0_136, %c0_137] : memref<8x8x512xf32, #tpu.memory_space<vmem>>, vector<1x8x512xf32>
    %445 = vector.shape_cast %444 : vector<1x8x512xf32> to vector<8x512xf32>
    %cst_138 = arith.constant dense<0.000000e+00> : vector<8x512xf32>
    %446 = tpu.matmul %403, %23, %cst_138 {dimension_numbers = #tpu.dot_dimension_numbers<[1], [0], [0], [1], [0, 0, 1, 1], [], []>} : vector<8x128xf32>, vector<128x512xf32>, vector<8x512xf32> -> vector<8x512xf32>
    %447 = arith.addf %445, %446 : vector<8x512xf32>
    %448 = vector.extract_strided_slice %447 {offsets = [0, 0], sizes = [8, 128], strides = [1, 1]} : vector<8x512xf32> to vector<8x128xf32>
    %449 = arith.negf %448 : vector<8x128xf32>
    %450 = math.exp %449 : vector<8x128xf32>
    %cst_139 = arith.constant 1.000000e+00 : f32
    %451 = vector.broadcast %cst_139 : f32 to vector<8x128xf32>
    %452 = arith.addf %451, %450 : vector<8x128xf32>
    %453 = arith.divf %451, %452 : vector<8x128xf32>
    %454 = vector.extract_strided_slice %447 {offsets = [0, 128], sizes = [8, 128], strides = [1, 1]} : vector<8x512xf32> to vector<8x128xf32>
    %455 = arith.negf %454 : vector<8x128xf32>
    %456 = math.exp %455 : vector<8x128xf32>
    %cst_140 = arith.constant 1.000000e+00 : f32
    %457 = vector.broadcast %cst_140 : f32 to vector<8x128xf32>
    %458 = arith.addf %457, %456 : vector<8x128xf32>
    %459 = arith.divf %457, %458 : vector<8x128xf32>
    %460 = vector.extract_strided_slice %447 {offsets = [0, 256], sizes = [8, 128], strides = [1, 1]} : vector<8x512xf32> to vector<8x128xf32>
    %461 = math.tanh %460 : vector<8x128xf32>
    %462 = vector.extract_strided_slice %447 {offsets = [0, 384], sizes = [8, 128], strides = [1, 1]} : vector<8x512xf32> to vector<8x128xf32>
    %463 = arith.negf %462 : vector<8x128xf32>
    %464 = math.exp %463 : vector<8x128xf32>
    %cst_141 = arith.constant 1.000000e+00 : f32
    %465 = vector.broadcast %cst_141 : f32 to vector<8x128xf32>
    %466 = arith.addf %465, %464 : vector<8x128xf32>
    %467 = arith.divf %465, %466 : vector<8x128xf32>
    %468 = arith.mulf %459, %401 : vector<8x128xf32>
    %469 = arith.mulf %453, %461 : vector<8x128xf32>
    %470 = arith.addf %468, %469 : vector<8x128xf32>
    %471 = math.tanh %470 : vector<8x128xf32>
    %472 = arith.mulf %467, %471 : vector<8x128xf32>
    %473 = arith.index_cast %c6_i32 : i32 to index
    %c0_142 = arith.constant 0 : index
    %c0_143 = arith.constant 0 : index
    %474 = vector.load %arg6[%473, %c0_142, %c0_143] : memref<8x8x128xf32, #tpu.memory_space<vmem>>, vector<1x8x128xf32>
    %475 = vector.shape_cast %474 : vector<1x8x128xf32> to vector<8x128xf32>
    %476 = vector.shape_cast %472 : vector<8x128xf32> to vector<1x8x128xf32>
    tpu.vector_store %arg6[%473, %c0_142, %c0_143], %476 {strides = array<i32>} : memref<8x8x128xf32, #tpu.memory_space<vmem>>, vector<1x8x128xf32>,
    %c7_i32_144 = arith.constant 7 : i32
    %477 = arith.subi %c7_i32_144, %c6_i32 : i32
    %478 = arith.index_cast %477 : i32 to index
    %c0_145 = arith.constant 0 : index
    %c0_146 = arith.constant 0 : index
    %479 = vector.load %arg13[%478, %c0_145, %c0_146] : memref<8x8x512xf32, #tpu.memory_space<vmem>>, vector<1x8x512xf32>
    %480 = vector.shape_cast %479 : vector<1x8x512xf32> to vector<8x512xf32>
    %cst_147 = arith.constant dense<0.000000e+00> : vector<8x512xf32>
    %481 = tpu.matmul %438, %24, %cst_147 {dimension_numbers = #tpu.dot_dimension_numbers<[1], [0], [0], [1], [0, 0, 1, 1], [], []>} : vector<8x128xf32>, vector<128x512xf32>, vector<8x512xf32> -> vector<8x512xf32>
    %482 = arith.addf %480, %481 : vector<8x512xf32>
    %483 = vector.extract_strided_slice %482 {offsets = [0, 0], sizes = [8, 128], strides = [1, 1]} : vector<8x512xf32> to vector<8x128xf32>
    %484 = arith.negf %483 : vector<8x128xf32>
    %485 = math.exp %484 : vector<8x128xf32>
    %cst_148 = arith.constant 1.000000e+00 : f32
    %486 = vector.broadcast %cst_148 : f32 to vector<8x128xf32>
    %487 = arith.addf %486, %485 : vector<8x128xf32>
    %488 = arith.divf %486, %487 : vector<8x128xf32>
    %489 = vector.extract_strided_slice %482 {offsets = [0, 128], sizes = [8, 128], strides = [1, 1]} : vector<8x512xf32> to vector<8x128xf32>
    %490 = arith.negf %489 : vector<8x128xf32>
    %491 = math.exp %490 : vector<8x128xf32>
    %cst_149 = arith.constant 1.000000e+00 : f32
    %492 = vector.broadcast %cst_149 : f32 to vector<8x128xf32>
    %493 = arith.addf %492, %491 : vector<8x128xf32>
    %494 = arith.divf %492, %493 : vector<8x128xf32>
    %495 = vector.extract_strided_slice %482 {offsets = [0, 256], sizes = [8, 128], strides = [1, 1]} : vector<8x512xf32> to vector<8x128xf32>
    %496 = math.tanh %495 : vector<8x128xf32>
    %497 = vector.extract_strided_slice %482 {offsets = [0, 384], sizes = [8, 128], strides = [1, 1]} : vector<8x512xf32> to vector<8x128xf32>
    %498 = arith.negf %497 : vector<8x128xf32>
    %499 = math.exp %498 : vector<8x128xf32>
    %cst_150 = arith.constant 1.000000e+00 : f32
    %500 = vector.broadcast %cst_150 : f32 to vector<8x128xf32>
    %501 = arith.addf %500, %499 : vector<8x128xf32>
    %502 = arith.divf %500, %501 : vector<8x128xf32>
    %503 = arith.mulf %494, %436 : vector<8x128xf32>
    %504 = arith.mulf %488, %496 : vector<8x128xf32>
    %505 = arith.addf %503, %504 : vector<8x128xf32>
    %506 = math.tanh %505 : vector<8x128xf32>
    %507 = arith.mulf %502, %506 : vector<8x128xf32>
    %508 = arith.index_cast %477 : i32 to index
    %c0_151 = arith.constant 0 : index
    %c0_152 = arith.constant 0 : index
    %509 = vector.load %arg7[%508, %c0_151, %c0_152] : memref<8x8x128xf32, #tpu.memory_space<vmem>>, vector<1x8x128xf32>
    %510 = vector.shape_cast %509 : vector<1x8x128xf32> to vector<8x128xf32>
    %511 = vector.shape_cast %507 : vector<8x128xf32> to vector<1x8x128xf32>
    tpu.vector_store %arg7[%508, %c0_151, %c0_152], %511 {strides = array<i32>} : memref<8x8x128xf32, #tpu.memory_space<vmem>>, vector<1x8x128xf32>,
    %c7_i32_153 = arith.constant 7 : i32
    %512 = arith.index_cast %c7_i32_153 : i32 to index
    %c0_154 = arith.constant 0 : index
    %c0_155 = arith.constant 0 : index
    %513 = vector.load %arg12[%512, %c0_154, %c0_155] : memref<8x8x512xf32, #tpu.memory_space<vmem>>, vector<1x8x512xf32>
    %514 = vector.shape_cast %513 : vector<1x8x512xf32> to vector<8x512xf32>
    %cst_156 = arith.constant dense<0.000000e+00> : vector<8x512xf32>
    %515 = tpu.matmul %472, %23, %cst_156 {dimension_numbers = #tpu.dot_dimension_numbers<[1], [0], [0], [1], [0, 0, 1, 1], [], []>} : vector<8x128xf32>, vector<128x512xf32>, vector<8x512xf32> -> vector<8x512xf32>
    %516 = arith.addf %514, %515 : vector<8x512xf32>
    %517 = vector.extract_strided_slice %516 {offsets = [0, 0], sizes = [8, 128], strides = [1, 1]} : vector<8x512xf32> to vector<8x128xf32>
    %518 = arith.negf %517 : vector<8x128xf32>
    %519 = math.exp %518 : vector<8x128xf32>
    %cst_157 = arith.constant 1.000000e+00 : f32
    %520 = vector.broadcast %cst_157 : f32 to vector<8x128xf32>
    %521 = arith.addf %520, %519 : vector<8x128xf32>
    %522 = arith.divf %520, %521 : vector<8x128xf32>
    %523 = vector.extract_strided_slice %516 {offsets = [0, 128], sizes = [8, 128], strides = [1, 1]} : vector<8x512xf32> to vector<8x128xf32>
    %524 = arith.negf %523 : vector<8x128xf32>
    %525 = math.exp %524 : vector<8x128xf32>
    %cst_158 = arith.constant 1.000000e+00 : f32
    %526 = vector.broadcast %cst_158 : f32 to vector<8x128xf32>
    %527 = arith.addf %526, %525 : vector<8x128xf32>
    %528 = arith.divf %526, %527 : vector<8x128xf32>
    %529 = vector.extract_strided_slice %516 {offsets = [0, 256], sizes = [8, 128], strides = [1, 1]} : vector<8x512xf32> to vector<8x128xf32>
    %530 = math.tanh %529 : vector<8x128xf32>
    %531 = vector.extract_strided_slice %516 {offsets = [0, 384], sizes = [8, 128], strides = [1, 1]} : vector<8x512xf32> to vector<8x128xf32>
    %532 = arith.negf %531 : vector<8x128xf32>
    %533 = math.exp %532 : vector<8x128xf32>
    %cst_159 = arith.constant 1.000000e+00 : f32
    %534 = vector.broadcast %cst_159 : f32 to vector<8x128xf32>
    %535 = arith.addf %534, %533 : vector<8x128xf32>
    %536 = arith.divf %534, %535 : vector<8x128xf32>
    %537 = arith.mulf %528, %470 : vector<8x128xf32>
    %538 = arith.mulf %522, %530 : vector<8x128xf32>
    %539 = arith.addf %537, %538 : vector<8x128xf32>
    %540 = math.tanh %539 : vector<8x128xf32>
    %541 = arith.mulf %536, %540 : vector<8x128xf32>
    %542 = arith.index_cast %c7_i32_153 : i32 to index
    %c0_160 = arith.constant 0 : index
    %c0_161 = arith.constant 0 : index
    %543 = vector.load %arg6[%542, %c0_160, %c0_161] : memref<8x8x128xf32, #tpu.memory_space<vmem>>, vector<1x8x128xf32>
    %544 = vector.shape_cast %543 : vector<1x8x128xf32> to vector<8x128xf32>
    %545 = vector.shape_cast %541 : vector<8x128xf32> to vector<1x8x128xf32>
    tpu.vector_store %arg6[%542, %c0_160, %c0_161], %545 {strides = array<i32>} : memref<8x8x128xf32, #tpu.memory_space<vmem>>, vector<1x8x128xf32>,
    %c7_i32_162 = arith.constant 7 : i32
    %546 = arith.subi %c7_i32_162, %c7_i32_153 : i32
    %547 = arith.index_cast %546 : i32 to index
    %c0_163 = arith.constant 0 : index
    %c0_164 = arith.constant 0 : index
    %548 = vector.load %arg13[%547, %c0_163, %c0_164] : memref<8x8x512xf32, #tpu.memory_space<vmem>>, vector<1x8x512xf32>
    %549 = vector.shape_cast %548 : vector<1x8x512xf32> to vector<8x512xf32>
    %cst_165 = arith.constant dense<0.000000e+00> : vector<8x512xf32>
    %550 = tpu.matmul %507, %24, %cst_165 {dimension_numbers = #tpu.dot_dimension_numbers<[1], [0], [0], [1], [0, 0, 1, 1], [], []>} : vector<8x128xf32>, vector<128x512xf32>, vector<8x512xf32> -> vector<8x512xf32>
    %551 = arith.addf %549, %550 : vector<8x512xf32>
    %552 = vector.extract_strided_slice %551 {offsets = [0, 0], sizes = [8, 128], strides = [1, 1]} : vector<8x512xf32> to vector<8x128xf32>
    %553 = arith.negf %552 : vector<8x128xf32>
    %554 = math.exp %553 : vector<8x128xf32>
    %cst_166 = arith.constant 1.000000e+00 : f32
    %555 = vector.broadcast %cst_166 : f32 to vector<8x128xf32>
    %556 = arith.addf %555, %554 : vector<8x128xf32>
    %557 = arith.divf %555, %556 : vector<8x128xf32>
    %558 = vector.extract_strided_slice %551 {offsets = [0, 128], sizes = [8, 128], strides = [1, 1]} : vector<8x512xf32> to vector<8x128xf32>
    %559 = arith.negf %558 : vector<8x128xf32>
    %560 = math.exp %559 : vector<8x128xf32>
    %cst_167 = arith.constant 1.000000e+00 : f32
    %561 = vector.broadcast %cst_167 : f32 to vector<8x128xf32>
    %562 = arith.addf %561, %560 : vector<8x128xf32>
    %563 = arith.divf %561, %562 : vector<8x128xf32>
    %564 = vector.extract_strided_slice %551 {offsets = [0, 256], sizes = [8, 128], strides = [1, 1]} : vector<8x512xf32> to vector<8x128xf32>
    %565 = math.tanh %564 : vector<8x128xf32>
    %566 = vector.extract_strided_slice %551 {offsets = [0, 384], sizes = [8, 128], strides = [1, 1]} : vector<8x512xf32> to vector<8x128xf32>
    %567 = arith.negf %566 : vector<8x128xf32>
    %568 = math.exp %567 : vector<8x128xf32>
    %cst_168 = arith.constant 1.000000e+00 : f32
    %569 = vector.broadcast %cst_168 : f32 to vector<8x128xf32>
    %570 = arith.addf %569, %568 : vector<8x128xf32>
    %571 = arith.divf %569, %570 : vector<8x128xf32>
    %572 = arith.mulf %563, %505 : vector<8x128xf32>
    %573 = arith.mulf %557, %565 : vector<8x128xf32>
    %574 = arith.addf %572, %573 : vector<8x128xf32>
    %575 = math.tanh %574 : vector<8x128xf32>
    %576 = arith.mulf %571, %575 : vector<8x128xf32>
    %577 = arith.index_cast %546 : i32 to index
    %c0_169 = arith.constant 0 : index
    %c0_170 = arith.constant 0 : index
    %578 = vector.load %arg7[%577, %c0_169, %c0_170] : memref<8x8x128xf32, #tpu.memory_space<vmem>>, vector<1x8x128xf32>
    %579 = vector.shape_cast %578 : vector<1x8x128xf32> to vector<8x128xf32>
    %580 = vector.shape_cast %576 : vector<8x128xf32> to vector<1x8x128xf32>
    tpu.vector_store %arg7[%577, %c0_169, %c0_170], %580 {strides = array<i32>} : memref<8x8x128xf32, #tpu.memory_space<vmem>>, vector<1x8x128xf32>,
    %c8_i32 = arith.constant 8 : i32
    %c0_171 = arith.constant 0 : index
    %c0_172 = arith.constant 0 : index
    %581 = vector.load %arg14[%c0_171, %c0_172] : memref<8x128xf32, #tpu.memory_space<vmem>>, vector<8x128xf32>
    tpu.vector_store %arg14[%c0_171, %c0_172], %541 {strides = array<i32>} : memref<8x128xf32, #tpu.memory_space<vmem>>, vector<8x128xf32>,
    %c0_173 = arith.constant 0 : index
    %c0_174 = arith.constant 0 : index
    %582 = vector.load %arg15[%c0_173, %c0_174] : memref<8x128xf32, #tpu.memory_space<vmem>>, vector<8x128xf32>
    tpu.vector_store %arg15[%c0_173, %c0_174], %539 {strides = array<i32>} : memref<8x128xf32, #tpu.memory_space<vmem>>, vector<8x128xf32>,
    %c0_175 = arith.constant 0 : index
    %c0_176 = arith.constant 0 : index
    %583 = vector.load %arg16[%c0_175, %c0_176] : memref<8x128xf32, #tpu.memory_space<vmem>>, vector<8x128xf32>
    tpu.vector_store %arg16[%c0_175, %c0_176], %576 {strides = array<i32>} : memref<8x128xf32, #tpu.memory_space<vmem>>, vector<8x128xf32>,
    %c0_177 = arith.constant 0 : index
    %c0_178 = arith.constant 0 : index
    %584 = vector.load %arg17[%c0_177, %c0_178] : memref<8x128xf32, #tpu.memory_space<vmem>>, vector<8x128xf32>
    tpu.vector_store %arg17[%c0_177, %c0_178], %574 {strides = array<i32>} : memref<8x128xf32, #tpu.memory_space<vmem>>, vector<8x128xf32>,
    return
  }
  func.func @transform_0(%arg0: i32) -> (i32, i32, i32) {
    %c0_i32 = arith.constant 0 : i32
    %c0_i32_0 = arith.constant 0 : i32
    %c0_i32_1 = arith.constant 0 : i32
    return %arg0, %c0_i32, %c0_i32_0 : i32, i32, i32
  }
  func.func @transform_1(%arg0: i32) -> (i32, i32, i32) {
    %c0_i32 = arith.constant 0 : i32
    %0 = arith.subi %c0_i32, %arg0 : i32
    %c0_i32_0 = arith.constant 0 : i32
    %c0_i32_1 = arith.constant 0 : i32
    %c0_i32_2 = arith.constant 0 : i32
    return %0, %c0_i32_0, %c0_i32_1 : i32, i32, i32
  }
  func.func @transform_2(%arg0: i32) -> (i32, i32, i32) {
    %c0_i32 = arith.constant 0 : i32
    %c0_i32_0 = arith.constant 0 : i32
    %c0_i32_1 = arith.constant 0 : i32
    %c0_i32_2 = arith.constant 0 : i32
    return %c0_i32, %c0_i32_0, %c0_i32_1 : i32, i32, i32
  }
  func.func @transform_5(%arg0: i32) -> (i32, i32, i32) {
    %c0_i32 = arith.constant 0 : i32
    %c0_i32_0 = arith.constant 0 : i32
    %c0_i32_1 = arith.constant 0 : i32
    return %arg0, %c0_i32, %c0_i32_0 : i32, i32, i32
  }
  func.func @transform_6(%arg0: i32) -> (i32, i32, i32) {
    %c0_i32 = arith.constant 0 : i32
    %0 = arith.subi %c0_i32, %arg0 : i32
    %c0_i32_0 = arith.constant 0 : i32
    %c0_i32_1 = arith.constant 0 : i32
    %c0_i32_2 = arith.constant 0 : i32
    return %0, %c0_i32_0, %c0_i32_1 : i32, i32, i32
  }
}

</mosaic_0001>

<llo_original>
// kernel: _lambda_.2
$region0: #{_lambda_.2}
  #allocation0 [shape = 'u32[]', space=smem, size = 0x4, offset = 0x4, fixed_abs, tag = 'smem constant byte address 0x4 - core index']
  #allocation1 [shape = 'u32[72,128]{1,0:T(1,128)}', space=vmem, size = 0x9000, scoped, tag = 'internal scratch']
  %s0 = inlined_call_operand.hbm [shape: f32[16,16], index: 0, kind: input, shape index: {}]
  %s1 = inlined_call_operand.vmem [shape: f32[2,16], index: 1, kind: output, shape index: {}]
  %s2 = sld [smem:[#allocation0]]
  $region22: #{_lambda_.2} parent=0
    _
  %s4 = ssub.s32 1, %s2
  %s5 = scalar_select 0, %s4, %s2
  $region1: #{_lambda_.2} parent=0
    #allocation2 [shape = 'u8[8192]{0}', space=vmem, size = 0x2000, scoped, tag = 'input window, operand 0, single buffered']
    #allocation3 [shape = 's32[1]{0}', space=sflag, size = 0x4, scoped, tag = 'scoped memory for _lambda_.2']
    %6 = vsyncpa [#allocation3], 0
    // Predicated region
    $region2: #{_lambda_.2} parent=1 // pred_check
      _
    $region3: #{_lambda_.2} parent=1 // pred_check_branch
      %8 = sbr.rel (0) target = $region5
    $region4: #{_lambda_.2} parent=1 // pred_region
      %10 = vsyncadd [#allocation3], 0
      %s11 = sshll.u32 %s0, 4
      %s12 = int_to_ptr.hbm [resolvable:$true] %s11
      %s13 = sshll.u32 [#allocation2], 4
      %s14 = int_to_ptr.vmem [resolvable:$true] %s13
      %19 = dma.hbm_to_vmem [thread:$0]  %s12, 256, %s14, [#allocation3], 128, 128, 8
    $region5: #{_lambda_.2} parent=1 // pred_fallthru
      _
    // Predicated region
    $region6: #{_lambda_.2} parent=1 // pred_check
      _
    $region7: #{_lambda_.2} parent=1 // pred_check_branch
      %21 = sbr.rel (0) target = $region9
    $region8: #{_lambda_.2} parent=1 // pred_region
      %23 = dma.done [#allocation3], 256
    $region9: #{_lambda_.2} parent=1 // pred_fallthru
      _
    %p24 = scmp.eq.s32.totalorder 0, 0
    // Predicated region
    $region10: #{_lambda_.2} parent=1 // pred_check
      %p25 = pneg %p24
    $region11: #{_lambda_.2} parent=1 // pred_check_branch
      %27 = sbr.rel (%p25) target = $region13
    $region12: #{_lambda_.2} parent=1 // pred_region
      %vm28 = vcmask 123904
      %29 = vst.msk [vmem:[%s1] sm:$0x3] %vm28, 0.0
    $region13: #{_lambda_.2} parent=1 // pred_fallthru
      _
    %v30 = vld [vmem:[#allocation2] sm:$0xff]
    %v31 = vld [vmem:[#allocation2 + $0x8] sm:$0xff]
    %v32 = vld [vmem:[%s1] sm:$0x3]
    %vm33 = vcmask 130048
    %v34 = vsel %vm33, %v30, 0.0
    %v35 = vsel %vm33, %v31, 0.0
    %v36 = vadd.f32 %v34, %v35
    %v37 = vrot.slane %v36, 4
    %v38 = vadd.f32 %v36, %v37
    %v39 = vrot.slane %v38, 2
    %v40 = vadd.f32 %v38, %v39
    %v41 = vrot.slane %v40, 1
    %v42 = vadd.f32 %v40, %v41
    %v43 = vmul.f32 %v30, %v30
    %v44 = vmul.f32 %v31, %v31
    %v45 = vsel %vm33, %v43, 0.0
    %v46 = vsel %vm33, %v44, 0.0
    %v47 = vadd.f32 %v45, %v46
    %v48 = vrot.slane %v47, 4
    %v49 = vadd.f32 %v47, %v48
    %v50 = vrot.slane %v49, 2
    %v51 = vadd.f32 %v49, %v50
    %v52 = vrot.slane %v51, 1
    %v53 = vadd.f32 %v51, %v52
    %vm54 = vcmask 1040384
    %v55 = vsel %vm54, %v42, %v53
    %v56 = vadd.f32 %v32, %v55
    %vm57 = vcmask 123904
    %58 = vst.msk [vmem:[%s1] sm:$0x3] %vm57, %v56
    // Predicated region
    $region14: #{_lambda_.2} parent=1 // pred_check
      _
    $region15: #{_lambda_.2} parent=1 // pred_check_branch
      %60 = sbr.rel (0) target = $region17
    $region16: #{_lambda_.2} parent=1 // pred_region
      _
    $region17: #{_lambda_.2} parent=1 // pred_fallthru
      _
    // Predicated region
    $region18: #{_lambda_.2} parent=1 // pred_check
      _
    $region19: #{_lambda_.2} parent=1 // pred_check_branch
      %62 = sbr.rel (0) target = $region21
    $region20: #{_lambda_.2} parent=1 // pred_region
      _
    $region21: #{_lambda_.2} parent=1 // pred_fallthru
      _
    %63 = vsyncpa [#allocation3], 1

// kernel: _lambda_.3
$region0: #{_lambda_.3}
  #allocation0 [shape = 'u32[]', space=smem, size = 0x4, offset = 0x4, fixed_abs, tag = 'smem constant byte address 0x4 - core index']
  #allocation1 [shape = 'u32[72,128]{1,0:T(1,128)}', space=vmem, size = 0x9000, scoped, tag = 'internal scratch']
  #allocation2 [shape = 'f32[128,512]{1,0:T(8,128)}', space=vmem, size = 0x40000, scoped, tag = 'scratch operand']
  #allocation3 [shape = 'f32[128,512]{1,0:T(8,128)}', space=vmem, size = 0x40000, scoped, tag = 'scratch operand']
  #allocation4 [shape = 'f32[128,512]{1,0:T(8,128)}', space=vmem, size = 0x40000, scoped, tag = 'scratch operand']
  #allocation5 [shape = 'f32[128,512]{1,0:T(8,128)}', space=vmem, size = 0x40000, scoped, tag = 'scratch operand']
  #allocation6 [shape = 'f32[8,8,512]{2,1,0:T(8,128)}', space=vmem, size = 0x20000, scoped, tag = 'scratch operand']
  #allocation7 [shape = 'f32[8,8,512]{2,1,0:T(8,128)}', space=vmem, size = 0x20000, scoped, tag = 'scratch operand']
  #allocation8 [shape = 'f32[8,128]{1,0:T(8,128)}', space=vmem, size = 0x1000, scoped, tag = 'scratch operand']
  #allocation9 [shape = 'f32[8,128]{1,0:T(8,128)}', space=vmem, size = 0x1000, scoped, tag = 'scratch operand']
  #allocation10 [shape = 'f32[8,128]{1,0:T(8,128)}', space=vmem, size = 0x1000, scoped, tag = 'scratch operand']
  #allocation11 [shape = 'f32[8,128]{1,0:T(8,128)}', space=vmem, size = 0x1000, scoped, tag = 'scratch operand']
  #allocation12 [shape = 's32[4]{0}', space=sflag, size = 0x10, scoped, tag = 'scratch operand']
  #allocation13 [shape = 's32[]', space=sflag, size = 0x4, offset = 0, fixed_abs, tag = 'sflag constant byte address 0x0 - dummy sync flag']
  #allocation14 [shape = 's32[]', space=sflag, size = 0x4, offset = 0, fixed_abs, tag = 'sflag constant byte address 0x0 - dummy sync flag']
  #allocation15 [shape = 's32[]', space=sflag, size = 0x4, offset = 0, fixed_abs, tag = 'sflag constant byte address 0x0 - dummy sync flag']
  #allocation16 [shape = 's32[]', space=sflag, size = 0x4, offset = 0, fixed_abs, tag = 'sflag constant byte address 0x0 - dummy sync flag']
  %s0 = inlined_call_operand.vmem [shape: f32[8,8,128], index: 0, kind: input, shape index: {}, may-alias: {0,1}]
  %s1 = inlined_call_operand.vmem [shape: f32[8,8,128], index: 1, kind: input, shape index: {}, may-alias: {0,1}]
  %s2 = inlined_call_operand.vmem [shape: f32[2,1,512], index: 2, kind: input, shape index: {}]
  %s3 = inlined_call_operand.vmem [shape: f32[2,128,512], index: 3, kind: input, shape index: {}]
  %s4 = inlined_call_operand.vmem [shape: f32[2,128,512], index: 4, kind: input, shape index: {}]
  %s5 = inlined_call_operand.vmem [shape: f32[8,8,128], index: 5, kind: output, shape index: {0}]
  %s6 = inlined_call_operand.vmem [shape: f32[8,8,128], index: 6, kind: output, shape index: {1}]
  %7 = xla_tuple %s5, %s6
  %s8 = sld [smem:[#allocation0]]
  $region110: #{_lambda_.3} parent=0
    _
  %s10 = ssub.s32 1, %s8
  %s11 = scalar_select 0, %s10, %s8
  // Predicated region
  $region2: #{_lambda_.3} parent=0 // pred_check
    _
  $region3: #{_lambda_.3} parent=0 // pred_check_branch
    %13 = sbr.rel (0) target = $region5
  $region4: #{_lambda_.3} parent=0 // pred_region
    _
  $region5: #{_lambda_.3} parent=0 // pred_fallthru
    _
  // Predicated region
  $region6: #{_lambda_.3} parent=0 // pred_check
    _
  $region7: #{_lambda_.3} parent=0 // pred_check_branch
    %15 = sbr.rel (0) target = $region9
  $region8: #{_lambda_.3} parent=0 // pred_region
    %s16 = ssub.s32 0, 0
    %s17 = smul.u32 8, %s16
    %p18 = scmp.lt.s32.totalorder %s17, 7
    %s19 = scalar_select %p18, %s17, 7
    %s20 = smul.addr %s19, 8
    %s21 = scalar_lea.vmem %s1, %s20
    %s22 = ssub.s32 0, 0
    %s23 = smul.u32 8, %s22
  $region9: #{_lambda_.3} parent=0 // pred_fallthru
    _
  // Predicated region
  $region10: #{_lambda_.3} parent=0 // pred_check
    _
  $region11: #{_lambda_.3} parent=0 // pred_check_branch
    %25 = sbr.rel (0) target = $region13
  $region12: #{_lambda_.3} parent=0 // pred_region
    _
  $region13: #{_lambda_.3} parent=0 // pred_fallthru
    _
  %s26 = ssub.s32 0, 0
  %s27 = smul.u32 8, %s26
  %p28 = scmp.lt.s32.totalorder %s27, 7
  %s29 = scalar_select %p28, %s27, 7
  %s30 = smul.addr %s29, 8
  %s31 = scalar_lea.vmem %s1, %s30
  %s32 = ssub.s32 0, 0
  %s33 = smul.u32 8, %s32
  %p34 = scmp.lt.s32.totalorder %s33, 7
  %s35 = scalar_select %p34, %s33, 7
  %s36 = smul.addr %s35, 8
  %s37 = scalar_lea.vmem %s6, %s36
  %s38 = ssub.s32 0, 0
  %s39 = smul.u32 8, %s38
  %p40 = scmp.lt.s32.totalorder %s39, 7
  %s41 = scalar_select %p40, %s39, 7
  %s42 = smul.addr %s41, 8
  %s43 = scalar_lea.vmem %s1, %s42
  %s44 = ssub.s32 0, 0
  %s45 = smul.u32 8, %s44
  %s46 = ssub.s32 0, 0
  %s47 = smul.u32 8, %s46
  %p48 = scmp.lt.s32.totalorder %s47, 7
  %s49 = scalar_select %p48, %s47, 7
  %s50 = smul.addr %s49, 8
  %s51 = scalar_lea.vmem %s6, %s50
  %s52 = ssub.s32 0, 0
  %s53 = smul.u32 8, %s52
  %p54 = scmp.eq.s32.totalorder 0, 0
  // Predicated region
  $region14: #{_lambda_.3} parent=0 // pred_check
    %p55 = pneg %p54
  $region15: #{_lambda_.3} parent=0 // pred_check_branch
    %57 = sbr.rel (%p55) target = $region17
  $region16: #{_lambda_.3} parent=0 // pred_region
    // Predicated region
    $region18: #{_lambda_.3} parent=16 // pred_check
      _
    $region19: #{_lambda_.3} parent=16 // pred_check_branch
      %59 = sbr.rel (0) target = $region21
    $region20: #{_lambda_.3} parent=16 // pred_region
      loop: start=0, step=1, limit=1
      $region22: #{_lambda_.3} parent=20 // loop_pre_header
        _
      $region23: #{_lambda_.3} parent=20 // loop_header
        %s61 = sphi 0, %s65
        %p62 = scmp.ge.s32.totalorder %s61, 1
        %s66 = sphi %s3, %s3
        %s67 = sphi [#allocation2], [#allocation2]
      $region24: #{_lambda_.3} parent=20 // loop_header_branch
        %64 = sbr.rel (%p62) target = $region28
      $region25: #{_lambda_.3} parent=20 // loop_body
        %v68 = vld [vmem:[%s66] sm:$0xff]
        %69 = vst [vmem:[%s67] sm:$0xff] %v68
        %v70 = vld [vmem:[%s66 + $0x8] sm:$0xff]
        %71 = vst [vmem:[%s67 + $0x8] sm:$0xff] %v70
        %v72 = vld [vmem:[%s66 + $0x10] sm:$0xff]
        %73 = vst [vmem:[%s67 + $0x10] sm:$0xff] %v72
        %v74 = vld [vmem:[%s66 + $0x18] sm:$0xff]
        %75 = vst [vmem:[%s67 + $0x18] sm:$0xff] %v74
        %v76 = vld [vmem:[%s66 + $0x20] sm:$0xff]
        %77 = vst [vmem:[%s67 + $0x20] sm:$0xff] %v76
        %v78 = vld [vmem:[%s66 + $0x28] sm:$0xff]
        %79 = vst [vmem:[%s67 + $0x28] sm:$0xff] %v78
        %v80 = vld [vmem:[%s66 + $0x30] sm:$0xff]
        %81 = vst [vmem:[%s67 + $0x30] sm:$0xff] %v80
        %v82 = vld [vmem:[%s66 + $0x38] sm:$0xff]
        %83 = vst [vmem:[%s67 + $0x38] sm:$0xff] %v82
        %v84 = vld [vmem:[%s66 + $0x40] sm:$0xff]
        %85 = vst [vmem:[%s67 + $0x40] sm:$0xff] %v84
        %v86 = vld [vmem:[%s66 + $0x48] sm:$0xff]
        %87 = vst [vmem:[%s67 + $0x48] sm:$0xff] %v86
        %v88 = vld [vmem:[%s66 + $0x50] sm:$0xff]
        %89 = vst [vmem:[%s67 + $0x50] sm:$0xff] %v88
        %v90 = vld [vmem:[%s66 + $0x58] sm:$0xff]
        %91 = vst [vmem:[%s67 + $0x58] sm:$0xff] %v90
        %v92 = vld [vmem:[%s66 + $0x60] sm:$0xff]
        %93 = vst [vmem:[%s67 + $0x60] sm:$0xff] %v92
        %v94 = vld [vmem:[%s66 + $0x68] sm:$0xff]
        %95 = vst [vmem:[%s67 + $0x68] sm:$0xff] %v94
        %v96 = vld [vmem:[%s66 + $0x70] sm:$0xff]
        %97 = vst [vmem:[%s67 + $0x70] sm:$0xff] %v96
        %v98 = vld [vmem:[%s66 + $0x78] sm:$0xff]
        %99 = vst [vmem:[%s67 + $0x78] sm:$0xff] %v98
        %v100 = vld [vmem:[%s66 + $0x80] sm:$0xff]
        %101 = vst [vmem:[%s67 + $0x80] sm:$0xff] %v100
        %v102 = vld [vmem:[%s66 + $0x88] sm:$0xff]
        %103 = vst [vmem:[%s67 + $0x88] sm:$0xff] %v102
        %v104 = vld [vmem:[%s66 + $0x90] sm:$0xff]
        %105 = vst [vmem:[%s67 + $0x90] sm:$0xff] %v104
        %v106 = vld [vmem:[%s66 + $0x98] sm:$0xff]
        %107 = vst [vmem:[%s67 + $0x98] sm:$0xff] %v106
        %v108 = vld [vmem:[%s66 + $0xa0] sm:$0xff]
        %109 = vst [vmem:[%s67 + $0xa0] sm:$0xff] %v108
        %v110 = vld [vmem:[%s66 + $0xa8] sm:$0xff]
        %111 = vst [vmem:[%s67 + $0xa8] sm:$0xff] %v110
        %v112 = vld [vmem:[%s66 + $0xb0] sm:$0xff]
        %113 = vst [vmem:[%s67 + $0xb0] sm:$0xff] %v112
        %v114 = vld [vmem:[%s66 + $0xb8] sm:$0xff]
        %115 = vst [vmem:[%s67 + $0xb8] sm:$0xff] %v114
        %v116 = vld [vmem:[%s66 + $0xc0] sm:$0xff]
        %117 = vst [vmem:[%s67 + $0xc0] sm:$0xff] %v116
        %v118 = vld [vmem:[%s66 + $0xc8] sm:$0xff]
        %119 = vst [vmem:[%s67 + $0xc8] sm:$0xff] %v118
        %v120 = vld [vmem:[%s66 + $0xd0] sm:$0xff]
        %121 = vst [vmem:[%s67 + $0xd0] sm:$0xff] %v120
        %v122 = vld [vmem:[%s66 + $0xd8] sm:$0xff]
        %123 = vst [vmem:[%s67 + $0xd8] sm:$0xff] %v122
        %v124 = vld [vmem:[%s66 + $0xe0] sm:$0xff]
        %125 = vst [vmem:[%s67 + $0xe0] sm:$0xff] %v124
        %v126 = vld [vmem:[%s66 + $0xe8] sm:$0xff]
        %127 = vst [vmem:[%s67 + $0xe8] sm:$0xff] %v126
        %v128 = vld [vmem:[%s66 + $0xf0] sm:$0xff]
        %129 = vst [vmem:[%s67 + $0xf0] sm:$0xff] %v128
        %v130 = vld [vmem:[%s66 + $0xf8] sm:$0xff]
        %131 = vst [vmem:[%s67 + $0xf8] sm:$0xff] %v130
        %v132 = vld [vmem:[%s66 + $0x100] sm:$0xff]
        %133 = vst [vmem:[%s67 + $0x100] sm:$0xff] %v132
        %v134 = vld [vmem:[%s66 + $0x108] sm:$0xff]
        %135 = vst [vmem:[%s67 + $0x108] sm:$0xff] %v134
        %v136 = vld [vmem:[%s66 + $0x110] sm:$0xff]
        %137 = vst [vmem:[%s67 + $0x110] sm:$0xff] %v136
        %v138 = vld [vmem:[%s66 + $0x118] sm:$0xff]
        %139 = vst [vmem:[%s67 + $0x118] sm:$0xff] %v138
        %v140 = vld [vmem:[%s66 + $0x120] sm:$0xff]
        %141 = vst [vmem:[%s67 + $0x120] sm:$0xff] %v140
        %v142 = vld [vmem:[%s66 + $0x128] sm:$0xff]
        %143 = vst [vmem:[%s67 + $0x128] sm:$0xff] %v142
        %v144 = vld [vmem:[%s66 + $0x130] sm:$0xff]
        %145 = vst [vmem:[%s67 + $0x130] sm:$0xff] %v144
        %v146 = vld [vmem:[%s66 + $0x138] sm:$0xff]
        %147 = vst [vmem:[%s67 + $0x138] sm:$0xff] %v146
        %v148 = vld [vmem:[%s66 + $0x140] sm:$0xff]
        %149 = vst [vmem:[%s67 + $0x140] sm:$0xff] %v148
        %v150 = vld [vmem:[%s66 + $0x148] sm:$0xff]
        %151 = vst [vmem:[%s67 + $0x148] sm:$0xff] %v150
        %v152 = vld [vmem:[%s66 + $0x150] sm:$0xff]
        %153 = vst [vmem:[%s67 + $0x150] sm:$0xff] %v152
        %v154 = vld [vmem:[%s66 + $0x158] sm:$0xff]
        %155 = vst [vmem:[%s67 + $0x158] sm:$0xff] %v154
        %v156 = vld [vmem:[%s66 + $0x160] sm:$0xff]
        %157 = vst [vmem:[%s67 + $0x160] sm:$0xff] %v156
        %v158 = vld [vmem:[%s66 + $0x168] sm:$0xff]
        %159 = vst [vmem:[%s67 + $0x168] sm:$0xff] %v158
        %v160 = vld [vmem:[%s66 + $0x170] sm:$0xff]
        %161 = vst [vmem:[%s67 + $0x170] sm:$0xff] %v160
        %v162 = vld [vmem:[%s66 + $0x178] sm:$0xff]
        %163 = vst [vmem:[%s67 + $0x178] sm:$0xff] %v162
        %v164 = vld [vmem:[%s66 + $0x180] sm:$0xff]
        %165 = vst [vmem:[%s67 + $0x180] sm:$0xff] %v164
        %v166 = vld [vmem:[%s66 + $0x188] sm:$0xff]
        %167 = vst [vmem:[%s67 + $0x188] sm:$0xff] %v166
        %v168 = vld [vmem:[%s66 + $0x190] sm:$0xff]
        %169 = vst [vmem:[%s67 + $0x190] sm:$0xff] %v168
        %v170 = vld [vmem:[%s66 + $0x198] sm:$0xff]
        %171 = vst [vmem:[%s67 + $0x198] sm:$0xff] %v170
        %v172 = vld [vmem:[%s66 + $0x1a0] sm:$0xff]
        %173 = vst [vmem:[%s67 + $0x1a0] sm:$0xff] %v172
        %v174 = vld [vmem:[%s66 + $0x1a8] sm:$0xff]
        %175 = vst [vmem:[%s67 + $0x1a8] sm:$0xff] %v174
        %v176 = vld [vmem:[%s66 + $0x1b0] sm:$0xff]
        %177 = vst [vmem:[%s67 + $0x1b0] sm:$0xff] %v176
        %v178 = vld [vmem:[%s66 + $0x1b8] sm:$0xff]
        %179 = vst [vmem:[%s67 + $0x1b8] sm:$0xff] %v178
        %v180 = vld [vmem:[%s66 + $0x1c0] sm:$0xff]
        %181 = vst [vmem:[%s67 + $0x1c0] sm:$0xff] %v180
        %v182 = vld [vmem:[%s66 + $0x1c8] sm:$0xff]
        %183 = vst [vmem:[%s67 + $0x1c8] sm:$0xff] %v182
        %v184 = vld [vmem:[%s66 + $0x1d0] sm:$0xff]
        %185 = vst [vmem:[%s67 + $0x1d0] sm:$0xff] %v184
        %v186 = vld [vmem:[%s66 + $0x1d8] sm:$0xff]
        %187 = vst [vmem:[%s67 + $0x1d8] sm:$0xff] %v186
        %v188 = vld [vmem:[%s66 + $0x1e0] sm:$0xff]
        %189 = vst [vmem:[%s67 + $0x1e0] sm:$0xff] %v188
        %v190 = vld [vmem:[%s66 + $0x1e8] sm:$0xff]
        %191 = vst [vmem:[%s67 + $0x1e8] sm:$0xff] %v190
        %v192 = vld [vmem:[%s66 + $0x1f0] sm:$0xff]
        %193 = vst [vmem:[%s67 + $0x1f0] sm:$0xff] %v192
        %v194 = vld [vmem:[%s66 + $0x1f8] sm:$0xff]
        %195 = vst [vmem:[%s67 + $0x1f8] sm:$0xff] %v194
      $region26: #{_lambda_.3} parent=20 // loop_footer
        %s65 = sadd.s32 1, %s61
      $region27: #{_lambda_.3} parent=20 // loop_footer_branch
        %60 = sbr.rel target = $region23
      $region28: #{_lambda_.3} parent=20 // loop_exit
        _
    $region21: #{_lambda_.3} parent=16 // pred_fallthru
      _
    // Predicated region
    $region29: #{_lambda_.3} parent=16 // pred_check
      _
    $region30: #{_lambda_.3} parent=16 // pred_check_branch
      %197 = sbr.rel target = $region32
    $region31: #{_lambda_.3} parent=16 // pred_region
      _
    $region32: #{_lambda_.3} parent=16 // pred_fallthru
      _
    // Predicated region
    $region33: #{_lambda_.3} parent=16 // pred_check
      _
    $region34: #{_lambda_.3} parent=16 // pred_check_branch
      %200 = sbr.rel (0) target = $region36
    $region35: #{_lambda_.3} parent=16 // pred_region
      %201 = vsyncadd [#allocation12], 8192
    $region36: #{_lambda_.3} parent=16 // pred_fallthru
      _
    %s202 = scalar_lea.sflag [#allocation12], 1
    // Predicated region
    $region37: #{_lambda_.3} parent=16 // pred_check
      _
    $region38: #{_lambda_.3} parent=16 // pred_check_branch
      %204 = sbr.rel (0) target = $region40
    $region39: #{_lambda_.3} parent=16 // pred_region
      loop: start=0, step=1, limit=1
      $region41: #{_lambda_.3} parent=39 // loop_pre_header
        _
      $region42: #{_lambda_.3} parent=39 // loop_header
        %s206 = sphi 0, %s210
        %p207 = scmp.ge.s32.totalorder %s206, 1
        %s211 = sphi %s4, %s4
        %s212 = sphi [#allocation3], [#allocation3]
      $region43: #{_lambda_.3} parent=39 // loop_header_branch
        %209 = sbr.rel (%p207) target = $region47
      $region44: #{_lambda_.3} parent=39 // loop_body
        %v213 = vld [vmem:[%s211] sm:$0xff]
        %214 = vst [vmem:[%s212] sm:$0xff] %v213
        %v215 = vld [vmem:[%s211 + $0x8] sm:$0xff]
        %216 = vst [vmem:[%s212 + $0x8] sm:$0xff] %v215
        %v217 = vld [vmem:[%s211 + $0x10] sm:$0xff]
        %218 = vst [vmem:[%s212 + $0x10] sm:$0xff] %v217
        %v219 = vld [vmem:[%s211 + $0x18] sm:$0xff]
        %220 = vst [vmem:[%s212 + $0x18] sm:$0xff] %v219
        %v221 = vld [vmem:[%s211 + $0x20] sm:$0xff]
        %222 = vst [vmem:[%s212 + $0x20] sm:$0xff] %v221
        %v223 = vld [vmem:[%s211 + $0x28] sm:$0xff]
        %224 = vst [vmem:[%s212 + $0x28] sm:$0xff] %v223
        %v225 = vld [vmem:[%s211 + $0x30] sm:$0xff]
        %226 = vst [vmem:[%s212 + $0x30] sm:$0xff] %v225
        %v227 = vld [vmem:[%s211 + $0x38] sm:$0xff]
        %228 = vst [vmem:[%s212 + $0x38] sm:$0xff] %v227
        %v229 = vld [vmem:[%s211 + $0x40] sm:$0xff]
        %230 = vst [vmem:[%s212 + $0x40] sm:$0xff] %v229
        %v231 = vld [vmem:[%s211 + $0x48] sm:$0xff]
        %232 = vst [vmem:[%s212 + $0x48] sm:$0xff] %v231
        %v233 = vld [vmem:[%s211 + $0x50] sm:$0xff]
        %234 = vst [vmem:[%s212 + $0x50] sm:$0xff] %v233
        %v235 = vld [vmem:[%s211 + $0x58] sm:$0xff]
        %236 = vst [vmem:[%s212 + $0x58] sm:$0xff] %v235
        %v237 = vld [vmem:[%s211 + $0x60] sm:$0xff]
        %238 = vst [vmem:[%s212 + $0x60] sm:$0xff] %v237
        %v239 = vld [vmem:[%s211 + $0x68] sm:$0xff]
        %240 = vst [vmem:[%s212 + $0x68] sm:$0xff] %v239
        %v241 = vld [vmem:[%s211 + $0x70] sm:$0xff]
        %242 = vst [vmem:[%s212 + $0x70] sm:$0xff] %v241
        %v243 = vld [vmem:[%s211 + $0x78] sm:$0xff]
        %244 = vst [vmem:[%s212 + $0x78] sm:$0xff] %v243
        %v245 = vld [vmem:[%s211 + $0x80] sm:$0xff]
        %246 = vst [vmem:[%s212 + $0x80] sm:$0xff] %v245
        %v247 = vld [vmem:[%s211 + $0x88] sm:$0xff]
        %248 = vst [vmem:[%s212 + $0x88] sm:$0xff] %v247
        %v249 = vld [vmem:[%s211 + $0x90] sm:$0xff]
        %250 = vst [vmem:[%s212 + $0x90] sm:$0xff] %v249
        %v251 = vld [vmem:[%s211 + $0x98] sm:$0xff]
        %252 = vst [vmem:[%s212 + $0x98] sm:$0xff] %v251
        %v253 = vld [vmem:[%s211 + $0xa0] sm:$0xff]
        %254 = vst [vmem:[%s212 + $0xa0] sm:$0xff] %v253
        %v255 = vld [vmem:[%s211 + $0xa8] sm:$0xff]
        %256 = vst [vmem:[%s212 + $0xa8] sm:$0xff] %v255
        %v257 = vld [vmem:[%s211 + $0xb0] sm:$0xff]
        %258 = vst [vmem:[%s212 + $0xb0] sm:$0xff] %v257
        %v259 = vld [vmem:[%s211 + $0xb8] sm:$0xff]
        %260 = vst [vmem:[%s212 + $0xb8] sm:$0xff] %v259
        %v261 = vld [vmem:[%s211 + $0xc0] sm:$0xff]
        %262 = vst [vmem:[%s212 + $0xc0] sm:$0xff] %v261
        %v263 = vld [vmem:[%s211 + $0xc8] sm:$0xff]
        %264 = vst [vmem:[%s212 + $0xc8] sm:$0xff] %v263
        %v265 = vld [vmem:[%s211 + $0xd0] sm:$0xff]
        %266 = vst [vmem:[%s212 + $0xd0] sm:$0xff] %v265
        %v267 = vld [vmem:[%s211 + $0xd8] sm:$0xff]
        %268 = vst [vmem:[%s212 + $0xd8] sm:$0xff] %v267
        %v269 = vld [vmem:[%s211 + $0xe0] sm:$0xff]
        %270 = vst [vmem:[%s212 + $0xe0] sm:$0xff] %v269
        %v271 = vld [vmem:[%s211 + $0xe8] sm:$0xff]
        %272 = vst [vmem:[%s212 + $0xe8] sm:$0xff] %v271
        %v273 = vld [vmem:[%s211 + $0xf0] sm:$0xff]
        %274 = vst [vmem:[%s212 + $0xf0] sm:$0xff] %v273
        %v275 = vld [vmem:[%s211 + $0xf8] sm:$0xff]
        %276 = vst [vmem:[%s212 + $0xf8] sm:$0xff] %v275
        %v277 = vld [vmem:[%s211 + $0x100] sm:$0xff]
        %278 = vst [vmem:[%s212 + $0x100] sm:$0xff] %v277
        %v279 = vld [vmem:[%s211 + $0x108] sm:$0xff]
        %280 = vst [vmem:[%s212 + $0x108] sm:$0xff] %v279
        %v281 = vld [vmem:[%s211 + $0x110] sm:$0xff]
        %282 = vst [vmem:[%s212 + $0x110] sm:$0xff] %v281
        %v283 = vld [vmem:[%s211 + $0x118] sm:$0xff]
        %284 = vst [vmem:[%s212 + $0x118] sm:$0xff] %v283
        %v285 = vld [vmem:[%s211 + $0x120] sm:$0xff]
        %286 = vst [vmem:[%s212 + $0x120] sm:$0xff] %v285
        %v287 = vld [vmem:[%s211 + $0x128] sm:$0xff]
        %288 = vst [vmem:[%s212 + $0x128] sm:$0xff] %v287
        %v289 = vld [vmem:[%s211 + $0x130] sm:$0xff]
        %290 = vst [vmem:[%s212 + $0x130] sm:$0xff] %v289
        %v291 = vld [vmem:[%s211 + $0x138] sm:$0xff]
        %292 = vst [vmem:[%s212 + $0x138] sm:$0xff] %v291
        %v293 = vld [vmem:[%s211 + $0x140] sm:$0xff]
        %294 = vst [vmem:[%s212 + $0x140] sm:$0xff] %v293
        %v295 = vld [vmem:[%s211 + $0x148] sm:$0xff]
        %296 = vst [vmem:[%s212 + $0x148] sm:$0xff] %v295
        %v297 = vld [vmem:[%s211 + $0x150] sm:$0xff]
        %298 = vst [vmem:[%s212 + $0x150] sm:$0xff] %v297
        %v299 = vld [vmem:[%s211 + $0x158] sm:$0xff]
        %300 = vst [vmem:[%s212 + $0x158] sm:$0xff] %v299
        %v301 = vld [vmem:[%s211 + $0x160] sm:$0xff]
        %302 = vst [vmem:[%s212 + $0x160] sm:$0xff] %v301
        %v303 = vld [vmem:[%s211 + $0x168] sm:$0xff]
        %304 = vst [vmem:[%s212 + $0x168] sm:$0xff] %v303
        %v305 = vld [vmem:[%s211 + $0x170] sm:$0xff]
        %306 = vst [vmem:[%s212 + $0x170] sm:$0xff] %v305
        %v307 = vld [vmem:[%s211 + $0x178] sm:$0xff]
        %308 = vst [vmem:[%s212 + $0x178] sm:$0xff] %v307
        %v309 = vld [vmem:[%s211 + $0x180] sm:$0xff]
        %310 = vst [vmem:[%s212 + $0x180] sm:$0xff] %v309
        %v311 = vld [vmem:[%s211 + $0x188] sm:$0xff]
        %312 = vst [vmem:[%s212 + $0x188] sm:$0xff] %v311
        %v313 = vld [vmem:[%s211 + $0x190] sm:$0xff]
        %314 = vst [vmem:[%s212 + $0x190] sm:$0xff] %v313
        %v315 = vld [vmem:[%s211 + $0x198] sm:$0xff]
        %316 = vst [vmem:[%s212 + $0x198] sm:$0xff] %v315
        %v317 = vld [vmem:[%s211 + $0x1a0] sm:$0xff]
        %318 = vst [vmem:[%s212 + $0x1a0] sm:$0xff] %v317
        %v319 = vld [vmem:[%s211 + $0x1a8] sm:$0xff]
        %320 = vst [vmem:[%s212 + $0x1a8] sm:$0xff] %v319
        %v321 = vld [vmem:[%s211 + $0x1b0] sm:$0xff]
        %322 = vst [vmem:[%s212 + $0x1b0] sm:$0xff] %v321
        %v323 = vld [vmem:[%s211 + $0x1b8] sm:$0xff]
        %324 = vst [vmem:[%s212 + $0x1b8] sm:$0xff] %v323
        %v325 = vld [vmem:[%s211 + $0x1c0] sm:$0xff]
        %326 = vst [vmem:[%s212 + $0x1c0] sm:$0xff] %v325
        %v327 = vld [vmem:[%s211 + $0x1c8] sm:$0xff]
        %328 = vst [vmem:[%s212 + $0x1c8] sm:$0xff] %v327
        %v329 = vld [vmem:[%s211 + $0x1d0] sm:$0xff]
        %330 = vst [vmem:[%s212 + $0x1d0] sm:$0xff] %v329
        %v331 = vld [vmem:[%s211 + $0x1d8] sm:$0xff]
        %332 = vst [vmem:[%s212 + $0x1d8] sm:$0xff] %v331
        %v333 = vld [vmem:[%s211 + $0x1e0] sm:$0xff]
        %334 = vst [vmem:[%s212 + $0x1e0] sm:$0xff] %v333
        %v335 = vld [vmem:[%s211 + $0x1e8] sm:$0xff]
        %336 = vst [vmem:[%s212 + $0x1e8] sm:$0xff] %v335
        %v337 = vld [vmem:[%s211 + $0x1f0] sm:$0xff]
        %338 = vst [vmem:[%s212 + $0x1f0] sm:$0xff] %v337
        %v339 = vld [vmem:[%s211 + $0x1f8] sm:$0xff]
        %340 = vst [vmem:[%s212 + $0x1f8] sm:$0xff] %v339
      $region45: #{_lambda_.3} parent=39 // loop_footer
        %s210 = sadd.s32 1, %s206
      $region46: #{_lambda_.3} parent=39 // loop_footer_branch
        %205 = sbr.rel target = $region42
      $region47: #{_lambda_.3} parent=39 // loop_exit
        _
    $region40: #{_lambda_.3} parent=16 // pred_fallthru
      _
    // Predicated region
    $region48: #{_lambda_.3} parent=16 // pred_check
      _
    $region49: #{_lambda_.3} parent=16 // pred_check_branch
      %342 = sbr.rel target = $region51
    $region50: #{_lambda_.3} parent=16 // pred_region
      _
    $region51: #{_lambda_.3} parent=16 // pred_fallthru
      _
    // Predicated region
    $region52: #{_lambda_.3} parent=16 // pred_check
      _
    $region53: #{_lambda_.3} parent=16 // pred_check_branch
      %345 = sbr.rel (0) target = $region55
    $region54: #{_lambda_.3} parent=16 // pred_region
      %346 = vsyncadd %s202, 8192
    $region55: #{_lambda_.3} parent=16 // pred_fallthru
      _
    %s347 = scalar_lea.vmem %s3, 512
    %s348 = scalar_lea.sflag [#allocation12], 2
    // Predicated region
    $region56: #{_lambda_.3} parent=16 // pred_check
      _
    $region57: #{_lambda_.3} parent=16 // pred_check_branch
      %350 = sbr.rel (0) target = $region59
    $region58: #{_lambda_.3} parent=16 // pred_region
      loop: start=0, step=1, limit=1
      $region60: #{_lambda_.3} parent=58 // loop_pre_header
        _
      $region61: #{_lambda_.3} parent=58 // loop_header
        %s352 = sphi 0, %s356
        %p353 = scmp.ge.s32.totalorder %s352, 1
        %s357 = sphi %s347, %s347
        %s358 = sphi [#allocation4], [#allocation4]
      $region62: #{_lambda_.3} parent=58 // loop_header_branch
        %355 = sbr.rel (%p353) target = $region66
      $region63: #{_lambda_.3} parent=58 // loop_body
        %v359 = vld [vmem:[%s357] sm:$0xff]
        %360 = vst [vmem:[%s358] sm:$0xff] %v359
        %v361 = vld [vmem:[%s357 + $0x8] sm:$0xff]
        %362 = vst [vmem:[%s358 + $0x8] sm:$0xff] %v361
        %v363 = vld [vmem:[%s357 + $0x10] sm:$0xff]
        %364 = vst [vmem:[%s358 + $0x10] sm:$0xff] %v363
        %v365 = vld [vmem:[%s357 + $0x18] sm:$0xff]
        %366 = vst [vmem:[%s358 + $0x18] sm:$0xff] %v365
        %v367 = vld [vmem:[%s357 + $0x20] sm:$0xff]
        %368 = vst [vmem:[%s358 + $0x20] sm:$0xff] %v367
        %v369 = vld [vmem:[%s357 + $0x28] sm:$0xff]
        %370 = vst [vmem:[%s358 + $0x28] sm:$0xff] %v369
        %v371 = vld [vmem:[%s357 + $0x30] sm:$0xff]
        %372 = vst [vmem:[%s358 + $0x30] sm:$0xff] %v371
        %v373 = vld [vmem:[%s357 + $0x38] sm:$0xff]
        %374 = vst [vmem:[%s358 + $0x38] sm:$0xff] %v373
        %v375 = vld [vmem:[%s357 + $0x40] sm:$0xff]
        %376 = vst [vmem:[%s358 + $0x40] sm:$0xff] %v375
        %v377 = vld [vmem:[%s357 + $0x48] sm:$0xff]
        %378 = vst [vmem:[%s358 + $0x48] sm:$0xff] %v377
        %v379 = vld [vmem:[%s357 + $0x50] sm:$0xff]
        %380 = vst [vmem:[%s358 + $0x50] sm:$0xff] %v379
        %v381 = vld [vmem:[%s357 + $0x58] sm:$0xff]
        %382 = vst [vmem:[%s358 + $0x58] sm:$0xff] %v381
        %v383 = vld [vmem:[%s357 + $0x60] sm:$0xff]
        %384 = vst [vmem:[%s358 + $0x60] sm:$0xff] %v383
        %v385 = vld [vmem:[%s357 + $0x68] sm:$0xff]
        %386 = vst [vmem:[%s358 + $0x68] sm:$0xff] %v385
        %v387 = vld [vmem:[%s357 + $0x70] sm:$0xff]
        %388 = vst [vmem:[%s358 + $0x70] sm:$0xff] %v387
        %v389 = vld [vmem:[%s357 + $0x78] sm:$0xff]
        %390 = vst [vmem:[%s358 + $0x78] sm:$0xff] %v389
        %v391 = vld [vmem:[%s357 + $0x80] sm:$0xff]
        %392 = vst [vmem:[%s358 + $0x80] sm:$0xff] %v391
        %v393 = vld [vmem:[%s357 + $0x88] sm:$0xff]
        %394 = vst [vmem:[%s358 + $0x88] sm:$0xff] %v393
        %v395 = vld [vmem:[%s357 + $0x90] sm:$0xff]
        %396 = vst [vmem:[%s358 + $0x90] sm:$0xff] %v395
        %v397 = vld [vmem:[%s357 + $0x98] sm:$0xff]
        %398 = vst [vmem:[%s358 + $0x98] sm:$0xff] %v397
        %v399 = vld [vmem:[%s357 + $0xa0] sm:$0xff]
        %400 = vst [vmem:[%s358 + $0xa0] sm:$0xff] %v399
        %v401 = vld [vmem:[%s357 + $0xa8] sm:$0xff]
        %402 = vst [vmem:[%s358 + $0xa8] sm:$0xff] %v401
        %v403 = vld [vmem:[%s357 + $0xb0] sm:$0xff]
        %404 = vst [vmem:[%s358 + $0xb0] sm:$0xff] %v403
        %v405 = vld [vmem:[%s357 + $0xb8] sm:$0xff]
        %406 = vst [vmem:[%s358 + $0xb8] sm:$0xff] %v405
        %v407 = vld [vmem:[%s357 + $0xc0] sm:$0xff]
        %408 = vst [vmem:[%s358 + $0xc0] sm:$0xff] %v407
        %v409 = vld [vmem:[%s357 + $0xc8] sm:$0xff]
        %410 = vst [vmem:[%s358 + $0xc8] sm:$0xff] %v409
        %v411 = vld [vmem:[%s357 + $0xd0] sm:$0xff]
        %412 = vst [vmem:[%s358 + $0xd0] sm:$0xff] %v411
        %v413 = vld [vmem:[%s357 + $0xd8] sm:$0xff]
        %414 = vst [vmem:[%s358 + $0xd8] sm:$0xff] %v413
        %v415 = vld [vmem:[%s357 + $0xe0] sm:$0xff]
        %416 = vst [vmem:[%s358 + $0xe0] sm:$0xff] %v415
        %v417 = vld [vmem:[%s357 + $0xe8] sm:$0xff]
        %418 = vst [vmem:[%s358 + $0xe8] sm:$0xff] %v417
        %v419 = vld [vmem:[%s357 + $0xf0] sm:$0xff]
        %420 = vst [vmem:[%s358 + $0xf0] sm:$0xff] %v419
        %v421 = vld [vmem:[%s357 + $0xf8] sm:$0xff]
        %422 = vst [vmem:[%s358 + $0xf8] sm:$0xff] %v421
        %v423 = vld [vmem:[%s357 + $0x100] sm:$0xff]
        %424 = vst [vmem:[%s358 + $0x100] sm:$0xff] %v423
        %v425 = vld [vmem:[%s357 + $0x108] sm:$0xff]
        %426 = vst [vmem:[%s358 + $0x108] sm:$0xff] %v425
        %v427 = vld [vmem:[%s357 + $0x110] sm:$0xff]
        %428 = vst [vmem:[%s358 + $0x110] sm:$0xff] %v427
        %v429 = vld [vmem:[%s357 + $0x118] sm:$0xff]
        %430 = vst [vmem:[%s358 + $0x118] sm:$0xff] %v429
        %v431 = vld [vmem:[%s357 + $0x120] sm:$0xff]
        %432 = vst [vmem:[%s358 + $0x120] sm:$0xff] %v431
        %v433 = vld [vmem:[%s357 + $0x128] sm:$0xff]
        %434 = vst [vmem:[%s358 + $0x128] sm:$0xff] %v433
        %v435 = vld [vmem:[%s357 + $0x130] sm:$0xff]
        %436 = vst [vmem:[%s358 + $0x130] sm:$0xff] %v435
        %v437 = vld [vmem:[%s357 + $0x138] sm:$0xff]
        %438 = vst [vmem:[%s358 + $0x138] sm:$0xff] %v437
        %v439 = vld [vmem:[%s357 + $0x140] sm:$0xff]
        %440 = vst [vmem:[%s358 + $0x140] sm:$0xff] %v439
        %v441 = vld [vmem:[%s357 + $0x148] sm:$0xff]
        %442 = vst [vmem:[%s358 + $0x148] sm:$0xff] %v441
        %v443 = vld [vmem:[%s357 + $0x150] sm:$0xff]
        %444 = vst [vmem:[%s358 + $0x150] sm:$0xff] %v443
        %v445 = vld [vmem:[%s357 + $0x158] sm:$0xff]
        %446 = vst [vmem:[%s358 + $0x158] sm:$0xff] %v445
        %v447 = vld [vmem:[%s357 + $0x160] sm:$0xff]
        %448 = vst [vmem:[%s358 + $0x160] sm:$0xff] %v447
        %v449 = vld [vmem:[%s357 + $0x168] sm:$0xff]
        %450 = vst [vmem:[%s358 + $0x168] sm:$0xff] %v449
        %v451 = vld [vmem:[%s357 + $0x170] sm:$0xff]
        %452 = vst [vmem:[%s358 + $0x170] sm:$0xff] %v451
        %v453 = vld [vmem:[%s357 + $0x178] sm:$0xff]
        %454 = vst [vmem:[%s358 + $0x178] sm:$0xff] %v453
        %v455 = vld [vmem:[%s357 + $0x180] sm:$0xff]
        %456 = vst [vmem:[%s358 + $0x180] sm:$0xff] %v455
        %v457 = vld [vmem:[%s357 + $0x188] sm:$0xff]
        %458 = vst [vmem:[%s358 + $0x188] sm:$0xff] %v457
        %v459 = vld [vmem:[%s357 + $0x190] sm:$0xff]
        %460 = vst [vmem:[%s358 + $0x190] sm:$0xff] %v459
        %v461 = vld [vmem:[%s357 + $0x198] sm:$0xff]
        %462 = vst [vmem:[%s358 + $0x198] sm:$0xff] %v461
        %v463 = vld [vmem:[%s357 + $0x1a0] sm:$0xff]
        %464 = vst [vmem:[%s358 + $0x1a0] sm:$0xff] %v463
        %v465 = vld [vmem:[%s357 + $0x1a8] sm:$0xff]
        %466 = vst [vmem:[%s358 + $0x1a8] sm:$0xff] %v465
        %v467 = vld [vmem:[%s357 + $0x1b0] sm:$0xff]
        %468 = vst [vmem:[%s358 + $0x1b0] sm:$0xff] %v467
        %v469 = vld [vmem:[%s357 + $0x1b8] sm:$0xff]
        %470 = vst [vmem:[%s358 + $0x1b8] sm:$0xff] %v469
        %v471 = vld [vmem:[%s357 + $0x1c0] sm:$0xff]
        %472 = vst [vmem:[%s358 + $0x1c0] sm:$0xff] %v471
        %v473 = vld [vmem:[%s357 + $0x1c8] sm:$0xff]
        %474 = vst [vmem:[%s358 + $0x1c8] sm:$0xff] %v473
        %v475 = vld [vmem:[%s357 + $0x1d0] sm:$0xff]
        %476 = vst [vmem:[%s358 + $0x1d0] sm:$0xff] %v475
        %v477 = vld [vmem:[%s357 + $0x1d8] sm:$0xff]
        %478 = vst [vmem:[%s358 + $0x1d8] sm:$0xff] %v477
        %v479 = vld [vmem:[%s357 + $0x1e0] sm:$0xff]
        %480 = vst [vmem:[%s358 + $0x1e0] sm:$0xff] %v479
        %v481 = vld [vmem:[%s357 + $0x1e8] sm:$0xff]
        %482 = vst [vmem:[%s358 + $0x1e8] sm:$0xff] %v481
        %v483 = vld [vmem:[%s357 + $0x1f0] sm:$0xff]
        %484 = vst [vmem:[%s358 + $0x1f0] sm:$0xff] %v483
        %v485 = vld [vmem:[%s357 + $0x1f8] sm:$0xff]
        %486 = vst [vmem:[%s358 + $0x1f8] sm:$0xff] %v485
      $region64: #{_lambda_.3} parent=58 // loop_footer
        %s356 = sadd.s32 1, %s352
      $region65: #{_lambda_.3} parent=58 // loop_footer_branch
        %351 = sbr.rel target = $region61
      $region66: #{_lambda_.3} parent=58 // loop_exit
        _
    $region59: #{_lambda_.3} parent=16 // pred_fallthru
      _
    // Predicated region
    $region67: #{_lambda_.3} parent=16 // pred_check
      _
    $region68: #{_lambda_.3} parent=16 // pred_check_branch
      %488 = sbr.rel target = $region70
    $region69: #{_lambda_.3} parent=16 // pred_region
      _
    $region70: #{_lambda_.3} parent=16 // pred_fallthru
      _
    // Predicated region
    $region71: #{_lambda_.3} parent=16 // pred_check
      _
    $region72: #{_lambda_.3} parent=16 // pred_check_branch
      %491 = sbr.rel (0) target = $region74
    $region73: #{_lambda_.3} parent=16 // pred_region
      %492 = vsyncadd %s348, 8192
    $region74: #{_lambda_.3} parent=16 // pred_fallthru
      _
    %s493 = scalar_lea.vmem %s4, 512
    %s494 = scalar_lea.sflag [#allocation12], 3
    // Predicated region
    $region75: #{_lambda_.3} parent=16 // pred_check
      _
    $region76: #{_lambda_.3} parent=16 // pred_check_branch
      %496 = sbr.rel (0) target = $region78
    $region77: #{_lambda_.3} parent=16 // pred_region
      loop: start=0, step=1, limit=1
      $region79: #{_lambda_.3} parent=77 // loop_pre_header
        _
      $region80: #{_lambda_.3} parent=77 // loop_header
        %s498 = sphi 0, %s502
        %p499 = scmp.ge.s32.totalorder %s498, 1
        %s503 = sphi %s493, %s493
        %s504 = sphi [#allocation5], [#allocation5]
      $region81: #{_lambda_.3} parent=77 // loop_header_branch
        %501 = sbr.rel (%p499) target = $region85
      $region82: #{_lambda_.3} parent=77 // loop_body
        %v505 = vld [vmem:[%s503] sm:$0xff]
        %506 = vst [vmem:[%s504] sm:$0xff] %v505
        %v507 = vld [vmem:[%s503 + $0x8] sm:$0xff]
        %508 = vst [vmem:[%s504 + $0x8] sm:$0xff] %v507
        %v509 = vld [vmem:[%s503 + $0x10] sm:$0xff]
        %510 = vst [vmem:[%s504 + $0x10] sm:$0xff] %v509
        %v511 = vld [vmem:[%s503 + $0x18] sm:$0xff]
        %512 = vst [vmem:[%s504 + $0x18] sm:$0xff] %v511
        %v513 = vld [vmem:[%s503 + $0x20] sm:$0xff]
        %514 = vst [vmem:[%s504 + $0x20] sm:$0xff] %v513
        %v515 = vld [vmem:[%s503 + $0x28] sm:$0xff]
        %516 = vst [vmem:[%s504 + $0x28] sm:$0xff] %v515
        %v517 = vld [vmem:[%s503 + $0x30] sm:$0xff]
        %518 = vst [vmem:[%s504 + $0x30] sm:$0xff] %v517
        %v519 = vld [vmem:[%s503 + $0x38] sm:$0xff]
        %520 = vst [vmem:[%s504 + $0x38] sm:$0xff] %v519
        %v521 = vld [vmem:[%s503 + $0x40] sm:$0xff]
        %522 = vst [vmem:[%s504 + $0x40] sm:$0xff] %v521
        %v523 = vld [vmem:[%s503 + $0x48] sm:$0xff]
        %524 = vst [vmem:[%s504 + $0x48] sm:$0xff] %v523
        %v525 = vld [vmem:[%s503 + $0x50] sm:$0xff]
        %526 = vst [vmem:[%s504 + $0x50] sm:$0xff] %v525
        %v527 = vld [vmem:[%s503 + $0x58] sm:$0xff]
        %528 = vst [vmem:[%s504 + $0x58] sm:$0xff] %v527
        %v529 = vld [vmem:[%s503 + $0x60] sm:$0xff]
        %530 = vst [vmem:[%s504 + $0x60] sm:$0xff] %v529
        %v531 = vld [vmem:[%s503 + $0x68] sm:$0xff]
        %532 = vst [vmem:[%s504 + $0x68] sm:$0xff] %v531
        %v533 = vld [vmem:[%s503 + $0x70] sm:$0xff]
        %534 = vst [vmem:[%s504 + $0x70] sm:$0xff] %v533
        %v535 = vld [vmem:[%s503 + $0x78] sm:$0xff]
        %536 = vst [vmem:[%s504 + $0x78] sm:$0xff] %v535
        %v537 = vld [vmem:[%s503 + $0x80] sm:$0xff]
        %538 = vst [vmem:[%s504 + $0x80] sm:$0xff] %v537
        %v539 = vld [vmem:[%s503 + $0x88] sm:$0xff]
        %540 = vst [vmem:[%s504 + $0x88] sm:$0xff] %v539
        %v541 = vld [vmem:[%s503 + $0x90] sm:$0xff]
        %542 = vst [vmem:[%s504 + $0x90] sm:$0xff] %v541
        %v543 = vld [vmem:[%s503 + $0x98] sm:$0xff]
        %544 = vst [vmem:[%s504 + $0x98] sm:$0xff] %v543
        %v545 = vld [vmem:[%s503 + $0xa0] sm:$0xff]
        %546 = vst [vmem:[%s504 + $0xa0] sm:$0xff] %v545
        %v547 = vld [vmem:[%s503 + $0xa8] sm:$0xff]
        %548 = vst [vmem:[%s504 + $0xa8] sm:$0xff] %v547
        %v549 = vld [vmem:[%s503 + $0xb0] sm:$0xff]
        %550 = vst [vmem:[%s504 + $0xb0] sm:$0xff] %v549
        %v551 = vld [vmem:[%s503 + $0xb8] sm:$0xff]
        %552 = vst [vmem:[%s504 + $0xb8] sm:$0xff] %v551
        %v553 = vld [vmem:[%s503 + $0xc0] sm:$0xff]
        %554 = vst [vmem:[%s504 + $0xc0] sm:$0xff] %v553
        %v555 = vld [vmem:[%s503 + $0xc8] sm:$0xff]
        %556 = vst [vmem:[%s504 + $0xc8] sm:$0xff] %v555
        %v557 = vld [vmem:[%s503 + $0xd0] sm:$0xff]
        %558 = vst [vmem:[%s504 + $0xd0] sm:$0xff] %v557
        %v559 = vld [vmem:[%s503 + $0xd8] sm:$0xff]
        %560 = vst [vmem:[%s504 + $0xd8] sm:$0xff] %v559
        %v561 = vld [vmem:[%s503 + $0xe0] sm:$0xff]
        %562 = vst [vmem:[%s504 + $0xe0] sm:$0xff] %v561
        %v563 = vld [vmem:[%s503 + $0xe8] sm:$0xff]
        %564 = vst [vmem:[%s504 + $0xe8] sm:$0xff] %v563
        %v565 = vld [vmem:[%s503 + $0xf0] sm:$0xff]
        %566 = vst [vmem:[%s504 + $0xf0] sm:$0xff] %v565
        %v567 = vld [vmem:[%s503 + $0xf8] sm:$0xff]
        %568 = vst [vmem:[%s504 + $0xf8] sm:$0xff] %v567
        %v569 = vld [vmem:[%s503 + $0x100] sm:$0xff]
        %570 = vst [vmem:[%s504 + $0x100] sm:$0xff] %v569
        %v571 = vld [vmem:[%s503 + $0x108] sm:$0xff]
        %572 = vst [vmem:[%s504 + $0x108] sm:$0xff] %v571
        %v573 = vld [vmem:[%s503 + $0x110] sm:$0xff]
        %574 = vst [vmem:[%s504 + $0x110] sm:$0xff] %v573
        %v575 = vld [vmem:[%s503 + $0x118] sm:$0xff]
        %576 = vst [vmem:[%s504 + $0x118] sm:$0xff] %v575
        %v577 = vld [vmem:[%s503 + $0x120] sm:$0xff]
        %578 = vst [vmem:[%s504 + $0x120] sm:$0xff] %v577
        %v579 = vld [vmem:[%s503 + $0x128] sm:$0xff]
        %580 = vst [vmem:[%s504 + $0x128] sm:$0xff] %v579
        %v581 = vld [vmem:[%s503 + $0x130] sm:$0xff]
        %582 = vst [vmem:[%s504 + $0x130] sm:$0xff] %v581
        %v583 = vld [vmem:[%s503 + $0x138] sm:$0xff]
        %584 = vst [vmem:[%s504 + $0x138] sm:$0xff] %v583
        %v585 = vld [vmem:[%s503 + $0x140] sm:$0xff]
        %586 = vst [vmem:[%s504 + $0x140] sm:$0xff] %v585
        %v587 = vld [vmem:[%s503 + $0x148] sm:$0xff]
        %588 = vst [vmem:[%s504 + $0x148] sm:$0xff] %v587
        %v589 = vld [vmem:[%s503 + $0x150] sm:$0xff]
        %590 = vst [vmem:[%s504 + $0x150] sm:$0xff] %v589
        %v591 = vld [vmem:[%s503 + $0x158] sm:$0xff]
        %592 = vst [vmem:[%s504 + $0x158] sm:$0xff] %v591
        %v593 = vld [vmem:[%s503 + $0x160] sm:$0xff]
        %594 = vst [vmem:[%s504 + $0x160] sm:$0xff] %v593
        %v595 = vld [vmem:[%s503 + $0x168] sm:$0xff]
        %596 = vst [vmem:[%s504 + $0x168] sm:$0xff] %v595
        %v597 = vld [vmem:[%s503 + $0x170] sm:$0xff]
        %598 = vst [vmem:[%s504 + $0x170] sm:$0xff] %v597
        %v599 = vld [vmem:[%s503 + $0x178] sm:$0xff]
        %600 = vst [vmem:[%s504 + $0x178] sm:$0xff] %v599
        %v601 = vld [vmem:[%s503 + $0x180] sm:$0xff]
        %602 = vst [vmem:[%s504 + $0x180] sm:$0xff] %v601
        %v603 = vld [vmem:[%s503 + $0x188] sm:$0xff]
        %604 = vst [vmem:[%s504 + $0x188] sm:$0xff] %v603
        %v605 = vld [vmem:[%s503 + $0x190] sm:$0xff]
        %606 = vst [vmem:[%s504 + $0x190] sm:$0xff] %v605
        %v607 = vld [vmem:[%s503 + $0x198] sm:$0xff]
        %608 = vst [vmem:[%s504 + $0x198] sm:$0xff] %v607
        %v609 = vld [vmem:[%s503 + $0x1a0] sm:$0xff]
        %610 = vst [vmem:[%s504 + $0x1a0] sm:$0xff] %v609
        %v611 = vld [vmem:[%s503 + $0x1a8] sm:$0xff]
        %612 = vst [vmem:[%s504 + $0x1a8] sm:$0xff] %v611
        %v613 = vld [vmem:[%s503 + $0x1b0] sm:$0xff]
        %614 = vst [vmem:[%s504 + $0x1b0] sm:$0xff] %v613
        %v615 = vld [vmem:[%s503 + $0x1b8] sm:$0xff]
        %616 = vst [vmem:[%s504 + $0x1b8] sm:$0xff] %v615
        %v617 = vld [vmem:[%s503 + $0x1c0] sm:$0xff]
        %618 = vst [vmem:[%s504 + $0x1c0] sm:$0xff] %v617
        %v619 = vld [vmem:[%s503 + $0x1c8] sm:$0xff]
        %620 = vst [vmem:[%s504 + $0x1c8] sm:$0xff] %v619
        %v621 = vld [vmem:[%s503 + $0x1d0] sm:$0xff]
        %622 = vst [vmem:[%s504 + $0x1d0] sm:$0xff] %v621
        %v623 = vld [vmem:[%s503 + $0x1d8] sm:$0xff]
        %624 = vst [vmem:[%s504 + $0x1d8] sm:$0xff] %v623
        %v625 = vld [vmem:[%s503 + $0x1e0] sm:$0xff]
        %626 = vst [vmem:[%s504 + $0x1e0] sm:$0xff] %v625
        %v627 = vld [vmem:[%s503 + $0x1e8] sm:$0xff]
        %628 = vst [vmem:[%s504 + $0x1e8] sm:$0xff] %v627
        %v629 = vld [vmem:[%s503 + $0x1f0] sm:$0xff]
        %630 = vst [vmem:[%s504 + $0x1f0] sm:$0xff] %v629
        %v631 = vld [vmem:[%s503 + $0x1f8] sm:$0xff]
        %632 = vst [vmem:[%s504 + $0x1f8] sm:$0xff] %v631
      $region83: #{_lambda_.3} parent=77 // loop_footer
        %s502 = sadd.s32 1, %s498
      $region84: #{_lambda_.3} parent=77 // loop_footer_branch
        %497 = sbr.rel target = $region80
      $region85: #{_lambda_.3} parent=77 // loop_exit
        _
    $region78: #{_lambda_.3} parent=16 // pred_fallthru
      _
    // Predicated region
    $region86: #{_lambda_.3} parent=16 // pred_check
      _
    $region87: #{_lambda_.3} parent=16 // pred_check_branch
      %634 = sbr.rel target = $region89
    $region88: #{_lambda_.3} parent=16 // pred_region
      _
    $region89: #{_lambda_.3} parent=16 // pred_fallthru
      _
    // Predicated region
    $region90: #{_lambda_.3} parent=16 // pred_check
      _
    $region91: #{_lambda_.3} parent=16 // pred_check_branch
      %637 = sbr.rel (0) target = $region93
    $region92: #{_lambda_.3} parent=16 // pred_region
      %638 = vsyncadd %s494, 8192
    $region93: #{_lambda_.3} parent=16 // pred_fallthru
      _
    %s639 = smul.u32 8, 16
    %s640 = smul.u32 %s639, 4
    %s641 = sshll.u32 %s640, 4
    %642 = dma.done [#allocation12], %s641
    %s643 = sshll.u32 %s640, 4
    %644 = dma.done %s202, %s643
    %s645 = sshll.u32 %s640, 4
    %646 = dma.done %s348, %s645
    %s647 = sshll.u32 %s640, 4
    %648 = dma.done %s494, %s647
    %649 = vst [vmem:[#allocation8] sm:$0xff] 0.0
    %650 = vst [vmem:[#allocation9] sm:$0xff] 0.0
    %651 = vst [vmem:[#allocation10] sm:$0xff] 0.0
    %652 = vst [vmem:[#allocation11] sm:$0xff] 0.0
  $region17: #{_lambda_.3} parent=0 // pred_fallthru
    _
  %v653 = vld [vmem:[%s0] sm:$0xff]
  %v654 = vld [vmem:[%s0 + $0x8] sm:$0xff]
  %v655 = vld [vmem:[%s0 + $0x10] sm:$0xff]
  %v656 = vld [vmem:[%s0 + $0x18] sm:$0xff]
  %v657 = vld [vmem:[%s0 + $0x20] sm:$0xff]
  %v658 = vld [vmem:[%s0 + $0x28] sm:$0xff]
  %v659 = vld [vmem:[%s0 + $0x30] sm:$0xff]
  %v660 = vld [vmem:[%s0 + $0x38] sm:$0xff]
  %v661 = vld [vmem:[#allocation2] sm:$0xff]
  %v662 = vld [vmem:[#allocation2 + $0x8] sm:$0xff]
  %v663 = vld [vmem:[#allocation2 + $0x10] sm:$0xff]
  %v664 = vld [vmem:[#allocation2 + $0x18] sm:$0xff]
  %v665 = vld [vmem:[#allocation2 + $0x20] sm:$0xff]
  %v666 = vld [vmem:[#allocation2 + $0x28] sm:$0xff]
  %v667 = vld [vmem:[#allocation2 + $0x30] sm:$0xff]
  %v668 = vld [vmem:[#allocation2 + $0x38] sm:$0xff]
  %v669 = vld [vmem:[#allocation2 + $0x40] sm:$0xff]
  %v670 = vld [vmem:[#allocation2 + $0x48] sm:$0xff]
  %v671 = vld [vmem:[#allocation2 + $0x50] sm:$0xff]
  %v672 = vld [vmem:[#allocation2 + $0x58] sm:$0xff]
  %v673 = vld [vmem:[#allocation2 + $0x60] sm:$0xff]
  %v674 = vld [vmem:[#allocation2 + $0x68] sm:$0xff]
  %v675 = vld [vmem:[#allocation2 + $0x70] sm:$0xff]
  %v676 = vld [vmem:[#allocation2 + $0x78] sm:$0xff]
  %v677 = vld [vmem:[#allocation2 + $0x80] sm:$0xff]
  %v678 = vld [vmem:[#allocation2 + $0x88] sm:$0xff]
  %v679 = vld [vmem:[#allocation2 + $0x90] sm:$0xff]
  %v680 = vld [vmem:[#allocation2 + $0x98] sm:$0xff]
  %v681 = vld [vmem:[#allocation2 + $0xa0] sm:$0xff]
  %v682 = vld [vmem:[#allocation2 + $0xa8] sm:$0xff]
  %v683 = vld [vmem:[#allocation2 + $0xb0] sm:$0xff]
  %v684 = vld [vmem:[#allocation2 + $0xb8] sm:$0xff]
  %v685 = vld [vmem:[#allocation2 + $0xc0] sm:$0xff]
  %v686 = vld [vmem:[#allocation2 + $0xc8] sm:$0xff]
  %v687 = vld [vmem:[#allocation2 + $0xd0] sm:$0xff]
  %v688 = vld [vmem:[#allocation2 + $0xd8] sm:$0xff]
  %v689 = vld [vmem:[#allocation2 + $0xe0] sm:$0xff]
  %v690 = vld [vmem:[#allocation2 + $0xe8] sm:$0xff]
  %v691 = vld [vmem:[#allocation2 + $0xf0] sm:$0xff]
  %v692 = vld [vmem:[#allocation2 + $0xf8] sm:$0xff]
  %v693 = vld [vmem:[#allocation2 + $0x100] sm:$0xff]
  %v694 = vld [vmem:[#allocation2 + $0x108] sm:$0xff]
  %v695 = vld [vmem:[#allocation2 + $0x110] sm:$0xff]
  %v696 = vld [vmem:[#allocation2 + $0x118] sm:$0xff]
  %v697 = vld [vmem:[#allocation2 + $0x120] sm:$0xff]
  %v698 = vld [vmem:[#allocation2 + $0x128] sm:$0xff]
  %v699 = vld [vmem:[#allocation2 + $0x130] sm:$0xff]
  %v700 = vld [vmem:[#allocation2 + $0x138] sm:$0xff]
  %v701 = vld [vmem:[#allocation2 + $0x140] sm:$0xff]
  %v702 = vld [vmem:[#allocation2 + $0x148] sm:$0xff]
  %v703 = vld [vmem:[#allocation2 + $0x150] sm:$0xff]
  %v704 = vld [vmem:[#allocation2 + $0x158] sm:$0xff]
  %v705 = vld [vmem:[#allocation2 + $0x160] sm:$0xff]
  %v706 = vld [vmem:[#allocation2 + $0x168] sm:$0xff]
  %v707 = vld [vmem:[#allocation2 + $0x170] sm:$0xff]
  %v708 = vld [vmem:[#allocation2 + $0x178] sm:$0xff]
  %v709 = vld [vmem:[#allocation2 + $0x180] sm:$0xff]
  %v710 = vld [vmem:[#allocation2 + $0x188] sm:$0xff]
  %v711 = vld [vmem:[#allocation2 + $0x190] sm:$0xff]
  %v712 = vld [vmem:[#allocation2 + $0x198] sm:$0xff]
  %v713 = vld [vmem:[#allocation2 + $0x1a0] sm:$0xff]
  %v714 = vld [vmem:[#allocation2 + $0x1a8] sm:$0xff]
  %v715 = vld [vmem:[#allocation2 + $0x1b0] sm:$0xff]
  %v716 = vld [vmem:[#allocation2 + $0x1b8] sm:$0xff]
  %v717 = vld [vmem:[#allocation2 + $0x1c0] sm:$0xff]
  %v718 = vld [vmem:[#allocation2 + $0x1c8] sm:$0xff]
  %v719 = vld [vmem:[#allocation2 + $0x1d0] sm:$0xff]
  %v720 = vld [vmem:[#allocation2 + $0x1d8] sm:$0xff]
  %v721 = vld [vmem:[#allocation2 + $0x1e0] sm:$0xff]
  %v722 = vld [vmem:[#allocation2 + $0x1e8] sm:$0xff]
  %v723 = vld [vmem:[#allocation2 + $0x1f0] sm:$0xff]
  %v724 = vld [vmem:[#allocation2 + $0x1f8] sm:$0xff]
  %v725 = vld [vmem:[%s2] sm:$0xf]
  %v727 = vperm.slane %v725, 0
  %v728 = vperm.slane %v725, 1
  %v729 = vperm.slane %v725, 2
  %v730 = vperm.slane %v725, 3
  %735 = vmatpush.msra.mxu0 %v721
  %736 = vmatpush.msra.mxu0 %v717
  %737 = vmatpush.msra.mxu0 %v713
  %738 = vmatpush.msra.mxu0 %v709
  %739 = vmatpush.msra.mxu0 %v705
  %740 = vmatpush.msra.mxu0 %v701
  %741 = vmatpush.msra.mxu0 %v697
  %742 = vmatpush.msra.mxu0 %v693
  %743 = vmatpush.msra.mxu0 %v689
  %744 = vmatpush.msra.mxu0 %v685
  %745 = vmatpush.msra.mxu0 %v681
  %746 = vmatpush.msra.mxu0 %v677
  %747 = vmatpush.msra.mxu0 %v673
  %748 = vmatpush.msra.mxu0 %v669
  %749 = vmatpush.msra.mxu0 %v665
  %750 = vmatpush.msra.mxu0 %v661
  %751 = vmatmul.f32.gmra.mxu0 %v653
  %v752 = vpop.f32.mrf.mxu0
  %v753 = vadd.f32 %v727, %v752
  %754 = vmatmul.f32.gmra.mxu0 %v654
  %v755 = vpop.f32.mrf.mxu0
  %v756 = vadd.f32 %v727, %v755
  %757 = vmatmul.f32.gmra.mxu0 %v655
  %v758 = vpop.f32.mrf.mxu0
  %v759 = vadd.f32 %v727, %v758
  %760 = vmatmul.f32.gmra.mxu0 %v656
  %v761 = vpop.f32.mrf.mxu0
  %v762 = vadd.f32 %v727, %v761
  %763 = vmatmul.f32.gmra.mxu0 %v657
  %v764 = vpop.f32.mrf.mxu0
  %v765 = vadd.f32 %v727, %v764
  %766 = vmatmul.f32.gmra.mxu0 %v658
  %v767 = vpop.f32.mrf.mxu0
  %v768 = vadd.f32 %v727, %v767
  %769 = vmatmul.f32.gmra.mxu0 %v659
  %v770 = vpop.f32.mrf.mxu0
  %v771 = vadd.f32 %v727, %v770
  %772 = vmatmul.f32.gmra.mxu0 %v660
  %v773 = vpop.f32.mrf.mxu0
  %v774 = vadd.f32 %v727, %v773
  %775 = vdwg.mxu0
  %776 = vmatpush.msra.mxu0 %v722
  %777 = vmatpush.msra.mxu0 %v718
  %778 = vmatpush.msra.mxu0 %v714
  %779 = vmatpush.msra.mxu0 %v710
  %780 = vmatpush.msra.mxu0 %v706
  %781 = vmatpush.msra.mxu0 %v702
  %782 = vmatpush.msra.mxu0 %v698
  %783 = vmatpush.msra.mxu0 %v694
  %784 = vmatpush.msra.mxu0 %v690
  %785 = vmatpush.msra.mxu0 %v686
  %786 = vmatpush.msra.mxu0 %v682
  %787 = vmatpush.msra.mxu0 %v678
  %788 = vmatpush.msra.mxu0 %v674
  %789 = vmatpush.msra.mxu0 %v670
  %790 = vmatpush.msra.mxu0 %v666
  %791 = vmatpush.msra.mxu0 %v662
  %792 = vmatmul.f32.gmra.mxu0 %v653
  %v793 = vpop.f32.mrf.mxu0
  %v794 = vadd.f32 %v728, %v793
  %795 = vmatmul.f32.gmra.mxu0 %v654
  %v796 = vpop.f32.mrf.mxu0
  %v797 = vadd.f32 %v728, %v796
  %798 = vmatmul.f32.gmra.mxu0 %v655
  %v799 = vpop.f32.mrf.mxu0
  %v800 = vadd.f32 %v728, %v799
  %801 = vmatmul.f32.gmra.mxu0 %v656
  %v802 = vpop.f32.mrf.mxu0
  %v803 = vadd.f32 %v728, %v802
  %804 = vmatmul.f32.gmra.mxu0 %v657
  %v805 = vpop.f32.mrf.mxu0
  %v806 = vadd.f32 %v728, %v805
  %807 = vmatmul.f32.gmra.mxu0 %v658
  %v808 = vpop.f32.mrf.mxu0
  %v809 = vadd.f32 %v728, %v808
  %810 = vmatmul.f32.gmra.mxu0 %v659
  %v811 = vpop.f32.mrf.mxu0
  %v812 = vadd.f32 %v728, %v811
  %813 = vmatmul.f32.gmra.mxu0 %v660
  %v814 = vpop.f32.mrf.mxu0
  %v815 = vadd.f32 %v728, %v814
  %816 = vdwg.mxu0
  %817 = vmatpush.msra.mxu0 %v723
  %818 = vmatpush.msra.mxu0 %v719
  %819 = vmatpush.msra.mxu0 %v715
  %820 = vmatpush.msra.mxu0 %v711
  %821 = vmatpush.msra.mxu0 %v707
  %822 = vmatpush.msra.mxu0 %v703
  %823 = vmatpush.msra.mxu0 %v699
  %824 = vmatpush.msra.mxu0 %v695
  %825 = vmatpush.msra.mxu0 %v691
  %826 = vmatpush.msra.mxu0 %v687
  %827 = vmatpush.msra.mxu0 %v683
  %828 = vmatpush.msra.mxu0 %v679
  %829 = vmatpush.msra.mxu0 %v675
  %830 = vmatpush.msra.mxu0 %v671
  %831 = vmatpush.msra.mxu0 %v667
  %832 = vmatpush.msra.mxu0 %v663
  %833 = vmatmul.f32.gmra.mxu0 %v653
  %v834 = vpop.f32.mrf.mxu0
  %v835 = vadd.f32 %v729, %v834
  %836 = vmatmul.f32.gmra.mxu0 %v654
  %v837 = vpop.f32.mrf.mxu0
  %v838 = vadd.f32 %v729, %v837
  %839 = vmatmul.f32.gmra.mxu0 %v655
  %v840 = vpop.f32.mrf.mxu0
  %v841 = vadd.f32 %v729, %v840
  %842 = vmatmul.f32.gmra.mxu0 %v656
  %v843 = vpop.f32.mrf.mxu0
  %v844 = vadd.f32 %v729, %v843
  %845 = vmatmul.f32.gmra.mxu0 %v657
  %v846 = vpop.f32.mrf.mxu0
  %v847 = vadd.f32 %v729, %v846
  %848 = vmatmul.f32.gmra.mxu0 %v658
  %v849 = vpop.f32.mrf.mxu0
  %v850 = vadd.f32 %v729, %v849
  %851 = vmatmul.f32.gmra.mxu0 %v659
  %v852 = vpop.f32.mrf.mxu0
  %v853 = vadd.f32 %v729, %v852
  %854 = vmatmul.f32.gmra.mxu0 %v660
  %v855 = vpop.f32.mrf.mxu0
  %v856 = vadd.f32 %v729, %v855
  %857 = vdwg.mxu0
  %858 = vmatpush.msra.mxu0 %v724
  %859 = vmatpush.msra.mxu0 %v720
  %860 = vmatpush.msra.mxu0 %v716
  %861 = vmatpush.msra.mxu0 %v712
  %862 = vmatpush.msra.mxu0 %v708
  %863 = vmatpush.msra.mxu0 %v704
  %864 = vmatpush.msra.mxu0 %v700
  %865 = vmatpush.msra.mxu0 %v696
  %866 = vmatpush.msra.mxu0 %v692
  %867 = vmatpush.msra.mxu0 %v688
  %868 = vmatpush.msra.mxu0 %v684
  %869 = vmatpush.msra.mxu0 %v680
  %870 = vmatpush.msra.mxu0 %v676
  %871 = vmatpush.msra.mxu0 %v672
  %872 = vmatpush.msra.mxu0 %v668
  %873 = vmatpush.msra.mxu0 %v664
  %874 = vmatmul.f32.gmra.mxu0 %v653
  %v875 = vpop.f32.mrf.mxu0
  %v876 = vadd.f32 %v730, %v875
  %877 = vmatmul.f32.gmra.mxu0 %v654
  %v878 = vpop.f32.mrf.mxu0
  %v879 = vadd.f32 %v730, %v878
  %880 = vmatmul.f32.gmra.mxu0 %v655
  %v881 = vpop.f32.mrf.mxu0
  %v882 = vadd.f32 %v730, %v881
  %883 = vmatmul.f32.gmra.mxu0 %v656
  %v884 = vpop.f32.mrf.mxu0
  %v885 = vadd.f32 %v730, %v884
  %886 = vmatmul.f32.gmra.mxu0 %v657
  %v887 = vpop.f32.mrf.mxu0
  %v888 = vadd.f32 %v730, %v887
  %889 = vmatmul.f32.gmra.mxu0 %v658
  %v890 = vpop.f32.mrf.mxu0
  %v891 = vadd.f32 %v730, %v890
  %892 = vmatmul.f32.gmra.mxu0 %v659
  %v893 = vpop.f32.mrf.mxu0
  %v894 = vadd.f32 %v730, %v893
  %895 = vmatmul.f32.gmra.mxu0 %v660
  %v896 = vpop.f32.mrf.mxu0
  %v897 = vadd.f32 %v730, %v896
  %898 = vdwg.mxu0
  %899 = vst [vmem:[#allocation6] sm:$0xff] %v753
  %900 = vst [vmem:[#allocation6 + $0x8] sm:$0xff] %v794
  %901 = vst [vmem:[#allocation6 + $0x10] sm:$0xff] %v835
  %902 = vst [vmem:[#allocation6 + $0x18] sm:$0xff] %v876
  %903 = vst [vmem:[#allocation6 + $0x20] sm:$0xff] %v756
  %904 = vst [vmem:[#allocation6 + $0x28] sm:$0xff] %v797
  %905 = vst [vmem:[#allocation6 + $0x30] sm:$0xff] %v838
  %906 = vst [vmem:[#allocation6 + $0x38] sm:$0xff] %v879
  %907 = vst [vmem:[#allocation6 + $0x40] sm:$0xff] %v759
  %908 = vst [vmem:[#allocation6 + $0x48] sm:$0xff] %v800
  %909 = vst [vmem:[#allocation6 + $0x50] sm:$0xff] %v841
  %910 = vst [vmem:[#allocation6 + $0x58] sm:$0xff] %v882
  %911 = vst [vmem:[#allocation6 + $0x60] sm:$0xff] %v762
  %912 = vst [vmem:[#allocation6 + $0x68] sm:$0xff] %v803
  %913 = vst [vmem:[#allocation6 + $0x70] sm:$0xff] %v844
  %914 = vst [vmem:[#allocation6 + $0x78] sm:$0xff] %v885
  %915 = vst [vmem:[#allocation6 + $0x80] sm:$0xff] %v765
  %916 = vst [vmem:[#allocation6 + $0x88] sm:$0xff] %v806
  %917 = vst [vmem:[#allocation6 + $0x90] sm:$0xff] %v847
  %918 = vst [vmem:[#allocation6 + $0x98] sm:$0xff] %v888
  %919 = vst [vmem:[#allocation6 + $0xa0] sm:$0xff] %v768
  %920 = vst [vmem:[#allocation6 + $0xa8] sm:$0xff] %v809
  %921 = vst [vmem:[#allocation6 + $0xb0] sm:$0xff] %v850
  %922 = vst [vmem:[#allocation6 + $0xb8] sm:$0xff] %v891
  %923 = vst [vmem:[#allocation6 + $0xc0] sm:$0xff] %v771
  %924 = vst [vmem:[#allocation6 + $0xc8] sm:$0xff] %v812
  %925 = vst [vmem:[#allocation6 + $0xd0] sm:$0xff] %v853
  %926 = vst [vmem:[#allocation6 + $0xd8] sm:$0xff] %v894
  %927 = vst [vmem:[#allocation6 + $0xe0] sm:$0xff] %v774
  %928 = vst [vmem:[#allocation6 + $0xe8] sm:$0xff] %v815
  %929 = vst [vmem:[#allocation6 + $0xf0] sm:$0xff] %v856
  %930 = vst [vmem:[#allocation6 + $0xf8] sm:$0xff] %v897
  %v931 = vld [vmem:[%s43] sm:$0xff]
  %v932 = vld [vmem:[%s43 + $0x8] sm:$0xff]
  %v933 = vld [vmem:[%s43 + $0x10] sm:$0xff]
  %v934 = vld [vmem:[%s43 + $0x18] sm:$0xff]
  %v935 = vld [vmem:[%s43 + $0x20] sm:$0xff]
  %v936 = vld [vmem:[%s43 + $0x28] sm:$0xff]
  %v937 = vld [vmem:[%s43 + $0x30] sm:$0xff]
  %v938 = vld [vmem:[%s43 + $0x38] sm:$0xff]
  %v939 = vld [vmem:[#allocation4] sm:$0xff]
  %v940 = vld [vmem:[#allocation4 + $0x8] sm:$0xff]
  %v941 = vld [vmem:[#allocation4 + $0x10] sm:$0xff]
  %v942 = vld [vmem:[#allocation4 + $0x18] sm:$0xff]
  %v943 = vld [vmem:[#allocation4 + $0x20] sm:$0xff]
  %v944 = vld [vmem:[#allocation4 + $0x28] sm:$0xff]
  %v945 = vld [vmem:[#allocation4 + $0x30] sm:$0xff]
  %v946 = vld [vmem:[#allocation4 + $0x38] sm:$0xff]
  %v947 = vld [vmem:[#allocation4 + $0x40] sm:$0xff]
  %v948 = vld [vmem:[#allocation4 + $0x48] sm:$0xff]
  %v949 = vld [vmem:[#allocation4 + $0x50] sm:$0xff]
  %v950 = vld [vmem:[#allocation4 + $0x58] sm:$0xff]
  %v951 = vld [vmem:[#allocation4 + $0x60] sm:$0xff]
  %v952 = vld [vmem:[#allocation4 + $0x68] sm:$0xff]
  %v953 = vld [vmem:[#allocation4 + $0x70] sm:$0xff]
  %v954 = vld [vmem:[#allocation4 + $0x78] sm:$0xff]
  %v955 = vld [vmem:[#allocation4 + $0x80] sm:$0xff]
  %v956 = vld [vmem:[#allocation4 + $0x88] sm:$0xff]
  %v957 = vld [vmem:[#allocation4 + $0x90] sm:$0xff]
  %v958 = vld [vmem:[#allocation4 + $0x98] sm:$0xff]
  %v959 = vld [vmem:[#allocation4 + $0xa0] sm:$0xff]
  %v960 = vld [vmem:[#allocation4 + $0xa8] sm:$0xff]
  %v961 = vld [vmem:[#allocation4 + $0xb0] sm:$0xff]
  %v962 = vld [vmem:[#allocation4 + $0xb8] sm:$0xff]
  %v963 = vld [vmem:[#allocation4 + $0xc0] sm:$0xff]
  %v964 = vld [vmem:[#allocation4 + $0xc8] sm:$0xff]
  %v965 = vld [vmem:[#allocation4 + $0xd0] sm:$0xff]
  %v966 = vld [vmem:[#allocation4 + $0xd8] sm:$0xff]
  %v967 = vld [vmem:[#allocation4 + $0xe0] sm:$0xff]
  %v968 = vld [vmem:[#allocation4 + $0xe8] sm:$0xff]
  %v969 = vld [vmem:[#allocation4 + $0xf0] sm:$0xff]
  %v970 = vld [vmem:[#allocation4 + $0xf8] sm:$0xff]
  %v971 = vld [vmem:[#allocation4 + $0x100] sm:$0xff]
  %v972 = vld [vmem:[#allocation4 + $0x108] sm:$0xff]
  %v973 = vld [vmem:[#allocation4 + $0x110] sm:$0xff]
  %v974 = vld [vmem:[#allocation4 + $0x118] sm:$0xff]
  %v975 = vld [vmem:[#allocation4 + $0x120] sm:$0xff]
  %v976 = vld [vmem:[#allocation4 + $0x128] sm:$0xff]
  %v977 = vld [vmem:[#allocation4 + $0x130] sm:$0xff]
  %v978 = vld [vmem:[#allocation4 + $0x138] sm:$0xff]
  %v979 = vld [vmem:[#allocation4 + $0x140] sm:$0xff]
  %v980 = vld [vmem:[#allocation4 + $0x148] sm:$0xff]
  %v981 = vld [vmem:[#allocation4 + $0x150] sm:$0xff]
  %v982 = vld [vmem:[#allocation4 + $0x158] sm:$0xff]
  %v983 = vld [vmem:[#allocation4 + $0x160] sm:$0xff]
  %v984 = vld [vmem:[#allocation4 + $0x168] sm:$0xff]
  %v985 = vld [vmem:[#allocation4 + $0x170] sm:$0xff]
  %v986 = vld [vmem:[#allocation4 + $0x178] sm:$0xff]
  %v987 = vld [vmem:[#allocation4 + $0x180] sm:$0xff]
  %v988 = vld [vmem:[#allocation4 + $0x188] sm:$0xff]
  %v989 = vld [vmem:[#allocation4 + $0x190] sm:$0xff]
  %v990 = vld [vmem:[#allocation4 + $0x198] sm:$0xff]
  %v991 = vld [vmem:[#allocation4 + $0x1a0] sm:$0xff]
  %v992 = vld [vmem:[#allocation4 + $0x1a8] sm:$0xff]
  %v993 = vld [vmem:[#allocation4 + $0x1b0] sm:$0xff]
  %v994 = vld [vmem:[#allocation4 + $0x1b8] sm:$0xff]
  %v995 = vld [vmem:[#allocation4 + $0x1c0] sm:$0xff]
  %v996 = vld [vmem:[#allocation4 + $0x1c8] sm:$0xff]
  %v997 = vld [vmem:[#allocation4 + $0x1d0] sm:$0xff]
  %v998 = vld [vmem:[#allocation4 + $0x1d8] sm:$0xff]
  %v999 = vld [vmem:[#allocation4 + $0x1e0] sm:$0xff]
  %v1000 = vld [vmem:[#allocation4 + $0x1e8] sm:$0xff]
  %v1001 = vld [vmem:[#allocation4 + $0x1f0] sm:$0xff]
  %v1002 = vld [vmem:[#allocation4 + $0x1f8] sm:$0xff]
  %s1003 = scalar_lea.vmem %s2, 4
  %v1004 = vld [vmem:[%s1003] sm:$0xf]
  %v1006 = vperm.slane %v1004, 0
  %v1007 = vperm.slane %v1004, 1
  %v1008 = vperm.slane %v1004, 2
  %v1009 = vperm.slane %v1004, 3
  %1014 = vmatpush.msra.mxu0 %v999
  %1015 = vmatpush.msra.mxu0 %v995
  %1016 = vmatpush.msra.mxu0 %v991
  %1017 = vmatpush.msra.mxu0 %v987
  %1018 = vmatpush.msra.mxu0 %v983
  %1019 = vmatpush.msra.mxu0 %v979
  %1020 = vmatpush.msra.mxu0 %v975
  %1021 = vmatpush.msra.mxu0 %v971
  %1022 = vmatpush.msra.mxu0 %v967
  %1023 = vmatpush.msra.mxu0 %v963
  %1024 = vmatpush.msra.mxu0 %v959
  %1025 = vmatpush.msra.mxu0 %v955
  %1026 = vmatpush.msra.mxu0 %v951
  %1027 = vmatpush.msra.mxu0 %v947
  %1028 = vmatpush.msra.mxu0 %v943
  %1029 = vmatpush.msra.mxu0 %v939
  %1030 = vmatmul.f32.gmra.mxu0 %v931
  %v1031 = vpop.f32.mrf.mxu0
  %v1032 = vadd.f32 %v1006, %v1031
  %1033 = vmatmul.f32.gmra.mxu0 %v932
  %v1034 = vpop.f32.mrf.mxu0
  %v1035 = vadd.f32 %v1006, %v1034
  %1036 = vmatmul.f32.gmra.mxu0 %v933
  %v1037 = vpop.f32.mrf.mxu0
  %v1038 = vadd.f32 %v1006, %v1037
  %1039 = vmatmul.f32.gmra.mxu0 %v934
  %v1040 = vpop.f32.mrf.mxu0
  %v1041 = vadd.f32 %v1006, %v1040
  %1042 = vmatmul.f32.gmra.mxu0 %v935
  %v1043 = vpop.f32.mrf.mxu0
  %v1044 = vadd.f32 %v1006, %v1043
  %1045 = vmatmul.f32.gmra.mxu0 %v936
  %v1046 = vpop.f32.mrf.mxu0
  %v1047 = vadd.f32 %v1006, %v1046
  %1048 = vmatmul.f32.gmra.mxu0 %v937
  %v1049 = vpop.f32.mrf.mxu0
  %v1050 = vadd.f32 %v1006, %v1049
  %1051 = vmatmul.f32.gmra.mxu0 %v938
  %v1052 = vpop.f32.mrf.mxu0
  %v1053 = vadd.f32 %v1006, %v1052
  %1054 = vdwg.mxu0
  %1055 = vmatpush.msra.mxu0 %v1000
  %1056 = vmatpush.msra.mxu0 %v996
  %1057 = vmatpush.msra.mxu0 %v992
  %1058 = vmatpush.msra.mxu0 %v988
  %1059 = vmatpush.msra.mxu0 %v984
  %1060 = vmatpush.msra.mxu0 %v980
  %1061 = vmatpush.msra.mxu0 %v976
  %1062 = vmatpush.msra.mxu0 %v972
  %1063 = vmatpush.msra.mxu0 %v968
  %1064 = vmatpush.msra.mxu0 %v964
  %1065 = vmatpush.msra.mxu0 %v960
  %1066 = vmatpush.msra.mxu0 %v956
  %1067 = vmatpush.msra.mxu0 %v952
  %1068 = vmatpush.msra.mxu0 %v948
  %1069 = vmatpush.msra.mxu0 %v944
  %1070 = vmatpush.msra.mxu0 %v940
  %1071 = vmatmul.f32.gmra.mxu0 %v931
  %v1072 = vpop.f32.mrf.mxu0
  %v1073 = vadd.f32 %v1007, %v1072
  %1074 = vmatmul.f32.gmra.mxu0 %v932
  %v1075 = vpop.f32.mrf.mxu0
  %v1076 = vadd.f32 %v1007, %v1075
  %1077 = vmatmul.f32.gmra.mxu0 %v933
  %v1078 = vpop.f32.mrf.mxu0
  %v1079 = vadd.f32 %v1007, %v1078
  %1080 = vmatmul.f32.gmra.mxu0 %v934
  %v1081 = vpop.f32.mrf.mxu0
  %v1082 = vadd.f32 %v1007, %v1081
  %1083 = vmatmul.f32.gmra.mxu0 %v935
  %v1084 = vpop.f32.mrf.mxu0
  %v1085 = vadd.f32 %v1007, %v1084
  %1086 = vmatmul.f32.gmra.mxu0 %v936
  %v1087 = vpop.f32.mrf.mxu0
  %v1088 = vadd.f32 %v1007, %v1087
  %1089 = vmatmul.f32.gmra.mxu0 %v937
  %v1090 = vpop.f32.mrf.mxu0
  %v1091 = vadd.f32 %v1007, %v1090
  %1092 = vmatmul.f32.gmra.mxu0 %v938
  %v1093 = vpop.f32.mrf.mxu0
  %v1094 = vadd.f32 %v1007, %v1093
  %1095 = vdwg.mxu0
  %1096 = vmatpush.msra.mxu0 %v1001
  %1097 = vmatpush.msra.mxu0 %v997
  %1098 = vmatpush.msra.mxu0 %v993
  %1099 = vmatpush.msra.mxu0 %v989
  %1100 = vmatpush.msra.mxu0 %v985
  %1101 = vmatpush.msra.mxu0 %v981
  %1102 = vmatpush.msra.mxu0 %v977
  %1103 = vmatpush.msra.mxu0 %v973
  %1104 = vmatpush.msra.mxu0 %v969
  %1105 = vmatpush.msra.mxu0 %v965
  %1106 = vmatpush.msra.mxu0 %v961
  %1107 = vmatpush.msra.mxu0 %v957
  %1108 = vmatpush.msra.mxu0 %v953
  %1109 = vmatpush.msra.mxu0 %v949
  %1110 = vmatpush.msra.mxu0 %v945
  %1111 = vmatpush.msra.mxu0 %v941
  %1112 = vmatmul.f32.gmra.mxu0 %v931
  %v1113 = vpop.f32.mrf.mxu0
  %v1114 = vadd.f32 %v1008, %v1113
  %1115 = vmatmul.f32.gmra.mxu0 %v932
  %v1116 = vpop.f32.mrf.mxu0
  %v1117 = vadd.f32 %v1008, %v1116
  %1118 = vmatmul.f32.gmra.mxu0 %v933
  %v1119 = vpop.f32.mrf.mxu0
  %v1120 = vadd.f32 %v1008, %v1119
  %1121 = vmatmul.f32.gmra.mxu0 %v934
  %v1122 = vpop.f32.mrf.mxu0
  %v1123 = vadd.f32 %v1008, %v1122
  %1124 = vmatmul.f32.gmra.mxu0 %v935
  %v1125 = vpop.f32.mrf.mxu0
  %v1126 = vadd.f32 %v1008, %v1125
  %1127 = vmatmul.f32.gmra.mxu0 %v936
  %v1128 = vpop.f32.mrf.mxu0
  %v1129 = vadd.f32 %v1008, %v1128
  %1130 = vmatmul.f32.gmra.mxu0 %v937
  %v1131 = vpop.f32.mrf.mxu0
  %v1132 = vadd.f32 %v1008, %v1131
  %1133 = vmatmul.f32.gmra.mxu0 %v938
  %v1134 = vpop.f32.mrf.mxu0
  %v1135 = vadd.f32 %v1008, %v1134
  %1136 = vdwg.mxu0
  %1137 = vmatpush.msra.mxu0 %v1002
  %1138 = vmatpush.msra.mxu0 %v998
  %1139 = vmatpush.msra.mxu0 %v994
  %1140 = vmatpush.msra.mxu0 %v990
  %1141 = vmatpush.msra.mxu0 %v986
  %1142 = vmatpush.msra.mxu0 %v982
  %1143 = vmatpush.msra.mxu0 %v978
  %1144 = vmatpush.msra.mxu0 %v974
  %1145 = vmatpush.msra.mxu0 %v970
  %1146 = vmatpush.msra.mxu0 %v966
  %1147 = vmatpush.msra.mxu0 %v962
  %1148 = vmatpush.msra.mxu0 %v958
  %1149 = vmatpush.msra.mxu0 %v954
  %1150 = vmatpush.msra.mxu0 %v950
  %1151 = vmatpush.msra.mxu0 %v946
  %1152 = vmatpush.msra.mxu0 %v942
  %1153 = vmatmul.f32.gmra.mxu0 %v931
  %v1154 = vpop.f32.mrf.mxu0
  %v1155 = vadd.f32 %v1009, %v1154
  %1156 = vmatmul.f32.gmra.mxu0 %v932
  %v1157 = vpop.f32.mrf.mxu0
  %v1158 = vadd.f32 %v1009, %v1157
  %1159 = vmatmul.f32.gmra.mxu0 %v933
  %v1160 = vpop.f32.mrf.mxu0
  %v1161 = vadd.f32 %v1009, %v1160
  %1162 = vmatmul.f32.gmra.mxu0 %v934
  %v1163 = vpop.f32.mrf.mxu0
  %v1164 = vadd.f32 %v1009, %v1163
  %1165 = vmatmul.f32.gmra.mxu0 %v935
  %v1166 = vpop.f32.mrf.mxu0
  %v1167 = vadd.f32 %v1009, %v1166
  %1168 = vmatmul.f32.gmra.mxu0 %v936
  %v1169 = vpop.f32.mrf.mxu0
  %v1170 = vadd.f32 %v1009, %v1169
  %1171 = vmatmul.f32.gmra.mxu0 %v937
  %v1172 = vpop.f32.mrf.mxu0
  %v1173 = vadd.f32 %v1009, %v1172
  %1174 = vmatmul.f32.gmra.mxu0 %v938
  %v1175 = vpop.f32.mrf.mxu0
  %v1176 = vadd.f32 %v1009, %v1175
  %1177 = vdwg.mxu0
  %1178 = vst [vmem:[#allocation7] sm:$0xff] %v1032
  %1179 = vst [vmem:[#allocation7 + $0x8] sm:$0xff] %v1073
  %1180 = vst [vmem:[#allocation7 + $0x10] sm:$0xff] %v1114
  %1181 = vst [vmem:[#allocation7 + $0x18] sm:$0xff] %v1155
  %1182 = vst [vmem:[#allocation7 + $0x20] sm:$0xff] %v1035
  %1183 = vst [vmem:[#allocation7 + $0x28] sm:$0xff] %v1076
  %1184 = vst [vmem:[#allocation7 + $0x30] sm:$0xff] %v1117
  %1185 = vst [vmem:[#allocation7 + $0x38] sm:$0xff] %v1158
  %1186 = vst [vmem:[#allocation7 + $0x40] sm:$0xff] %v1038
  %1187 = vst [vmem:[#allocation7 + $0x48] sm:$0xff] %v1079
  %1188 = vst [vmem:[#allocation7 + $0x50] sm:$0xff] %v1120
  %1189 = vst [vmem:[#allocation7 + $0x58] sm:$0xff] %v1161
  %1190 = vst [vmem:[#allocation7 + $0x60] sm:$0xff] %v1041
  %1191 = vst [vmem:[#allocation7 + $0x68] sm:$0xff] %v1082
  %1192 = vst [vmem:[#allocation7 + $0x70] sm:$0xff] %v1123
  %1193 = vst [vmem:[#allocation7 + $0x78] sm:$0xff] %v1164
  %1194 = vst [vmem:[#allocation7 + $0x80] sm:$0xff] %v1044
  %1195 = vst [vmem:[#allocation7 + $0x88] sm:$0xff] %v1085
  %1196 = vst [vmem:[#allocation7 + $0x90] sm:$0xff] %v1126
  %1197 = vst [vmem:[#allocation7 + $0x98] sm:$0xff] %v1167
  %1198 = vst [vmem:[#allocation7 + $0xa0] sm:$0xff] %v1047
  %1199 = vst [vmem:[#allocation7 + $0xa8] sm:$0xff] %v1088
  %1200 = vst [vmem:[#allocation7 + $0xb0] sm:$0xff] %v1129
  %1201 = vst [vmem:[#allocation7 + $0xb8] sm:$0xff] %v1170
  %1202 = vst [vmem:[#allocation7 + $0xc0] sm:$0xff] %v1050
  %1203 = vst [vmem:[#allocation7 + $0xc8] sm:$0xff] %v1091
  %1204 = vst [vmem:[#allocation7 + $0xd0] sm:$0xff] %v1132
  %1205 = vst [vmem:[#allocation7 + $0xd8] sm:$0xff] %v1173
  %1206 = vst [vmem:[#allocation7 + $0xe0] sm:$0xff] %v1053
  %1207 = vst [vmem:[#allocation7 + $0xe8] sm:$0xff] %v1094
  %1208 = vst [vmem:[#allocation7 + $0xf0] sm:$0xff] %v1135
  %1209 = vst [vmem:[#allocation7 + $0xf8] sm:$0xff] %v1176
  %v1210 = vld [vmem:[#allocation3] sm:$0xff]
  %v1211 = vld [vmem:[#allocation3 + $0x8] sm:$0xff]
  %v1212 = vld [vmem:[#allocation3 + $0x10] sm:$0xff]
  %v1213 = vld [vmem:[#allocation3 + $0x18] sm:$0xff]
  %v1214 = vld [vmem:[#allocation3 + $0x20] sm:$0xff]
  %v1215 = vld [vmem:[#allocation3 + $0x28] sm:$0xff]
  %v1216 = vld [vmem:[#allocation3 + $0x30] sm:$0xff]
  %v1217 = vld [vmem:[#allocation3 + $0x38] sm:$0xff]
  %v1218 = vld [vmem:[#allocation3 + $0x40] sm:$0xff]
  %v1219 = vld [vmem:[#allocation3 + $0x48] sm:$0xff]
  %v1220 = vld [vmem:[#allocation3 + $0x50] sm:$0xff]
  %v1221 = vld [vmem:[#allocation3 + $0x58] sm:$0xff]
  %v1222 = vld [vmem:[#allocation3 + $0x60] sm:$0xff]
  %v1223 = vld [vmem:[#allocation3 + $0x68] sm:$0xff]
  %v1224 = vld [vmem:[#allocation3 + $0x70] sm:$0xff]
  %v1225 = vld [vmem:[#allocation3 + $0x78] sm:$0xff]
  %v1226 = vld [vmem:[#allocation3 + $0x80] sm:$0xff]
  %v1227 = vld [vmem:[#allocation3 + $0x88] sm:$0xff]
  %v1228 = vld [vmem:[#allocation3 + $0x90] sm:$0xff]
  %v1229 = vld [vmem:[#allocation3 + $0x98] sm:$0xff]
  %v1230 = vld [vmem:[#allocation3 + $0xa0] sm:$0xff]
  %v1231 = vld [vmem:[#allocation3 + $0xa8] sm:$0xff]
  %v1232 = vld [vmem:[#allocation3 + $0xb0] sm:$0xff]
  %v1233 = vld [vmem:[#allocation3 + $0xb8] sm:$0xff]
  %v1234 = vld [vmem:[#allocation3 + $0xc0] sm:$0xff]
  %v1235 = vld [vmem:[#allocation3 + $0xc8] sm:$0xff]
  %v1236 = vld [vmem:[#allocation3 + $0xd0] sm:$0xff]
  %v1237 = vld [vmem:[#allocation3 + $0xd8] sm:$0xff]
  %v1238 = vld [vmem:[#allocation3 + $0xe0] sm:$0xff]
  %v1239 = vld [vmem:[#allocation3 + $0xe8] sm:$0xff]
  %v1240 = vld [vmem:[#allocation3 + $0xf0] sm:$0xff]
  %v1241 = vld [vmem:[#allocation3 + $0xf8] sm:$0xff]
  %v1242 = vld [vmem:[#allocation3 + $0x100] sm:$0xff]
  %v1243 = vld [vmem:[#allocation3 + $0x108] sm:$0xff]
  %v1244 = vld [vmem:[#allocation3 + $0x110] sm:$0xff]
  %v1245 = vld [vmem:[#allocation3 + $0x118] sm:$0xff]
  %v1246 = vld [vmem:[#allocation3 + $0x120] sm:$0xff]
  %v1247 = vld [vmem:[#allocation3 + $0x128] sm:$0xff]
  %v1248 = vld [vmem:[#allocation3 + $0x130] sm:$0xff]
  %v1249 = vld [vmem:[#allocation3 + $0x138] sm:$0xff]
  %v1250 = vld [vmem:[#allocation3 + $0x140] sm:$0xff]
  %v1251 = vld [vmem:[#allocation3 + $0x148] sm:$0xff]
  %v1252 = vld [vmem:[#allocation3 + $0x150] sm:$0xff]
  %v1253 = vld [vmem:[#allocation3 + $0x158] sm:$0xff]
  %v1254 = vld [vmem:[#allocation3 + $0x160] sm:$0xff]
  %v1255 = vld [vmem:[#allocation3 + $0x168] sm:$0xff]
  %v1256 = vld [vmem:[#allocation3 + $0x170] sm:$0xff]
  %v1257 = vld [vmem:[#allocation3 + $0x178] sm:$0xff]
  %v1258 = vld [vmem:[#allocation3 + $0x180] sm:$0xff]
  %v1259 = vld [vmem:[#allocation3 + $0x188] sm:$0xff]
  %v1260 = vld [vmem:[#allocation3 + $0x190] sm:$0xff]
  %v1261 = vld [vmem:[#allocation3 + $0x198] sm:$0xff]
  %v1262 = vld [vmem:[#allocation3 + $0x1a0] sm:$0xff]
  %v1263 = vld [vmem:[#allocation3 + $0x1a8] sm:$0xff]
  %v1264 = vld [vmem:[#allocation3 + $0x1b0] sm:$0xff]
  %v1265 = vld [vmem:[#allocation3 + $0x1b8] sm:$0xff]
  %v1266 = vld [vmem:[#allocation3 + $0x1c0] sm:$0xff]
  %v1267 = vld [vmem:[#allocation3 + $0x1c8] sm:$0xff]
  %v1268 = vld [vmem:[#allocation3 + $0x1d0] sm:$0xff]
  %v1269 = vld [vmem:[#allocation3 + $0x1d8] sm:$0xff]
  %v1270 = vld [vmem:[#allocation3 + $0x1e0] sm:$0xff]
  %v1271 = vld [vmem:[#allocation3 + $0x1e8] sm:$0xff]
  %v1272 = vld [vmem:[#allocation3 + $0x1f0] sm:$0xff]
  %v1273 = vld [vmem:[#allocation3 + $0x1f8] sm:$0xff]
  %v1274 = vld [vmem:[#allocation5] sm:$0xff]
  %v1275 = vld [vmem:[#allocation5 + $0x8] sm:$0xff]
  %v1276 = vld [vmem:[#allocation5 + $0x10] sm:$0xff]
  %v1277 = vld [vmem:[#allocation5 + $0x18] sm:$0xff]
  %v1278 = vld [vmem:[#allocation5 + $0x20] sm:$0xff]
  %v1279 = vld [vmem:[#allocation5 + $0x28] sm:$0xff]
  %v1280 = vld [vmem:[#allocation5 + $0x30] sm:$0xff]
  %v1281 = vld [vmem:[#allocation5 + $0x38] sm:$0xff]
  %v1282 = vld [vmem:[#allocation5 + $0x40] sm:$0xff]
  %v1283 = vld [vmem:[#allocation5 + $0x48] sm:$0xff]
  %v1284 = vld [vmem:[#allocation5 + $0x50] sm:$0xff]
  %v1285 = vld [vmem:[#allocation5 + $0x58] sm:$0xff]
  %v1286 = vld [vmem:[#allocation5 + $0x60] sm:$0xff]
  %v1287 = vld [vmem:[#allocation5 + $0x68] sm:$0xff]
  %v1288 = vld [vmem:[#allocation5 + $0x70] sm:$0xff]
  %v1289 = vld [vmem:[#allocation5 + $0x78] sm:$0xff]
  %v1290 = vld [vmem:[#allocation5 + $0x80] sm:$0xff]
  %v1291 = vld [vmem:[#allocation5 + $0x88] sm:$0xff]
  %v1292 = vld [vmem:[#allocation5 + $0x90] sm:$0xff]
  %v1293 = vld [vmem:[#allocation5 + $0x98] sm:$0xff]
  %v1294 = vld [vmem:[#allocation5 + $0xa0] sm:$0xff]
  %v1295 = vld [vmem:[#allocation5 + $0xa8] sm:$0xff]
  %v1296 = vld [vmem:[#allocation5 + $0xb0] sm:$0xff]
  %v1297 = vld [vmem:[#allocation5 + $0xb8] sm:$0xff]
  %v1298 = vld [vmem:[#allocation5 + $0xc0] sm:$0xff]
  %v1299 = vld [vmem:[#allocation5 + $0xc8] sm:$0xff]
  %v1300 = vld [vmem:[#allocation5 + $0xd0] sm:$0xff]
  %v1301 = vld [vmem:[#allocation5 + $0xd8] sm:$0xff]
  %v1302 = vld [vmem:[#allocation5 + $0xe0] sm:$0xff]
  %v1303 = vld [vmem:[#allocation5 + $0xe8] sm:$0xff]
  %v1304 = vld [vmem:[#allocation5 + $0xf0] sm:$0xff]
  %v1305 = vld [vmem:[#allocation5 + $0xf8] sm:$0xff]
  %v1306 = vld [vmem:[#allocation5 + $0x100] sm:$0xff]
  %v1307 = vld [vmem:[#allocation5 + $0x108] sm:$0xff]
  %v1308 = vld [vmem:[#allocation5 + $0x110] sm:$0xff]
  %v1309 = vld [vmem:[#allocation5 + $0x118] sm:$0xff]
  %v1310 = vld [vmem:[#allocation5 + $0x120] sm:$0xff]
  %v1311 = vld [vmem:[#allocation5 + $0x128] sm:$0xff]
  %v1312 = vld [vmem:[#allocation5 + $0x130] sm:$0xff]
  %v1313 = vld [vmem:[#allocation5 + $0x138] sm:$0xff]
  %v1314 = vld [vmem:[#allocation5 + $0x140] sm:$0xff]
  %v1315 = vld [vmem:[#allocation5 + $0x148] sm:$0xff]
  %v1316 = vld [vmem:[#allocation5 + $0x150] sm:$0xff]
  %v1317 = vld [vmem:[#allocation5 + $0x158] sm:$0xff]
  %v1318 = vld [vmem:[#allocation5 + $0x160] sm:$0xff]
  %v1319 = vld [vmem:[#allocation5 + $0x168] sm:$0xff]
  %v1320 = vld [vmem:[#allocation5 + $0x170] sm:$0xff]
  %v1321 = vld [vmem:[#allocation5 + $0x178] sm:$0xff]
  %v1322 = vld [vmem:[#allocation5 + $0x180] sm:$0xff]
  %v1323 = vld [vmem:[#allocation5 + $0x188] sm:$0xff]
  %v1324 = vld [vmem:[#allocation5 + $0x190] sm:$0xff]
  %v1325 = vld [vmem:[#allocation5 + $0x198] sm:$0xff]
  %v1326 = vld [vmem:[#allocation5 + $0x1a0] sm:$0xff]
  %v1327 = vld [vmem:[#allocation5 + $0x1a8] sm:$0xff]
  %v1328 = vld [vmem:[#allocation5 + $0x1b0] sm:$0xff]
  %v1329 = vld [vmem:[#allocation5 + $0x1b8] sm:$0xff]
  %v1330 = vld [vmem:[#allocation5 + $0x1c0] sm:$0xff]
  %v1331 = vld [vmem:[#allocation5 + $0x1c8] sm:$0xff]
  %v1332 = vld [vmem:[#allocation5 + $0x1d0] sm:$0xff]
  %v1333 = vld [vmem:[#allocation5 + $0x1d8] sm:$0xff]
  %v1334 = vld [vmem:[#allocation5 + $0x1e0] sm:$0xff]
  %v1335 = vld [vmem:[#allocation5 + $0x1e8] sm:$0xff]
  %v1336 = vld [vmem:[#allocation5 + $0x1f0] sm:$0xff]
  %v1337 = vld [vmem:[#allocation5 + $0x1f8] sm:$0xff]
  %v1338 = vld [vmem:[#allocation8] sm:$0xff]
  %v1339 = vld [vmem:[#allocation9] sm:$0xff]
  %v1340 = vld [vmem:[#allocation10] sm:$0xff]
  %v1341 = vld [vmem:[#allocation11] sm:$0xff]
  %v1342 = vld [vmem:[#allocation6] sm:$0xff]
  %v1343 = vld [vmem:[#allocation6 + $0x8] sm:$0xff]
  %v1344 = vld [vmem:[#allocation6 + $0x10] sm:$0xff]
  %v1345 = vld [vmem:[#allocation6 + $0x18] sm:$0xff]
  %1346 = vmatpush.msra.mxu0 %v1270
  %1347 = vmatpush.msra.mxu0 %v1266
  %1348 = vmatpush.msra.mxu0 %v1262
  %1349 = vmatpush.msra.mxu0 %v1258
  %1350 = vmatpush.msra.mxu0 %v1254
  %1351 = vmatpush.msra.mxu0 %v1250
  %1352 = vmatpush.msra.mxu0 %v1246
  %1353 = vmatpush.msra.mxu0 %v1242
  %1354 = vmatpush.msra.mxu0 %v1238
  %1355 = vmatpush.msra.mxu0 %v1234
  %1356 = vmatpush.msra.mxu0 %v1230
  %1357 = vmatpush.msra.mxu0 %v1226
  %1358 = vmatpush.msra.mxu0 %v1222
  %1359 = vmatpush.msra.mxu0 %v1218
  %1360 = vmatpush.msra.mxu0 %v1214
  %1361 = vmatpush.msra.mxu0 %v1210
  %1362 = vmatmul.f32.gmra.mxu0 %v1338
  %v1363 = vpop.f32.mrf.mxu0
  %v1364 = vadd.f32 0.0, %v1363
  %1365 = vdwg.mxu0
  %1366 = vmatpush.msra.mxu0 %v1271
  %1367 = vmatpush.msra.mxu0 %v1267
  %1368 = vmatpush.msra.mxu0 %v1263
  %1369 = vmatpush.msra.mxu0 %v1259
  %1370 = vmatpush.msra.mxu0 %v1255
  %1371 = vmatpush.msra.mxu0 %v1251
  %1372 = vmatpush.msra.mxu0 %v1247
  %1373 = vmatpush.msra.mxu0 %v1243
  %1374 = vmatpush.msra.mxu0 %v1239
  %1375 = vmatpush.msra.mxu0 %v1235
  %1376 = vmatpush.msra.mxu0 %v1231
  %1377 = vmatpush.msra.mxu0 %v1227
  %1378 = vmatpush.msra.mxu0 %v1223
  %1379 = vmatpush.msra.mxu0 %v1219
  %1380 = vmatpush.msra.mxu0 %v1215
  %1381 = vmatpush.msra.mxu0 %v1211
  %1382 = vmatmul.f32.gmra.mxu0 %v1338
  %v1383 = vpop.f32.mrf.mxu0
  %v1384 = vadd.f32 0.0, %v1383
  %1385 = vdwg.mxu0
  %1386 = vmatpush.msra.mxu0 %v1272
  %1387 = vmatpush.msra.mxu0 %v1268
  %1388 = vmatpush.msra.mxu0 %v1264
  %1389 = vmatpush.msra.mxu0 %v1260
  %1390 = vmatpush.msra.mxu0 %v1256
  %1391 = vmatpush.msra.mxu0 %v1252
  %1392 = vmatpush.msra.mxu0 %v1248
  %1393 = vmatpush.msra.mxu0 %v1244
  %1394 = vmatpush.msra.mxu0 %v1240
  %1395 = vmatpush.msra.mxu0 %v1236
  %1396 = vmatpush.msra.mxu0 %v1232
  %1397 = vmatpush.msra.mxu0 %v1228
  %1398 = vmatpush.msra.mxu0 %v1224
  %1399 = vmatpush.msra.mxu0 %v1220
  %1400 = vmatpush.msra.mxu0 %v1216
  %1401 = vmatpush.msra.mxu0 %v1212
  %1402 = vmatmul.f32.gmra.mxu0 %v1338
  %v1403 = vpop.f32.mrf.mxu0
  %v1404 = vadd.f32 0.0, %v1403
  %1405 = vdwg.mxu0
  %1406 = vmatpush.msra.mxu0 %v1273
  %1407 = vmatpush.msra.mxu0 %v1269
  %1408 = vmatpush.msra.mxu0 %v1265
  %1409 = vmatpush.msra.mxu0 %v1261
  %1410 = vmatpush.msra.mxu0 %v1257
  %1411 = vmatpush.msra.mxu0 %v1253
  %1412 = vmatpush.msra.mxu0 %v1249
  %1413 = vmatpush.msra.mxu0 %v1245
  %1414 = vmatpush.msra.mxu0 %v1241
  %1415 = vmatpush.msra.mxu0 %v1237
  %1416 = vmatpush.msra.mxu0 %v1233
  %1417 = vmatpush.msra.mxu0 %v1229
  %1418 = vmatpush.msra.mxu0 %v1225
  %1419 = vmatpush.msra.mxu0 %v1221
  %1420 = vmatpush.msra.mxu0 %v1217
  %1421 = vmatpush.msra.mxu0 %v1213
  %1422 = vmatmul.f32.gmra.mxu0 %v1338
  %v1423 = vpop.f32.mrf.mxu0
  %v1424 = vadd.f32 0.0, %v1423
  %1425 = vdwg.mxu0
  %v1426 = vadd.f32 %v1342, %v1364
  %v1427 = vadd.f32 %v1343, %v1384
  %v1428 = vadd.f32 %v1344, %v1404
  %v1429 = vadd.f32 %v1345, %v1424
  %v1430 = vxor.u32 %v1426, 2147483648
  %v1431 = vmul.f32 %v1430, 1.442695
  %v1432 = vpow.pop %v1431
  %v1433 = vadd.f32 %v1432, 1.0
  %v1434 = vrcp.pop %v1433
  %v1435 = vmul.f32 %v1433, %v1434
  %v1436 = vsub.f32 1.0, %v1435
  %v1437 = vmul.f32 %v1434, %v1436
  %v1438 = vadd.f32 %v1434, %v1437
  %vm1439 = vweird.f32 %v1433
  %vm1440 = vweird.f32 %v1434
  %vm1441 = vmor %vm1439, %vm1440
  %v1442 = vsel %vm1441, %v1434, %v1438
  %v1443 = vand.u32 2147483647, %v1433
  %vm1444 = vcmp.eq.f32.partialorder %v1443, 8.507059e+37
  %v1445 = vand.u32 %v1433, 2147483648
  %v1446 = vor.u32 1.1754944e-38, %v1445
  %v1447 = vsel %vm1444, %v1446, %v1442
  %v1448 = vmul.f32 1.0, %v1447
  %v1449 = vxor.u32 %v1427, 2147483648
  %v1450 = vmul.f32 %v1449, 1.442695
  %v1451 = vpow.pop %v1450
  %v1452 = vadd.f32 %v1451, 1.0
  %v1453 = vrcp.pop %v1452
  %v1454 = vmul.f32 %v1452, %v1453
  %v1455 = vsub.f32 1.0, %v1454
  %v1456 = vmul.f32 %v1453, %v1455
  %v1457 = vadd.f32 %v1453, %v1456
  %vm1458 = vweird.f32 %v1452
  %vm1459 = vweird.f32 %v1453
  %vm1460 = vmor %vm1458, %vm1459
  %v1461 = vsel %vm1460, %v1453, %v1457
  %v1462 = vand.u32 2147483647, %v1452
  %vm1463 = vcmp.eq.f32.partialorder %v1462, 8.507059e+37
  %v1464 = vand.u32 %v1452, 2147483648
  %v1465 = vor.u32 1.1754944e-38, %v1464
  %v1466 = vsel %vm1463, %v1465, %v1461
  %v1467 = vmul.f32 1.0, %v1466
  %v1468 = vtanh.pop %v1428
  %v1469 = vxor.u32 %v1429, 2147483648
  %v1470 = vmul.f32 %v1469, 1.442695
  %v1471 = vpow.pop %v1470
  %v1472 = vadd.f32 %v1471, 1.0
  %v1473 = vrcp.pop %v1472
  %v1474 = vmul.f32 %v1472, %v1473
  %v1475 = vsub.f32 1.0, %v1474
  %v1476 = vmul.f32 %v1473, %v1475
  %v1477 = vadd.f32 %v1473, %v1476
  %vm1478 = vweird.f32 %v1472
  %vm1479 = vweird.f32 %v1473
  %vm1480 = vmor %vm1478, %vm1479
  %v1481 = vsel %vm1480, %v1473, %v1477
  %v1482 = vand.u32 2147483647, %v1472
  %vm1483 = vcmp.eq.f32.partialorder %v1482, 8.507059e+37
  %v1484 = vand.u32 %v1472, 2147483648
  %v1485 = vor.u32 1.1754944e-38, %v1484
  %v1486 = vsel %vm1483, %v1485, %v1481
  %v1487 = vmul.f32 1.0, %v1486
  %v1488 = vmul.f32 %v1467, %v1339
  %v1489 = vmul.f32 %v1448, %v1468
  %v1490 = vadd.f32 %v1488, %v1489
  %v1491 = vtanh.pop %v1490
  %v1492 = vmul.f32 %v1487, %v1491
  %1493 = vst [vmem:[%s5] sm:$0xff] %v1492
  %s1494 = scalar_lea.vmem [#allocation7], 224
  %v1495 = vld [vmem:[%s1494] sm:$0xff]
  %v1496 = vld [vmem:[%s1494 + $0x8] sm:$0xff]
  %v1497 = vld [vmem:[%s1494 + $0x10] sm:$0xff]
  %v1498 = vld [vmem:[%s1494 + $0x18] sm:$0xff]
  %1499 = vmatpush.msra.mxu0 %v1334
  %1500 = vmatpush.msra.mxu0 %v1330
  %1501 = vmatpush.msra.mxu0 %v1326
  %1502 = vmatpush.msra.mxu0 %v1322
  %1503 = vmatpush.msra.mxu0 %v1318
  %1504 = vmatpush.msra.mxu0 %v1314
  %1505 = vmatpush.msra.mxu0 %v1310
  %1506 = vmatpush.msra.mxu0 %v1306
  %1507 = vmatpush.msra.mxu0 %v1302
  %1508 = vmatpush.msra.mxu0 %v1298
  %1509 = vmatpush.msra.mxu0 %v1294
  %1510 = vmatpush.msra.mxu0 %v1290
  %1511 = vmatpush.msra.mxu0 %v1286
  %1512 = vmatpush.msra.mxu0 %v1282
  %1513 = vmatpush.msra.mxu0 %v1278
  %1514 = vmatpush.msra.mxu0 %v1274
  %1515 = vmatmul.f32.gmra.mxu0 %v1340
  %v1516 = vpop.f32.mrf.mxu0
  %v1517 = vadd.f32 0.0, %v1516
  %1518 = vdwg.mxu0
  %1519 = vmatpush.msra.mxu0 %v1335
  %1520 = vmatpush.msra.mxu0 %v1331
  %1521 = vmatpush.msra.mxu0 %v1327
  %1522 = vmatpush.msra.mxu0 %v1323
  %1523 = vmatpush.msra.mxu0 %v1319
  %1524 = vmatpush.msra.mxu0 %v1315
  %1525 = vmatpush.msra.mxu0 %v1311
  %1526 = vmatpush.msra.mxu0 %v1307
  %1527 = vmatpush.msra.mxu0 %v1303
  %1528 = vmatpush.msra.mxu0 %v1299
  %1529 = vmatpush.msra.mxu0 %v1295
  %1530 = vmatpush.msra.mxu0 %v1291
  %1531 = vmatpush.msra.mxu0 %v1287
  %1532 = vmatpush.msra.mxu0 %v1283
  %1533 = vmatpush.msra.mxu0 %v1279
  %1534 = vmatpush.msra.mxu0 %v1275
  %1535 = vmatmul.f32.gmra.mxu0 %v1340
  %v1536 = vpop.f32.mrf.mxu0
  %v1537 = vadd.f32 0.0, %v1536
  %1538 = vdwg.mxu0
  %1539 = vmatpush.msra.mxu0 %v1336
  %1540 = vmatpush.msra.mxu0 %v1332
  %1541 = vmatpush.msra.mxu0 %v1328
  %1542 = vmatpush.msra.mxu0 %v1324
  %1543 = vmatpush.msra.mxu0 %v1320
  %1544 = vmatpush.msra.mxu0 %v1316
  %1545 = vmatpush.msra.mxu0 %v1312
  %1546 = vmatpush.msra.mxu0 %v1308
  %1547 = vmatpush.msra.mxu0 %v1304
  %1548 = vmatpush.msra.mxu0 %v1300
  %1549 = vmatpush.msra.mxu0 %v1296
  %1550 = vmatpush.msra.mxu0 %v1292
  %1551 = vmatpush.msra.mxu0 %v1288
  %1552 = vmatpush.msra.mxu0 %v1284
  %1553 = vmatpush.msra.mxu0 %v1280
  %1554 = vmatpush.msra.mxu0 %v1276
  %1555 = vmatmul.f32.gmra.mxu0 %v1340
  %v1556 = vpop.f32.mrf.mxu0
  %v1557 = vadd.f32 0.0, %v1556
  %1558 = vdwg.mxu0
  %1559 = vmatpush.msra.mxu0 %v1337
  %1560 = vmatpush.msra.mxu0 %v1333
  %1561 = vmatpush.msra.mxu0 %v1329
  %1562 = vmatpush.msra.mxu0 %v1325
  %1563 = vmatpush.msra.mxu0 %v1321
  %1564 = vmatpush.msra.mxu0 %v1317
  %1565 = vmatpush.msra.mxu0 %v1313
  %1566 = vmatpush.msra.mxu0 %v1309
  %1567 = vmatpush.msra.mxu0 %v1305
  %1568 = vmatpush.msra.mxu0 %v1301
  %1569 = vmatpush.msra.mxu0 %v1297
  %1570 = vmatpush.msra.mxu0 %v1293
  %1571 = vmatpush.msra.mxu0 %v1289
  %1572 = vmatpush.msra.mxu0 %v1285
  %1573 = vmatpush.msra.mxu0 %v1281
  %1574 = vmatpush.msra.mxu0 %v1277
  %1575 = vmatmul.f32.gmra.mxu0 %v1340
  %v1576 = vpop.f32.mrf.mxu0
  %v1577 = vadd.f32 0.0, %v1576
  %1578 = vdwg.mxu0
  %v1579 = vadd.f32 %v1495, %v1517
  %v1580 = vadd.f32 %v1496, %v1537
  %v1581 = vadd.f32 %v1497, %v1557
  %v1582 = vadd.f32 %v1498, %v1577
  %v1583 = vxor.u32 %v1579, 2147483648
  %v1584 = vmul.f32 %v1583, 1.442695
  %v1585 = vpow.pop %v1584
  %v1586 = vadd.f32 %v1585, 1.0
  %v1587 = vrcp.pop %v1586
  %v1588 = vmul.f32 %v1586, %v1587
  %v1589 = vsub.f32 1.0, %v1588
  %v1590 = vmul.f32 %v1587, %v1589
  %v1591 = vadd.f32 %v1587, %v1590
  %vm1592 = vweird.f32 %v1586
  %vm1593 = vweird.f32 %v1587
  %vm1594 = vmor %vm1592, %vm1593
  %v1595 = vsel %vm1594, %v1587, %v1591
  %v1596 = vand.u32 2147483647, %v1586
  %vm1597 = vcmp.eq.f32.partialorder %v1596, 8.507059e+37
  %v1598 = vand.u32 %v1586, 2147483648
  %v1599 = vor.u32 1.1754944e-38, %v1598
  %v1600 = vsel %vm1597, %v1599, %v1595
  %v1601 = vmul.f32 1.0, %v1600
  %v1602 = vxor.u32 %v1580, 2147483648
  %v1603 = vmul.f32 %v1602, 1.442695
  %v1604 = vpow.pop %v1603
  %v1605 = vadd.f32 %v1604, 1.0
  %v1606 = vrcp.pop %v1605
  %v1607 = vmul.f32 %v1605, %v1606
  %v1608 = vsub.f32 1.0, %v1607
  %v1609 = vmul.f32 %v1606, %v1608
  %v1610 = vadd.f32 %v1606, %v1609
  %vm1611 = vweird.f32 %v1605
  %vm1612 = vweird.f32 %v1606
  %vm1613 = vmor %vm1611, %vm1612
  %v1614 = vsel %vm1613, %v1606, %v1610
  %v1615 = vand.u32 2147483647, %v1605
  %vm1616 = vcmp.eq.f32.partialorder %v1615, 8.507059e+37
  %v1617 = vand.u32 %v1605, 2147483648
  %v1618 = vor.u32 1.1754944e-38, %v1617
  %v1619 = vsel %vm1616, %v1618, %v1614
  %v1620 = vmul.f32 1.0, %v1619
  %v1621 = vtanh.pop %v1581
  %v1622 = vxor.u32 %v1582, 2147483648
  %v1623 = vmul.f32 %v1622, 1.442695
  %v1624 = vpow.pop %v1623
  %v1625 = vadd.f32 %v1624, 1.0
  %v1626 = vrcp.pop %v1625
  %v1627 = vmul.f32 %v1625, %v1626
  %v1628 = vsub.f32 1.0, %v1627
  %v1629 = vmul.f32 %v1626, %v1628
  %v1630 = vadd.f32 %v1626, %v1629
  %vm1631 = vweird.f32 %v1625
  %vm1632 = vweird.f32 %v1626
  %vm1633 = vmor %vm1631, %vm1632
  %v1634 = vsel %vm1633, %v1626, %v1630
  %v1635 = vand.u32 2147483647, %v1625
  %vm1636 = vcmp.eq.f32.partialorder %v1635, 8.507059e+37
  %v1637 = vand.u32 %v1625, 2147483648
  %v1638 = vor.u32 1.1754944e-38, %v1637
  %v1639 = vsel %vm1636, %v1638, %v1634
  %v1640 = vmul.f32 1.0, %v1639
  %v1641 = vmul.f32 %v1620, %v1341
  %v1642 = vmul.f32 %v1601, %v1621
  %v1643 = vadd.f32 %v1641, %v1642
  %v1644 = vtanh.pop %v1643
  %v1645 = vmul.f32 %v1640, %v1644
  %s1646 = scalar_lea.vmem %s51, 56
  %1647 = vst [vmem:[%s1646] sm:$0xff] %v1645
  %s1648 = scalar_lea.vmem [#allocation6], 32
  %v1649 = vld [vmem:[%s1648] sm:$0xff]
  %v1650 = vld [vmem:[%s1648 + $0x8] sm:$0xff]
  %v1651 = vld [vmem:[%s1648 + $0x10] sm:$0xff]
  %v1652 = vld [vmem:[%s1648 + $0x18] sm:$0xff]
  %1653 = vmatpush.msra.mxu0 %v1270
  %1654 = vmatpush.msra.mxu0 %v1266
  %1655 = vmatpush.msra.mxu0 %v1262
  %1656 = vmatpush.msra.mxu0 %v1258
  %1657 = vmatpush.msra.mxu0 %v1254
  %1658 = vmatpush.msra.mxu0 %v1250
  %1659 = vmatpush.msra.mxu0 %v1246
  %1660 = vmatpush.msra.mxu0 %v1242
  %1661 = vmatpush.msra.mxu0 %v1238
  %1662 = vmatpush.msra.mxu0 %v1234
  %1663 = vmatpush.msra.mxu0 %v1230
  %1664 = vmatpush.msra.mxu0 %v1226
  %1665 = vmatpush.msra.mxu0 %v1222
  %1666 = vmatpush.msra.mxu0 %v1218
  %1667 = vmatpush.msra.mxu0 %v1214
  %1668 = vmatpush.msra.mxu0 %v1210
  %1669 = vmatmul.f32.gmra.mxu0 %v1492
  %v1670 = vpop.f32.mrf.mxu0
  %v1671 = vadd.f32 0.0, %v1670
  %1672 = vdwg.mxu0
  %1673 = vmatpush.msra.mxu0 %v1271
  %1674 = vmatpush.msra.mxu0 %v1267
  %1675 = vmatpush.msra.mxu0 %v1263
  %1676 = vmatpush.msra.mxu0 %v1259
  %1677 = vmatpush.msra.mxu0 %v1255
  %1678 = vmatpush.msra.mxu0 %v1251
  %1679 = vmatpush.msra.mxu0 %v1247
  %1680 = vmatpush.msra.mxu0 %v1243
  %1681 = vmatpush.msra.mxu0 %v1239
  %1682 = vmatpush.msra.mxu0 %v1235
  %1683 = vmatpush.msra.mxu0 %v1231
  %1684 = vmatpush.msra.mxu0 %v1227
  %1685 = vmatpush.msra.mxu0 %v1223
  %1686 = vmatpush.msra.mxu0 %v1219
  %1687 = vmatpush.msra.mxu0 %v1215
  %1688 = vmatpush.msra.mxu0 %v1211
  %1689 = vmatmul.f32.gmra.mxu0 %v1492
  %v1690 = vpop.f32.mrf.mxu0
  %v1691 = vadd.f32 0.0, %v1690
  %1692 = vdwg.mxu0
  %1693 = vmatpush.msra.mxu0 %v1272
  %1694 = vmatpush.msra.mxu0 %v1268
  %1695 = vmatpush.msra.mxu0 %v1264
  %1696 = vmatpush.msra.mxu0 %v1260
  %1697 = vmatpush.msra.mxu0 %v1256
  %1698 = vmatpush.msra.mxu0 %v1252
  %1699 = vmatpush.msra.mxu0 %v1248
  %1700 = vmatpush.msra.mxu0 %v1244
  %1701 = vmatpush.msra.mxu0 %v1240
  %1702 = vmatpush.msra.mxu0 %v1236
  %1703 = vmatpush.msra.mxu0 %v1232
  %1704 = vmatpush.msra.mxu0 %v1228
  %1705 = vmatpush.msra.mxu0 %v1224
  %1706 = vmatpush.msra.mxu0 %v1220
  %1707 = vmatpush.msra.mxu0 %v1216
  %1708 = vmatpush.msra.mxu0 %v1212
  %1709 = vmatmul.f32.gmra.mxu0 %v1492
  %v1710 = vpop.f32.mrf.mxu0
  %v1711 = vadd.f32 0.0, %v1710
  %1712 = vdwg.mxu0
  %1713 = vmatpush.msra.mxu0 %v1273
  %1714 = vmatpush.msra.mxu0 %v1269
  %1715 = vmatpush.msra.mxu0 %v1265
  %1716 = vmatpush.msra.mxu0 %v1261
  %1717 = vmatpush.msra.mxu0 %v1257
  %1718 = vmatpush.msra.mxu0 %v1253
  %1719 = vmatpush.msra.mxu0 %v1249
  %1720 = vmatpush.msra.mxu0 %v1245
  %1721 = vmatpush.msra.mxu0 %v1241
  %1722 = vmatpush.msra.mxu0 %v1237
  %1723 = vmatpush.msra.mxu0 %v1233
  %1724 = vmatpush.msra.mxu0 %v1229
  %1725 = vmatpush.msra.mxu0 %v1225
  %1726 = vmatpush.msra.mxu0 %v1221
  %1727 = vmatpush.msra.mxu0 %v1217
  %1728 = vmatpush.msra.mxu0 %v1213
  %1729 = vmatmul.f32.gmra.mxu0 %v1492
  %v1730 = vpop.f32.mrf.mxu0
  %v1731 = vadd.f32 0.0, %v1730
  %1732 = vdwg.mxu0
  %v1733 = vadd.f32 %v1649, %v1671
  %v1734 = vadd.f32 %v1650, %v1691
  %v1735 = vadd.f32 %v1651, %v1711
  %v1736 = vadd.f32 %v1652, %v1731
  %v1737 = vxor.u32 %v1733, 2147483648
  %v1738 = vmul.f32 %v1737, 1.442695
  %v1739 = vpow.pop %v1738
  %v1740 = vadd.f32 %v1739, 1.0
  %v1741 = vrcp.pop %v1740
  %v1742 = vmul.f32 %v1740, %v1741
  %v1743 = vsub.f32 1.0, %v1742
  %v1744 = vmul.f32 %v1741, %v1743
  %v1745 = vadd.f32 %v1741, %v1744
  %vm1746 = vweird.f32 %v1740
  %vm1747 = vweird.f32 %v1741
  %vm1748 = vmor %vm1746, %vm1747
  %v1749 = vsel %vm1748, %v1741, %v1745
  %v1750 = vand.u32 2147483647, %v1740
  %vm1751 = vcmp.eq.f32.partialorder %v1750, 8.507059e+37
  %v1752 = vand.u32 %v1740, 2147483648
  %v1753 = vor.u32 1.1754944e-38, %v1752
  %v1754 = vsel %vm1751, %v1753, %v1749
  %v1755 = vmul.f32 1.0, %v1754
  %v1756 = vxor.u32 %v1734, 2147483648
  %v1757 = vmul.f32 %v1756, 1.442695
  %v1758 = vpow.pop %v1757
  %v1759 = vadd.f32 %v1758, 1.0
  %v1760 = vrcp.pop %v1759
  %v1761 = vmul.f32 %v1759, %v1760
  %v1762 = vsub.f32 1.0, %v1761
  %v1763 = vmul.f32 %v1760, %v1762
  %v1764 = vadd.f32 %v1760, %v1763
  %vm1765 = vweird.f32 %v1759
  %vm1766 = vweird.f32 %v1760
  %vm1767 = vmor %vm1765, %vm1766
  %v1768 = vsel %vm1767, %v1760, %v1764
  %v1769 = vand.u32 2147483647, %v1759
  %vm1770 = vcmp.eq.f32.partialorder %v1769, 8.507059e+37
  %v1771 = vand.u32 %v1759, 2147483648
  %v1772 = vor.u32 1.1754944e-38, %v1771
  %v1773 = vsel %vm1770, %v1772, %v1768
  %v1774 = vmul.f32 1.0, %v1773
  %v1775 = vtanh.pop %v1735
  %v1776 = vxor.u32 %v1736, 2147483648
  %v1777 = vmul.f32 %v1776, 1.442695
  %v1778 = vpow.pop %v1777
  %v1779 = vadd.f32 %v1778, 1.0
  %v1780 = vrcp.pop %v1779
  %v1781 = vmul.f32 %v1779, %v1780
  %v1782 = vsub.f32 1.0, %v1781
  %v1783 = vmul.f32 %v1780, %v1782
  %v1784 = vadd.f32 %v1780, %v1783
  %vm1785 = vweird.f32 %v1779
  %vm1786 = vweird.f32 %v1780
  %vm1787 = vmor %vm1785, %vm1786
  %v1788 = vsel %vm1787, %v1780, %v1784
  %v1789 = vand.u32 2147483647, %v1779
  %vm1790 = vcmp.eq.f32.partialorder %v1789, 8.507059e+37
  %v1791 = vand.u32 %v1779, 2147483648
  %v1792 = vor.u32 1.1754944e-38, %v1791
  %v1793 = vsel %vm1790, %v1792, %v1788
  %v1794 = vmul.f32 1.0, %v1793
  %v1795 = vmul.f32 %v1774, %v1490
  %v1796 = vmul.f32 %v1755, %v1775
  %v1797 = vadd.f32 %v1795, %v1796
  %v1798 = vtanh.pop %v1797
  %v1799 = vmul.f32 %v1794, %v1798
  %s1800 = scalar_lea.vmem %s5, 8
  %1801 = vst [vmem:[%s1800] sm:$0xff] %v1799
  %s1802 = scalar_lea.vmem [#allocation7], 192
  %v1803 = vld [vmem:[%s1802] sm:$0xff]
  %v1804 = vld [vmem:[%s1802 + $0x8] sm:$0xff]
  %v1805 = vld [vmem:[%s1802 + $0x10] sm:$0xff]
  %v1806 = vld [vmem:[%s1802 + $0x18] sm:$0xff]
  %1807 = vmatpush.msra.mxu0 %v1334
  %1808 = vmatpush.msra.mxu0 %v1330
  %1809 = vmatpush.msra.mxu0 %v1326
  %1810 = vmatpush.msra.mxu0 %v1322
  %1811 = vmatpush.msra.mxu0 %v1318
  %1812 = vmatpush.msra.mxu0 %v1314
  %1813 = vmatpush.msra.mxu0 %v1310
  %1814 = vmatpush.msra.mxu0 %v1306
  %1815 = vmatpush.msra.mxu0 %v1302
  %1816 = vmatpush.msra.mxu0 %v1298
  %1817 = vmatpush.msra.mxu0 %v1294
  %1818 = vmatpush.msra.mxu0 %v1290
  %1819 = vmatpush.msra.mxu0 %v1286
  %1820 = vmatpush.msra.mxu0 %v1282
  %1821 = vmatpush.msra.mxu0 %v1278
  %1822 = vmatpush.msra.mxu0 %v1274
  %1823 = vmatmul.f32.gmra.mxu0 %v1645
  %v1824 = vpop.f32.mrf.mxu0
  %v1825 = vadd.f32 0.0, %v1824
  %1826 = vdwg.mxu0
  %1827 = vmatpush.msra.mxu0 %v1335
  %1828 = vmatpush.msra.mxu0 %v1331
  %1829 = vmatpush.msra.mxu0 %v1327
  %1830 = vmatpush.msra.mxu0 %v1323
  %1831 = vmatpush.msra.mxu0 %v1319
  %1832 = vmatpush.msra.mxu0 %v1315
  %1833 = vmatpush.msra.mxu0 %v1311
  %1834 = vmatpush.msra.mxu0 %v1307
  %1835 = vmatpush.msra.mxu0 %v1303
  %1836 = vmatpush.msra.mxu0 %v1299
  %1837 = vmatpush.msra.mxu0 %v1295
  %1838 = vmatpush.msra.mxu0 %v1291
  %1839 = vmatpush.msra.mxu0 %v1287
  %1840 = vmatpush.msra.mxu0 %v1283
  %1841 = vmatpush.msra.mxu0 %v1279
  %1842 = vmatpush.msra.mxu0 %v1275
  %1843 = vmatmul.f32.gmra.mxu0 %v1645
  %v1844 = vpop.f32.mrf.mxu0
  %v1845 = vadd.f32 0.0, %v1844
  %1846 = vdwg.mxu0
  %1847 = vmatpush.msra.mxu0 %v1336
  %1848 = vmatpush.msra.mxu0 %v1332
  %1849 = vmatpush.msra.mxu0 %v1328
  %1850 = vmatpush.msra.mxu0 %v1324
  %1851 = vmatpush.msra.mxu0 %v1320
  %1852 = vmatpush.msra.mxu0 %v1316
  %1853 = vmatpush.msra.mxu0 %v1312
  %1854 = vmatpush.msra.mxu0 %v1308
  %1855 = vmatpush.msra.mxu0 %v1304
  %1856 = vmatpush.msra.mxu0 %v1300
  %1857 = vmatpush.msra.mxu0 %v1296
  %1858 = vmatpush.msra.mxu0 %v1292
  %1859 = vmatpush.msra.mxu0 %v1288
  %1860 = vmatpush.msra.mxu0 %v1284
  %1861 = vmatpush.msra.mxu0 %v1280
  %1862 = vmatpush.msra.mxu0 %v1276
  %1863 = vmatmul.f32.gmra.mxu0 %v1645
  %v1864 = vpop.f32.mrf.mxu0
  %v1865 = vadd.f32 0.0, %v1864
  %1866 = vdwg.mxu0
  %1867 = vmatpush.msra.mxu0 %v1337
  %1868 = vmatpush.msra.mxu0 %v1333
  %1869 = vmatpush.msra.mxu0 %v1329
  %1870 = vmatpush.msra.mxu0 %v1325
  %1871 = vmatpush.msra.mxu0 %v1321
  %1872 = vmatpush.msra.mxu0 %v1317
  %1873 = vmatpush.msra.mxu0 %v1313
  %1874 = vmatpush.msra.mxu0 %v1309
  %1875 = vmatpush.msra.mxu0 %v1305
  %1876 = vmatpush.msra.mxu0 %v1301
  %1877 = vmatpush.msra.mxu0 %v1297
  %1878 = vmatpush.msra.mxu0 %v1293
  %1879 = vmatpush.msra.mxu0 %v1289
  %1880 = vmatpush.msra.mxu0 %v1285
  %1881 = vmatpush.msra.mxu0 %v1281
  %1882 = vmatpush.msra.mxu0 %v1277
  %1883 = vmatmul.f32.gmra.mxu0 %v1645
  %v1884 = vpop.f32.mrf.mxu0
  %v1885 = vadd.f32 0.0, %v1884
  %1886 = vdwg.mxu0
  %v1887 = vadd.f32 %v1803, %v1825
  %v1888 = vadd.f32 %v1804, %v1845
  %v1889 = vadd.f32 %v1805, %v1865
  %v1890 = vadd.f32 %v1806, %v1885
  %v1891 = vxor.u32 %v1887, 2147483648
  %v1892 = vmul.f32 %v1891, 1.442695
  %v1893 = vpow.pop %v1892
  %v1894 = vadd.f32 %v1893, 1.0
  %v1895 = vrcp.pop %v1894
  %v1896 = vmul.f32 %v1894, %v1895
  %v1897 = vsub.f32 1.0, %v1896
  %v1898 = vmul.f32 %v1895, %v1897
  %v1899 = vadd.f32 %v1895, %v1898
  %vm1900 = vweird.f32 %v1894
  %vm1901 = vweird.f32 %v1895
  %vm1902 = vmor %vm1900, %vm1901
  %v1903 = vsel %vm1902, %v1895, %v1899
  %v1904 = vand.u32 2147483647, %v1894
  %vm1905 = vcmp.eq.f32.partialorder %v1904, 8.507059e+37
  %v1906 = vand.u32 %v1894, 2147483648
  %v1907 = vor.u32 1.1754944e-38, %v1906
  %v1908 = vsel %vm1905, %v1907, %v1903
  %v1909 = vmul.f32 1.0, %v1908
  %v1910 = vxor.u32 %v1888, 2147483648
  %v1911 = vmul.f32 %v1910, 1.442695
  %v1912 = vpow.pop %v1911
  %v1913 = vadd.f32 %v1912, 1.0
  %v1914 = vrcp.pop %v1913
  %v1915 = vmul.f32 %v1913, %v1914
  %v1916 = vsub.f32 1.0, %v1915
  %v1917 = vmul.f32 %v1914, %v1916
  %v1918 = vadd.f32 %v1914, %v1917
  %vm1919 = vweird.f32 %v1913
  %vm1920 = vweird.f32 %v1914
  %vm1921 = vmor %vm1919, %vm1920
  %v1922 = vsel %vm1921, %v1914, %v1918
  %v1923 = vand.u32 2147483647, %v1913
  %vm1924 = vcmp.eq.f32.partialorder %v1923, 8.507059e+37
  %v1925 = vand.u32 %v1913, 2147483648
  %v1926 = vor.u32 1.1754944e-38, %v1925
  %v1927 = vsel %vm1924, %v1926, %v1922
  %v1928 = vmul.f32 1.0, %v1927
  %v1929 = vtanh.pop %v1889
  %v1930 = vxor.u32 %v1890, 2147483648
  %v1931 = vmul.f32 %v1930, 1.442695
  %v1932 = vpow.pop %v1931
  %v1933 = vadd.f32 %v1932, 1.0
  %v1934 = vrcp.pop %v1933
  %v1935 = vmul.f32 %v1933, %v1934
  %v1936 = vsub.f32 1.0, %v1935
  %v1937 = vmul.f32 %v1934, %v1936
  %v1938 = vadd.f32 %v1934, %v1937
  %vm1939 = vweird.f32 %v1933
  %vm1940 = vweird.f32 %v1934
  %vm1941 = vmor %vm1939, %vm1940
  %v1942 = vsel %vm1941, %v1934, %v1938
  %v1943 = vand.u32 2147483647, %v1933
  %vm1944 = vcmp.eq.f32.partialorder %v1943, 8.507059e+37
  %v1945 = vand.u32 %v1933, 2147483648
  %v1946 = vor.u32 1.1754944e-38, %v1945
  %v1947 = vsel %vm1944, %v1946, %v1942
  %v1948 = vmul.f32 1.0, %v1947
  %v1949 = vmul.f32 %v1928, %v1643
  %v1950 = vmul.f32 %v1909, %v1929
  %v1951 = vadd.f32 %v1949, %v1950
  %v1952 = vtanh.pop %v1951
  %v1953 = vmul.f32 %v1948, %v1952
  %s1954 = scalar_lea.vmem %s51, 48
  %1955 = vst [vmem:[%s1954] sm:$0xff] %v1953
  %s1956 = scalar_lea.vmem [#allocation6], 64
  %v1957 = vld [vmem:[%s1956] sm:$0xff]
  %v1958 = vld [vmem:[%s1956 + $0x8] sm:$0xff]
  %v1959 = vld [vmem:[%s1956 + $0x10] sm:$0xff]
  %v1960 = vld [vmem:[%s1956 + $0x18] sm:$0xff]
  %1961 = vmatpush.msra.mxu0 %v1270
  %1962 = vmatpush.msra.mxu0 %v1266
  %1963 = vmatpush.msra.mxu0 %v1262
  %1964 = vmatpush.msra.mxu0 %v1258
  %1965 = vmatpush.msra.mxu0 %v1254
  %1966 = vmatpush.msra.mxu0 %v1250
  %1967 = vmatpush.msra.mxu0 %v1246
  %1968 = vmatpush.msra.mxu0 %v1242
  %1969 = vmatpush.msra.mxu0 %v1238
  %1970 = vmatpush.msra.mxu0 %v1234
  %1971 = vmatpush.msra.mxu0 %v1230
  %1972 = vmatpush.msra.mxu0 %v1226
  %1973 = vmatpush.msra.mxu0 %v1222
  %1974 = vmatpush.msra.mxu0 %v1218
  %1975 = vmatpush.msra.mxu0 %v1214
  %1976 = vmatpush.msra.mxu0 %v1210
  %1977 = vmatmul.f32.gmra.mxu0 %v1799
  %v1978 = vpop.f32.mrf.mxu0
  %v1979 = vadd.f32 0.0, %v1978
  %1980 = vdwg.mxu0
  %1981 = vmatpush.msra.mxu0 %v1271
  %1982 = vmatpush.msra.mxu0 %v1267
  %1983 = vmatpush.msra.mxu0 %v1263
  %1984 = vmatpush.msra.mxu0 %v1259
  %1985 = vmatpush.msra.mxu0 %v1255
  %1986 = vmatpush.msra.mxu0 %v1251
  %1987 = vmatpush.msra.mxu0 %v1247
  %1988 = vmatpush.msra.mxu0 %v1243
  %1989 = vmatpush.msra.mxu0 %v1239
  %1990 = vmatpush.msra.mxu0 %v1235
  %1991 = vmatpush.msra.mxu0 %v1231
  %1992 = vmatpush.msra.mxu0 %v1227
  %1993 = vmatpush.msra.mxu0 %v1223
  %1994 = vmatpush.msra.mxu0 %v1219
  %1995 = vmatpush.msra.mxu0 %v1215
  %1996 = vmatpush.msra.mxu0 %v1211
  %1997 = vmatmul.f32.gmra.mxu0 %v1799
  %v1998 = vpop.f32.mrf.mxu0
  %v1999 = vadd.f32 0.0, %v1998
  %2000 = vdwg.mxu0
  %2001 = vmatpush.msra.mxu0 %v1272
  %2002 = vmatpush.msra.mxu0 %v1268
  %2003 = vmatpush.msra.mxu0 %v1264
  %2004 = vmatpush.msra.mxu0 %v1260
  %2005 = vmatpush.msra.mxu0 %v1256
  %2006 = vmatpush.msra.mxu0 %v1252
  %2007 = vmatpush.msra.mxu0 %v1248
  %2008 = vmatpush.msra.mxu0 %v1244
  %2009 = vmatpush.msra.mxu0 %v1240
  %2010 = vmatpush.msra.mxu0 %v1236
  %2011 = vmatpush.msra.mxu0 %v1232
  %2012 = vmatpush.msra.mxu0 %v1228
  %2013 = vmatpush.msra.mxu0 %v1224
  %2014 = vmatpush.msra.mxu0 %v1220
  %2015 = vmatpush.msra.mxu0 %v1216
  %2016 = vmatpush.msra.mxu0 %v1212
  %2017 = vmatmul.f32.gmra.mxu0 %v1799
  %v2018 = vpop.f32.mrf.mxu0
  %v2019 = vadd.f32 0.0, %v2018
  %2020 = vdwg.mxu0
  %2021 = vmatpush.msra.mxu0 %v1273
  %2022 = vmatpush.msra.mxu0 %v1269
  %2023 = vmatpush.msra.mxu0 %v1265
  %2024 = vmatpush.msra.mxu0 %v1261
  %2025 = vmatpush.msra.mxu0 %v1257
  %2026 = vmatpush.msra.mxu0 %v1253
  %2027 = vmatpush.msra.mxu0 %v1249
  %2028 = vmatpush.msra.mxu0 %v1245
  %2029 = vmatpush.msra.mxu0 %v1241
  %2030 = vmatpush.msra.mxu0 %v1237
  %2031 = vmatpush.msra.mxu0 %v1233
  %2032 = vmatpush.msra.mxu0 %v1229
  %2033 = vmatpush.msra.mxu0 %v1225
  %2034 = vmatpush.msra.mxu0 %v1221
  %2035 = vmatpush.msra.mxu0 %v1217
  %2036 = vmatpush.msra.mxu0 %v1213
  %2037 = vmatmul.f32.gmra.mxu0 %v1799
  %v2038 = vpop.f32.mrf.mxu0
  %v2039 = vadd.f32 0.0, %v2038
  %2040 = vdwg.mxu0
  %v2041 = vadd.f32 %v1957, %v1979
  %v2042 = vadd.f32 %v1958, %v1999
  %v2043 = vadd.f32 %v1959, %v2019
  %v2044 = vadd.f32 %v1960, %v2039
  %v2045 = vxor.u32 %v2041, 2147483648
  %v2046 = vmul.f32 %v2045, 1.442695
  %v2047 = vpow.pop %v2046
  %v2048 = vadd.f32 %v2047, 1.0
  %v2049 = vrcp.pop %v2048
  %v2050 = vmul.f32 %v2048, %v2049
  %v2051 = vsub.f32 1.0, %v2050
  %v2052 = vmul.f32 %v2049, %v2051
  %v2053 = vadd.f32 %v2049, %v2052
  %vm2054 = vweird.f32 %v2048
  %vm2055 = vweird.f32 %v2049
  %vm2056 = vmor %vm2054, %vm2055
  %v2057 = vsel %vm2056, %v2049, %v2053
  %v2058 = vand.u32 2147483647, %v2048
  %vm2059 = vcmp.eq.f32.partialorder %v2058, 8.507059e+37
  %v2060 = vand.u32 %v2048, 2147483648
  %v2061 = vor.u32 1.1754944e-38, %v2060
  %v2062 = vsel %vm2059, %v2061, %v2057
  %v2063 = vmul.f32 1.0, %v2062
  %v2064 = vxor.u32 %v2042, 2147483648
  %v2065 = vmul.f32 %v2064, 1.442695
  %v2066 = vpow.pop %v2065
  %v2067 = vadd.f32 %v2066, 1.0
  %v2068 = vrcp.pop %v2067
  %v2069 = vmul.f32 %v2067, %v2068
  %v2070 = vsub.f32 1.0, %v2069
  %v2071 = vmul.f32 %v2068, %v2070
  %v2072 = vadd.f32 %v2068, %v2071
  %vm2073 = vweird.f32 %v2067
  %vm2074 = vweird.f32 %v2068
  %vm2075 = vmor %vm2073, %vm2074
  %v2076 = vsel %vm2075, %v2068, %v2072
  %v2077 = vand.u32 2147483647, %v2067
  %vm2078 = vcmp.eq.f32.partialorder %v2077, 8.507059e+37
  %v2079 = vand.u32 %v2067, 2147483648
  %v2080 = vor.u32 1.1754944e-38, %v2079
  %v2081 = vsel %vm2078, %v2080, %v2076
  %v2082 = vmul.f32 1.0, %v2081
  %v2083 = vtanh.pop %v2043
  %v2084 = vxor.u32 %v2044, 2147483648
  %v2085 = vmul.f32 %v2084, 1.442695
  %v2086 = vpow.pop %v2085
  %v2087 = vadd.f32 %v2086, 1.0
  %v2088 = vrcp.pop %v2087
  %v2089 = vmul.f32 %v2087, %v2088
  %v2090 = vsub.f32 1.0, %v2089
  %v2091 = vmul.f32 %v2088, %v2090
  %v2092 = vadd.f32 %v2088, %v2091
  %vm2093 = vweird.f32 %v2087
  %vm2094 = vweird.f32 %v2088
  %vm2095 = vmor %vm2093, %vm2094
  %v2096 = vsel %vm2095, %v2088, %v2092
  %v2097 = vand.u32 2147483647, %v2087
  %vm2098 = vcmp.eq.f32.partialorder %v2097, 8.507059e+37
  %v2099 = vand.u32 %v2087, 2147483648
  %v2100 = vor.u32 1.1754944e-38, %v2099
  %v2101 = vsel %vm2098, %v2100, %v2096
  %v2102 = vmul.f32 1.0, %v2101
  %v2103 = vmul.f32 %v2082, %v1797
  %v2104 = vmul.f32 %v2063, %v2083
  %v2105 = vadd.f32 %v2103, %v2104
  %v2106 = vtanh.pop %v2105
  %v2107 = vmul.f32 %v2102, %v2106
  %s2108 = scalar_lea.vmem %s5, 16
  %2109 = vst [vmem:[%s2108] sm:$0xff] %v2107
  %s2110 = scalar_lea.vmem [#allocation7], 160
  %v2111 = vld [vmem:[%s2110] sm:$0xff]
  %v2112 = vld [vmem:[%s2110 + $0x8] sm:$0xff]
  %v2113 = vld [vmem:[%s2110 + $0x10] sm:$0xff]
  %v2114 = vld [vmem:[%s2110 + $0x18] sm:$0xff]
  %2115 = vmatpush.msra.mxu0 %v1334
  %2116 = vmatpush.msra.mxu0 %v1330
  %2117 = vmatpush.msra.mxu0 %v1326
  %2118 = vmatpush.msra.mxu0 %v1322
  %2119 = vmatpush.msra.mxu0 %v1318
  %2120 = vmatpush.msra.mxu0 %v1314
  %2121 = vmatpush.msra.mxu0 %v1310
  %2122 = vmatpush.msra.mxu0 %v1306
  %2123 = vmatpush.msra.mxu0 %v1302
  %2124 = vmatpush.msra.mxu0 %v1298
  %2125 = vmatpush.msra.mxu0 %v1294
  %2126 = vmatpush.msra.mxu0 %v1290
  %2127 = vmatpush.msra.mxu0 %v1286
  %2128 = vmatpush.msra.mxu0 %v1282
  %2129 = vmatpush.msra.mxu0 %v1278
  %2130 = vmatpush.msra.mxu0 %v1274
  %2131 = vmatmul.f32.gmra.mxu0 %v1953
  %v2132 = vpop.f32.mrf.mxu0
  %v2133 = vadd.f32 0.0, %v2132
  %2134 = vdwg.mxu0
  %2135 = vmatpush.msra.mxu0 %v1335
  %2136 = vmatpush.msra.mxu0 %v1331
  %2137 = vmatpush.msra.mxu0 %v1327
  %2138 = vmatpush.msra.mxu0 %v1323
  %2139 = vmatpush.msra.mxu0 %v1319
  %2140 = vmatpush.msra.mxu0 %v1315
  %2141 = vmatpush.msra.mxu0 %v1311
  %2142 = vmatpush.msra.mxu0 %v1307
  %2143 = vmatpush.msra.mxu0 %v1303
  %2144 = vmatpush.msra.mxu0 %v1299
  %2145 = vmatpush.msra.mxu0 %v1295
  %2146 = vmatpush.msra.mxu0 %v1291
  %2147 = vmatpush.msra.mxu0 %v1287
  %2148 = vmatpush.msra.mxu0 %v1283
  %2149 = vmatpush.msra.mxu0 %v1279
  %2150 = vmatpush.msra.mxu0 %v1275
  %2151 = vmatmul.f32.gmra.mxu0 %v1953
  %v2152 = vpop.f32.mrf.mxu0
  %v2153 = vadd.f32 0.0, %v2152
  %2154 = vdwg.mxu0
  %2155 = vmatpush.msra.mxu0 %v1336
  %2156 = vmatpush.msra.mxu0 %v1332
  %2157 = vmatpush.msra.mxu0 %v1328
  %2158 = vmatpush.msra.mxu0 %v1324
  %2159 = vmatpush.msra.mxu0 %v1320
  %2160 = vmatpush.msra.mxu0 %v1316
  %2161 = vmatpush.msra.mxu0 %v1312
  %2162 = vmatpush.msra.mxu0 %v1308
  %2163 = vmatpush.msra.mxu0 %v1304
  %2164 = vmatpush.msra.mxu0 %v1300
  %2165 = vmatpush.msra.mxu0 %v1296
  %2166 = vmatpush.msra.mxu0 %v1292
  %2167 = vmatpush.msra.mxu0 %v1288
  %2168 = vmatpush.msra.mxu0 %v1284
  %2169 = vmatpush.msra.mxu0 %v1280
  %2170 = vmatpush.msra.mxu0 %v1276
  %2171 = vmatmul.f32.gmra.mxu0 %v1953
  %v2172 = vpop.f32.mrf.mxu0
  %v2173 = vadd.f32 0.0, %v2172
  %2174 = vdwg.mxu0
  %2175 = vmatpush.msra.mxu0 %v1337
  %2176 = vmatpush.msra.mxu0 %v1333
  %2177 = vmatpush.msra.mxu0 %v1329
  %2178 = vmatpush.msra.mxu0 %v1325
  %2179 = vmatpush.msra.mxu0 %v1321
  %2180 = vmatpush.msra.mxu0 %v1317
  %2181 = vmatpush.msra.mxu0 %v1313
  %2182 = vmatpush.msra.mxu0 %v1309
  %2183 = vmatpush.msra.mxu0 %v1305
  %2184 = vmatpush.msra.mxu0 %v1301
  %2185 = vmatpush.msra.mxu0 %v1297
  %2186 = vmatpush.msra.mxu0 %v1293
  %2187 = vmatpush.msra.mxu0 %v1289
  %2188 = vmatpush.msra.mxu0 %v1285
  %2189 = vmatpush.msra.mxu0 %v1281
  %2190 = vmatpush.msra.mxu0 %v1277
  %2191 = vmatmul.f32.gmra.mxu0 %v1953
  %v2192 = vpop.f32.mrf.mxu0
  %v2193 = vadd.f32 0.0, %v2192
  %2194 = vdwg.mxu0
  %v2195 = vadd.f32 %v2111, %v2133
  %v2196 = vadd.f32 %v2112, %v2153
  %v2197 = vadd.f32 %v2113, %v2173
  %v2198 = vadd.f32 %v2114, %v2193
  %v2199 = vxor.u32 %v2195, 2147483648
  %v2200 = vmul.f32 %v2199, 1.442695
  %v2201 = vpow.pop %v2200
  %v2202 = vadd.f32 %v2201, 1.0
  %v2203 = vrcp.pop %v2202
  %v2204 = vmul.f32 %v2202, %v2203
  %v2205 = vsub.f32 1.0, %v2204
  %v2206 = vmul.f32 %v2203, %v2205
  %v2207 = vadd.f32 %v2203, %v2206
  %vm2208 = vweird.f32 %v2202
  %vm2209 = vweird.f32 %v2203
  %vm2210 = vmor %vm2208, %vm2209
  %v2211 = vsel %vm2210, %v2203, %v2207
  %v2212 = vand.u32 2147483647, %v2202
  %vm2213 = vcmp.eq.f32.partialorder %v2212, 8.507059e+37
  %v2214 = vand.u32 %v2202, 2147483648
  %v2215 = vor.u32 1.1754944e-38, %v2214
  %v2216 = vsel %vm2213, %v2215, %v2211
  %v2217 = vmul.f32 1.0, %v2216
  %v2218 = vxor.u32 %v2196, 2147483648
  %v2219 = vmul.f32 %v2218, 1.442695
  %v2220 = vpow.pop %v2219
  %v2221 = vadd.f32 %v2220, 1.0
  %v2222 = vrcp.pop %v2221
  %v2223 = vmul.f32 %v2221, %v2222
  %v2224 = vsub.f32 1.0, %v2223
  %v2225 = vmul.f32 %v2222, %v2224
  %v2226 = vadd.f32 %v2222, %v2225
  %vm2227 = vweird.f32 %v2221
  %vm2228 = vweird.f32 %v2222
  %vm2229 = vmor %vm2227, %vm2228
  %v2230 = vsel %vm2229, %v2222, %v2226
  %v2231 = vand.u32 2147483647, %v2221
  %vm2232 = vcmp.eq.f32.partialorder %v2231, 8.507059e+37
  %v2233 = vand.u32 %v2221, 2147483648
  %v2234 = vor.u32 1.1754944e-38, %v2233
  %v2235 = vsel %vm2232, %v2234, %v2230
  %v2236 = vmul.f32 1.0, %v2235
  %v2237 = vtanh.pop %v2197
  %v2238 = vxor.u32 %v2198, 2147483648
  %v2239 = vmul.f32 %v2238, 1.442695
  %v2240 = vpow.pop %v2239
  %v2241 = vadd.f32 %v2240, 1.0
  %v2242 = vrcp.pop %v2241
  %v2243 = vmul.f32 %v2241, %v2242
  %v2244 = vsub.f32 1.0, %v2243
  %v2245 = vmul.f32 %v2242, %v2244
  %v2246 = vadd.f32 %v2242, %v2245
  %vm2247 = vweird.f32 %v2241
  %vm2248 = vweird.f32 %v2242
  %vm2249 = vmor %vm2247, %vm2248
  %v2250 = vsel %vm2249, %v2242, %v2246
  %v2251 = vand.u32 2147483647, %v2241
  %vm2252 = vcmp.eq.f32.partialorder %v2251, 8.507059e+37
  %v2253 = vand.u32 %v2241, 2147483648
  %v2254 = vor.u32 1.1754944e-38, %v2253
  %v2255 = vsel %vm2252, %v2254, %v2250
  %v2256 = vmul.f32 1.0, %v2255
  %v2257 = vmul.f32 %v2236, %v1951
  %v2258 = vmul.f32 %v2217, %v2237
  %v2259 = vadd.f32 %v2257, %v2258
  %v2260 = vtanh.pop %v2259
  %v2261 = vmul.f32 %v2256, %v2260
  %s2262 = scalar_lea.vmem %s51, 40
  %2263 = vst [vmem:[%s2262] sm:$0xff] %v2261
  %s2264 = scalar_lea.vmem [#allocation6], 96
  %v2265 = vld [vmem:[%s2264] sm:$0xff]
  %v2266 = vld [vmem:[%s2264 + $0x8] sm:$0xff]
  %v2267 = vld [vmem:[%s2264 + $0x10] sm:$0xff]
  %v2268 = vld [vmem:[%s2264 + $0x18] sm:$0xff]
  %2269 = vmatpush.msra.mxu0 %v1270
  %2270 = vmatpush.msra.mxu0 %v1266
  %2271 = vmatpush.msra.mxu0 %v1262
  %2272 = vmatpush.msra.mxu0 %v1258
  %2273 = vmatpush.msra.mxu0 %v1254
  %2274 = vmatpush.msra.mxu0 %v1250
  %2275 = vmatpush.msra.mxu0 %v1246
  %2276 = vmatpush.msra.mxu0 %v1242
  %2277 = vmatpush.msra.mxu0 %v1238
  %2278 = vmatpush.msra.mxu0 %v1234
  %2279 = vmatpush.msra.mxu0 %v1230
  %2280 = vmatpush.msra.mxu0 %v1226
  %2281 = vmatpush.msra.mxu0 %v1222
  %2282 = vmatpush.msra.mxu0 %v1218
  %2283 = vmatpush.msra.mxu0 %v1214
  %2284 = vmatpush.msra.mxu0 %v1210
  %2285 = vmatmul.f32.gmra.mxu0 %v2107
  %v2286 = vpop.f32.mrf.mxu0
  %v2287 = vadd.f32 0.0, %v2286
  %2288 = vdwg.mxu0
  %2289 = vmatpush.msra.mxu0 %v1271
  %2290 = vmatpush.msra.mxu0 %v1267
  %2291 = vmatpush.msra.mxu0 %v1263
  %2292 = vmatpush.msra.mxu0 %v1259
  %2293 = vmatpush.msra.mxu0 %v1255
  %2294 = vmatpush.msra.mxu0 %v1251
  %2295 = vmatpush.msra.mxu0 %v1247
  %2296 = vmatpush.msra.mxu0 %v1243
  %2297 = vmatpush.msra.mxu0 %v1239
  %2298 = vmatpush.msra.mxu0 %v1235
  %2299 = vmatpush.msra.mxu0 %v1231
  %2300 = vmatpush.msra.mxu0 %v1227
  %2301 = vmatpush.msra.mxu0 %v1223
  %2302 = vmatpush.msra.mxu0 %v1219
  %2303 = vmatpush.msra.mxu0 %v1215
  %2304 = vmatpush.msra.mxu0 %v1211
  %2305 = vmatmul.f32.gmra.mxu0 %v2107
  %v2306 = vpop.f32.mrf.mxu0
  %v2307 = vadd.f32 0.0, %v2306
  %2308 = vdwg.mxu0
  %2309 = vmatpush.msra.mxu0 %v1272
  %2310 = vmatpush.msra.mxu0 %v1268
  %2311 = vmatpush.msra.mxu0 %v1264
  %2312 = vmatpush.msra.mxu0 %v1260
  %2313 = vmatpush.msra.mxu0 %v1256
  %2314 = vmatpush.msra.mxu0 %v1252
  %2315 = vmatpush.msra.mxu0 %v1248
  %2316 = vmatpush.msra.mxu0 %v1244
  %2317 = vmatpush.msra.mxu0 %v1240
  %2318 = vmatpush.msra.mxu0 %v1236
  %2319 = vmatpush.msra.mxu0 %v1232
  %2320 = vmatpush.msra.mxu0 %v1228
  %2321 = vmatpush.msra.mxu0 %v1224
  %2322 = vmatpush.msra.mxu0 %v1220
  %2323 = vmatpush.msra.mxu0 %v1216
  %2324 = vmatpush.msra.mxu0 %v1212
  %2325 = vmatmul.f32.gmra.mxu0 %v2107
  %v2326 = vpop.f32.mrf.mxu0
  %v2327 = vadd.f32 0.0, %v2326
  %2328 = vdwg.mxu0
  %2329 = vmatpush.msra.mxu0 %v1273
  %2330 = vmatpush.msra.mxu0 %v1269
  %2331 = vmatpush.msra.mxu0 %v1265
  %2332 = vmatpush.msra.mxu0 %v1261
  %2333 = vmatpush.msra.mxu0 %v1257
  %2334 = vmatpush.msra.mxu0 %v1253
  %2335 = vmatpush.msra.mxu0 %v1249
  %2336 = vmatpush.msra.mxu0 %v1245
  %2337 = vmatpush.msra.mxu0 %v1241
  %2338 = vmatpush.msra.mxu0 %v1237
  %2339 = vmatpush.msra.mxu0 %v1233
  %2340 = vmatpush.msra.mxu0 %v1229
  %2341 = vmatpush.msra.mxu0 %v1225
  %2342 = vmatpush.msra.mxu0 %v1221
  %2343 = vmatpush.msra.mxu0 %v1217
  %2344 = vmatpush.msra.mxu0 %v1213
  %2345 = vmatmul.f32.gmra.mxu0 %v2107
  %v2346 = vpop.f32.mrf.mxu0
  %v2347 = vadd.f32 0.0, %v2346
  %2348 = vdwg.mxu0
  %v2349 = vadd.f32 %v2265, %v2287
  %v2350 = vadd.f32 %v2266, %v2307
  %v2351 = vadd.f32 %v2267, %v2327
  %v2352 = vadd.f32 %v2268, %v2347
  %v2353 = vxor.u32 %v2349, 2147483648
  %v2354 = vmul.f32 %v2353, 1.442695
  %v2355 = vpow.pop %v2354
  %v2356 = vadd.f32 %v2355, 1.0
  %v2357 = vrcp.pop %v2356
  %v2358 = vmul.f32 %v2356, %v2357
  %v2359 = vsub.f32 1.0, %v2358
  %v2360 = vmul.f32 %v2357, %v2359
  %v2361 = vadd.f32 %v2357, %v2360
  %vm2362 = vweird.f32 %v2356
  %vm2363 = vweird.f32 %v2357
  %vm2364 = vmor %vm2362, %vm2363
  %v2365 = vsel %vm2364, %v2357, %v2361
  %v2366 = vand.u32 2147483647, %v2356
  %vm2367 = vcmp.eq.f32.partialorder %v2366, 8.507059e+37
  %v2368 = vand.u32 %v2356, 2147483648
  %v2369 = vor.u32 1.1754944e-38, %v2368
  %v2370 = vsel %vm2367, %v2369, %v2365
  %v2371 = vmul.f32 1.0, %v2370
  %v2372 = vxor.u32 %v2350, 2147483648
  %v2373 = vmul.f32 %v2372, 1.442695
  %v2374 = vpow.pop %v2373
  %v2375 = vadd.f32 %v2374, 1.0
  %v2376 = vrcp.pop %v2375
  %v2377 = vmul.f32 %v2375, %v2376
  %v2378 = vsub.f32 1.0, %v2377
  %v2379 = vmul.f32 %v2376, %v2378
  %v2380 = vadd.f32 %v2376, %v2379
  %vm2381 = vweird.f32 %v2375
  %vm2382 = vweird.f32 %v2376
  %vm2383 = vmor %vm2381, %vm2382
  %v2384 = vsel %vm2383, %v2376, %v2380
  %v2385 = vand.u32 2147483647, %v2375
  %vm2386 = vcmp.eq.f32.partialorder %v2385, 8.507059e+37
  %v2387 = vand.u32 %v2375, 2147483648
  %v2388 = vor.u32 1.1754944e-38, %v2387
  %v2389 = vsel %vm2386, %v2388, %v2384
  %v2390 = vmul.f32 1.0, %v2389
  %v2391 = vtanh.pop %v2351
  %v2392 = vxor.u32 %v2352, 2147483648
  %v2393 = vmul.f32 %v2392, 1.442695
  %v2394 = vpow.pop %v2393
  %v2395 = vadd.f32 %v2394, 1.0
  %v2396 = vrcp.pop %v2395
  %v2397 = vmul.f32 %v2395, %v2396
  %v2398 = vsub.f32 1.0, %v2397
  %v2399 = vmul.f32 %v2396, %v2398
  %v2400 = vadd.f32 %v2396, %v2399
  %vm2401 = vweird.f32 %v2395
  %vm2402 = vweird.f32 %v2396
  %vm2403 = vmor %vm2401, %vm2402
  %v2404 = vsel %vm2403, %v2396, %v2400
  %v2405 = vand.u32 2147483647, %v2395
  %vm2406 = vcmp.eq.f32.partialorder %v2405, 8.507059e+37
  %v2407 = vand.u32 %v2395, 2147483648
  %v2408 = vor.u32 1.1754944e-38, %v2407
  %v2409 = vsel %vm2406, %v2408, %v2404
  %v2410 = vmul.f32 1.0, %v2409
  %v2411 = vmul.f32 %v2390, %v2105
  %v2412 = vmul.f32 %v2371, %v2391
  %v2413 = vadd.f32 %v2411, %v2412
  %v2414 = vtanh.pop %v2413
  %v2415 = vmul.f32 %v2410, %v2414
  %s2416 = scalar_lea.vmem %s5, 24
  %2417 = vst [vmem:[%s2416] sm:$0xff] %v2415
  %s2418 = scalar_lea.vmem [#allocation7], 128
  %v2419 = vld [vmem:[%s2418] sm:$0xff]
  %v2420 = vld [vmem:[%s2418 + $0x8] sm:$0xff]
  %v2421 = vld [vmem:[%s2418 + $0x10] sm:$0xff]
  %v2422 = vld [vmem:[%s2418 + $0x18] sm:$0xff]
  %2423 = vmatpush.msra.mxu0 %v1334
  %2424 = vmatpush.msra.mxu0 %v1330
  %2425 = vmatpush.msra.mxu0 %v1326
  %2426 = vmatpush.msra.mxu0 %v1322
  %2427 = vmatpush.msra.mxu0 %v1318
  %2428 = vmatpush.msra.mxu0 %v1314
  %2429 = vmatpush.msra.mxu0 %v1310
  %2430 = vmatpush.msra.mxu0 %v1306
  %2431 = vmatpush.msra.mxu0 %v1302
  %2432 = vmatpush.msra.mxu0 %v1298
  %2433 = vmatpush.msra.mxu0 %v1294
  %2434 = vmatpush.msra.mxu0 %v1290
  %2435 = vmatpush.msra.mxu0 %v1286
  %2436 = vmatpush.msra.mxu0 %v1282
  %2437 = vmatpush.msra.mxu0 %v1278
  %2438 = vmatpush.msra.mxu0 %v1274
  %2439 = vmatmul.f32.gmra.mxu0 %v2261
  %v2440 = vpop.f32.mrf.mxu0
  %v2441 = vadd.f32 0.0, %v2440
  %2442 = vdwg.mxu0
  %2443 = vmatpush.msra.mxu0 %v1335
  %2444 = vmatpush.msra.mxu0 %v1331
  %2445 = vmatpush.msra.mxu0 %v1327
  %2446 = vmatpush.msra.mxu0 %v1323
  %2447 = vmatpush.msra.mxu0 %v1319
  %2448 = vmatpush.msra.mxu0 %v1315
  %2449 = vmatpush.msra.mxu0 %v1311
  %2450 = vmatpush.msra.mxu0 %v1307
  %2451 = vmatpush.msra.mxu0 %v1303
  %2452 = vmatpush.msra.mxu0 %v1299
  %2453 = vmatpush.msra.mxu0 %v1295
  %2454 = vmatpush.msra.mxu0 %v1291
  %2455 = vmatpush.msra.mxu0 %v1287
  %2456 = vmatpush.msra.mxu0 %v1283
  %2457 = vmatpush.msra.mxu0 %v1279
  %2458 = vmatpush.msra.mxu0 %v1275
  %2459 = vmatmul.f32.gmra.mxu0 %v2261
  %v2460 = vpop.f32.mrf.mxu0
  %v2461 = vadd.f32 0.0, %v2460
  %2462 = vdwg.mxu0
  %2463 = vmatpush.msra.mxu0 %v1336
  %2464 = vmatpush.msra.mxu0 %v1332
  %2465 = vmatpush.msra.mxu0 %v1328
  %2466 = vmatpush.msra.mxu0 %v1324
  %2467 = vmatpush.msra.mxu0 %v1320
  %2468 = vmatpush.msra.mxu0 %v1316
  %2469 = vmatpush.msra.mxu0 %v1312
  %2470 = vmatpush.msra.mxu0 %v1308
  %2471 = vmatpush.msra.mxu0 %v1304
  %2472 = vmatpush.msra.mxu0 %v1300
  %2473 = vmatpush.msra.mxu0 %v1296
  %2474 = vmatpush.msra.mxu0 %v1292
  %2475 = vmatpush.msra.mxu0 %v1288
  %2476 = vmatpush.msra.mxu0 %v1284
  %2477 = vmatpush.msra.mxu0 %v1280
  %2478 = vmatpush.msra.mxu0 %v1276
  %2479 = vmatmul.f32.gmra.mxu0 %v2261
  %v2480 = vpop.f32.mrf.mxu0
  %v2481 = vadd.f32 0.0, %v2480
  %2482 = vdwg.mxu0
  %2483 = vmatpush.msra.mxu0 %v1337
  %2484 = vmatpush.msra.mxu0 %v1333
  %2485 = vmatpush.msra.mxu0 %v1329
  %2486 = vmatpush.msra.mxu0 %v1325
  %2487 = vmatpush.msra.mxu0 %v1321
  %2488 = vmatpush.msra.mxu0 %v1317
  %2489 = vmatpush.msra.mxu0 %v1313
  %2490 = vmatpush.msra.mxu0 %v1309
  %2491 = vmatpush.msra.mxu0 %v1305
  %2492 = vmatpush.msra.mxu0 %v1301
  %2493 = vmatpush.msra.mxu0 %v1297
  %2494 = vmatpush.msra.mxu0 %v1293
  %2495 = vmatpush.msra.mxu0 %v1289
  %2496 = vmatpush.msra.mxu0 %v1285
  %2497 = vmatpush.msra.mxu0 %v1281
  %2498 = vmatpush.msra.mxu0 %v1277
  %2499 = vmatmul.f32.gmra.mxu0 %v2261
  %v2500 = vpop.f32.mrf.mxu0
  %v2501 = vadd.f32 0.0, %v2500
  %2502 = vdwg.mxu0
  %v2503 = vadd.f32 %v2419, %v2441
  %v2504 = vadd.f32 %v2420, %v2461
  %v2505 = vadd.f32 %v2421, %v2481
  %v2506 = vadd.f32 %v2422, %v2501
  %v2507 = vxor.u32 %v2503, 2147483648
  %v2508 = vmul.f32 %v2507, 1.442695
  %v2509 = vpow.pop %v2508
  %v2510 = vadd.f32 %v2509, 1.0
  %v2511 = vrcp.pop %v2510
  %v2512 = vmul.f32 %v2510, %v2511
  %v2513 = vsub.f32 1.0, %v2512
  %v2514 = vmul.f32 %v2511, %v2513
  %v2515 = vadd.f32 %v2511, %v2514
  %vm2516 = vweird.f32 %v2510
  %vm2517 = vweird.f32 %v2511
  %vm2518 = vmor %vm2516, %vm2517
  %v2519 = vsel %vm2518, %v2511, %v2515
  %v2520 = vand.u32 2147483647, %v2510
  %vm2521 = vcmp.eq.f32.partialorder %v2520, 8.507059e+37
  %v2522 = vand.u32 %v2510, 2147483648
  %v2523 = vor.u32 1.1754944e-38, %v2522
  %v2524 = vsel %vm2521, %v2523, %v2519
  %v2525 = vmul.f32 1.0, %v2524
  %v2526 = vxor.u32 %v2504, 2147483648
  %v2527 = vmul.f32 %v2526, 1.442695
  %v2528 = vpow.pop %v2527
  %v2529 = vadd.f32 %v2528, 1.0
  %v2530 = vrcp.pop %v2529
  %v2531 = vmul.f32 %v2529, %v2530
  %v2532 = vsub.f32 1.0, %v2531
  %v2533 = vmul.f32 %v2530, %v2532
  %v2534 = vadd.f32 %v2530, %v2533
  %vm2535 = vweird.f32 %v2529
  %vm2536 = vweird.f32 %v2530
  %vm2537 = vmor %vm2535, %vm2536
  %v2538 = vsel %vm2537, %v2530, %v2534
  %v2539 = vand.u32 2147483647, %v2529
  %vm2540 = vcmp.eq.f32.partialorder %v2539, 8.507059e+37
  %v2541 = vand.u32 %v2529, 2147483648
  %v2542 = vor.u32 1.1754944e-38, %v2541
  %v2543 = vsel %vm2540, %v2542, %v2538
  %v2544 = vmul.f32 1.0, %v2543
  %v2545 = vtanh.pop %v2505
  %v2546 = vxor.u32 %v2506, 2147483648
  %v2547 = vmul.f32 %v2546, 1.442695
  %v2548 = vpow.pop %v2547
  %v2549 = vadd.f32 %v2548, 1.0
  %v2550 = vrcp.pop %v2549
  %v2551 = vmul.f32 %v2549, %v2550
  %v2552 = vsub.f32 1.0, %v2551
  %v2553 = vmul.f32 %v2550, %v2552
  %v2554 = vadd.f32 %v2550, %v2553
  %vm2555 = vweird.f32 %v2549
  %vm2556 = vweird.f32 %v2550
  %vm2557 = vmor %vm2555, %vm2556
  %v2558 = vsel %vm2557, %v2550, %v2554
  %v2559 = vand.u32 2147483647, %v2549
  %vm2560 = vcmp.eq.f32.partialorder %v2559, 8.507059e+37
  %v2561 = vand.u32 %v2549, 2147483648
  %v2562 = vor.u32 1.1754944e-38, %v2561
  %v2563 = vsel %vm2560, %v2562, %v2558
  %v2564 = vmul.f32 1.0, %v2563
  %v2565 = vmul.f32 %v2544, %v2259
  %v2566 = vmul.f32 %v2525, %v2545
  %v2567 = vadd.f32 %v2565, %v2566
  %v2568 = vtanh.pop %v2567
  %v2569 = vmul.f32 %v2564, %v2568
  %s2570 = scalar_lea.vmem %s51, 32
  %2571 = vst [vmem:[%s2570] sm:$0xff] %v2569
  %s2572 = scalar_lea.vmem [#allocation6], 128
  %v2573 = vld [vmem:[%s2572] sm:$0xff]
  %v2574 = vld [vmem:[%s2572 + $0x8] sm:$0xff]
  %v2575 = vld [vmem:[%s2572 + $0x10] sm:$0xff]
  %v2576 = vld [vmem:[%s2572 + $0x18] sm:$0xff]
  %2577 = vmatpush.msra.mxu0 %v1270
  %2578 = vmatpush.msra.mxu0 %v1266
  %2579 = vmatpush.msra.mxu0 %v1262
  %2580 = vmatpush.msra.mxu0 %v1258
  %2581 = vmatpush.msra.mxu0 %v1254
  %2582 = vmatpush.msra.mxu0 %v1250
  %2583 = vmatpush.msra.mxu0 %v1246
  %2584 = vmatpush.msra.mxu0 %v1242
  %2585 = vmatpush.msra.mxu0 %v1238
  %2586 = vmatpush.msra.mxu0 %v1234
  %2587 = vmatpush.msra.mxu0 %v1230
  %2588 = vmatpush.msra.mxu0 %v1226
  %2589 = vmatpush.msra.mxu0 %v1222
  %2590 = vmatpush.msra.mxu0 %v1218
  %2591 = vmatpush.msra.mxu0 %v1214
  %2592 = vmatpush.msra.mxu0 %v1210
  %2593 = vmatmul.f32.gmra.mxu0 %v2415
  %v2594 = vpop.f32.mrf.mxu0
  %v2595 = vadd.f32 0.0, %v2594
  %2596 = vdwg.mxu0
  %2597 = vmatpush.msra.mxu0 %v1271
  %2598 = vmatpush.msra.mxu0 %v1267
  %2599 = vmatpush.msra.mxu0 %v1263
  %2600 = vmatpush.msra.mxu0 %v1259
  %2601 = vmatpush.msra.mxu0 %v1255
  %2602 = vmatpush.msra.mxu0 %v1251
  %2603 = vmatpush.msra.mxu0 %v1247
  %2604 = vmatpush.msra.mxu0 %v1243
  %2605 = vmatpush.msra.mxu0 %v1239
  %2606 = vmatpush.msra.mxu0 %v1235
  %2607 = vmatpush.msra.mxu0 %v1231
  %2608 = vmatpush.msra.mxu0 %v1227
  %2609 = vmatpush.msra.mxu0 %v1223
  %2610 = vmatpush.msra.mxu0 %v1219
  %2611 = vmatpush.msra.mxu0 %v1215
  %2612 = vmatpush.msra.mxu0 %v1211
  %2613 = vmatmul.f32.gmra.mxu0 %v2415
  %v2614 = vpop.f32.mrf.mxu0
  %v2615 = vadd.f32 0.0, %v2614
  %2616 = vdwg.mxu0
  %2617 = vmatpush.msra.mxu0 %v1272
  %2618 = vmatpush.msra.mxu0 %v1268
  %2619 = vmatpush.msra.mxu0 %v1264
  %2620 = vmatpush.msra.mxu0 %v1260
  %2621 = vmatpush.msra.mxu0 %v1256
  %2622 = vmatpush.msra.mxu0 %v1252
  %2623 = vmatpush.msra.mxu0 %v1248
  %2624 = vmatpush.msra.mxu0 %v1244
  %2625 = vmatpush.msra.mxu0 %v1240
  %2626 = vmatpush.msra.mxu0 %v1236
  %2627 = vmatpush.msra.mxu0 %v1232
  %2628 = vmatpush.msra.mxu0 %v1228
  %2629 = vmatpush.msra.mxu0 %v1224
  %2630 = vmatpush.msra.mxu0 %v1220
  %2631 = vmatpush.msra.mxu0 %v1216
  %2632 = vmatpush.msra.mxu0 %v1212
  %2633 = vmatmul.f32.gmra.mxu0 %v2415
  %v2634 = vpop.f32.mrf.mxu0
  %v2635 = vadd.f32 0.0, %v2634
  %2636 = vdwg.mxu0
  %2637 = vmatpush.msra.mxu0 %v1273
  %2638 = vmatpush.msra.mxu0 %v1269
  %2639 = vmatpush.msra.mxu0 %v1265
  %2640 = vmatpush.msra.mxu0 %v1261
  %2641 = vmatpush.msra.mxu0 %v1257
  %2642 = vmatpush.msra.mxu0 %v1253
  %2643 = vmatpush.msra.mxu0 %v1249
  %2644 = vmatpush.msra.mxu0 %v1245
  %2645 = vmatpush.msra.mxu0 %v1241
  %2646 = vmatpush.msra.mxu0 %v1237
  %2647 = vmatpush.msra.mxu0 %v1233
  %2648 = vmatpush.msra.mxu0 %v1229
  %2649 = vmatpush.msra.mxu0 %v1225
  %2650 = vmatpush.msra.mxu0 %v1221
  %2651 = vmatpush.msra.mxu0 %v1217
  %2652 = vmatpush.msra.mxu0 %v1213
  %2653 = vmatmul.f32.gmra.mxu0 %v2415
  %v2654 = vpop.f32.mrf.mxu0
  %v2655 = vadd.f32 0.0, %v2654
  %2656 = vdwg.mxu0
  %v2657 = vadd.f32 %v2573, %v2595
  %v2658 = vadd.f32 %v2574, %v2615
  %v2659 = vadd.f32 %v2575, %v2635
  %v2660 = vadd.f32 %v2576, %v2655
  %v2661 = vxor.u32 %v2657, 2147483648
  %v2662 = vmul.f32 %v2661, 1.442695
  %v2663 = vpow.pop %v2662
  %v2664 = vadd.f32 %v2663, 1.0
  %v2665 = vrcp.pop %v2664
  %v2666 = vmul.f32 %v2664, %v2665
  %v2667 = vsub.f32 1.0, %v2666
  %v2668 = vmul.f32 %v2665, %v2667
  %v2669 = vadd.f32 %v2665, %v2668
  %vm2670 = vweird.f32 %v2664
  %vm2671 = vweird.f32 %v2665
  %vm2672 = vmor %vm2670, %vm2671
  %v2673 = vsel %vm2672, %v2665, %v2669
  %v2674 = vand.u32 2147483647, %v2664
  %vm2675 = vcmp.eq.f32.partialorder %v2674, 8.507059e+37
  %v2676 = vand.u32 %v2664, 2147483648
  %v2677 = vor.u32 1.1754944e-38, %v2676
  %v2678 = vsel %vm2675, %v2677, %v2673
  %v2679 = vmul.f32 1.0, %v2678
  %v2680 = vxor.u32 %v2658, 2147483648
  %v2681 = vmul.f32 %v2680, 1.442695
  %v2682 = vpow.pop %v2681
  %v2683 = vadd.f32 %v2682, 1.0
  %v2684 = vrcp.pop %v2683
  %v2685 = vmul.f32 %v2683, %v2684
  %v2686 = vsub.f32 1.0, %v2685
  %v2687 = vmul.f32 %v2684, %v2686
  %v2688 = vadd.f32 %v2684, %v2687
  %vm2689 = vweird.f32 %v2683
  %vm2690 = vweird.f32 %v2684
  %vm2691 = vmor %vm2689, %vm2690
  %v2692 = vsel %vm2691, %v2684, %v2688
  %v2693 = vand.u32 2147483647, %v2683
  %vm2694 = vcmp.eq.f32.partialorder %v2693, 8.507059e+37
  %v2695 = vand.u32 %v2683, 2147483648
  %v2696 = vor.u32 1.1754944e-38, %v2695
  %v2697 = vsel %vm2694, %v2696, %v2692
  %v2698 = vmul.f32 1.0, %v2697
  %v2699 = vtanh.pop %v2659
  %v2700 = vxor.u32 %v2660, 2147483648
  %v2701 = vmul.f32 %v2700, 1.442695
  %v2702 = vpow.pop %v2701
  %v2703 = vadd.f32 %v2702, 1.0
  %v2704 = vrcp.pop %v2703
  %v2705 = vmul.f32 %v2703, %v2704
  %v2706 = vsub.f32 1.0, %v2705
  %v2707 = vmul.f32 %v2704, %v2706
  %v2708 = vadd.f32 %v2704, %v2707
  %vm2709 = vweird.f32 %v2703
  %vm2710 = vweird.f32 %v2704
  %vm2711 = vmor %vm2709, %vm2710
  %v2712 = vsel %vm2711, %v2704, %v2708
  %v2713 = vand.u32 2147483647, %v2703
  %vm2714 = vcmp.eq.f32.partialorder %v2713, 8.507059e+37
  %v2715 = vand.u32 %v2703, 2147483648
  %v2716 = vor.u32 1.1754944e-38, %v2715
  %v2717 = vsel %vm2714, %v2716, %v2712
  %v2718 = vmul.f32 1.0, %v2717
  %v2719 = vmul.f32 %v2698, %v2413
  %v2720 = vmul.f32 %v2679, %v2699
  %v2721 = vadd.f32 %v2719, %v2720
  %v2722 = vtanh.pop %v2721
  %v2723 = vmul.f32 %v2718, %v2722
  %s2724 = scalar_lea.vmem %s5, 32
  %2725 = vst [vmem:[%s2724] sm:$0xff] %v2723
  %s2726 = scalar_lea.vmem [#allocation7], 96
  %v2727 = vld [vmem:[%s2726] sm:$0xff]
  %v2728 = vld [vmem:[%s2726 + $0x8] sm:$0xff]
  %v2729 = vld [vmem:[%s2726 + $0x10] sm:$0xff]
  %v2730 = vld [vmem:[%s2726 + $0x18] sm:$0xff]
  %2731 = vmatpush.msra.mxu0 %v1334
  %2732 = vmatpush.msra.mxu0 %v1330
  %2733 = vmatpush.msra.mxu0 %v1326
  %2734 = vmatpush.msra.mxu0 %v1322
  %2735 = vmatpush.msra.mxu0 %v1318
  %2736 = vmatpush.msra.mxu0 %v1314
  %2737 = vmatpush.msra.mxu0 %v1310
  %2738 = vmatpush.msra.mxu0 %v1306
  %2739 = vmatpush.msra.mxu0 %v1302
  %2740 = vmatpush.msra.mxu0 %v1298
  %2741 = vmatpush.msra.mxu0 %v1294
  %2742 = vmatpush.msra.mxu0 %v1290
  %2743 = vmatpush.msra.mxu0 %v1286
  %2744 = vmatpush.msra.mxu0 %v1282
  %2745 = vmatpush.msra.mxu0 %v1278
  %2746 = vmatpush.msra.mxu0 %v1274
  %2747 = vmatmul.f32.gmra.mxu0 %v2569
  %v2748 = vpop.f32.mrf.mxu0
  %v2749 = vadd.f32 0.0, %v2748
  %2750 = vdwg.mxu0
  %2751 = vmatpush.msra.mxu0 %v1335
  %2752 = vmatpush.msra.mxu0 %v1331
  %2753 = vmatpush.msra.mxu0 %v1327
  %2754 = vmatpush.msra.mxu0 %v1323
  %2755 = vmatpush.msra.mxu0 %v1319
  %2756 = vmatpush.msra.mxu0 %v1315
  %2757 = vmatpush.msra.mxu0 %v1311
  %2758 = vmatpush.msra.mxu0 %v1307
  %2759 = vmatpush.msra.mxu0 %v1303
  %2760 = vmatpush.msra.mxu0 %v1299
  %2761 = vmatpush.msra.mxu0 %v1295
  %2762 = vmatpush.msra.mxu0 %v1291
  %2763 = vmatpush.msra.mxu0 %v1287
  %2764 = vmatpush.msra.mxu0 %v1283
  %2765 = vmatpush.msra.mxu0 %v1279
  %2766 = vmatpush.msra.mxu0 %v1275
  %2767 = vmatmul.f32.gmra.mxu0 %v2569
  %v2768 = vpop.f32.mrf.mxu0
  %v2769 = vadd.f32 0.0, %v2768
  %2770 = vdwg.mxu0
  %2771 = vmatpush.msra.mxu0 %v1336
  %2772 = vmatpush.msra.mxu0 %v1332
  %2773 = vmatpush.msra.mxu0 %v1328
  %2774 = vmatpush.msra.mxu0 %v1324
  %2775 = vmatpush.msra.mxu0 %v1320
  %2776 = vmatpush.msra.mxu0 %v1316
  %2777 = vmatpush.msra.mxu0 %v1312
  %2778 = vmatpush.msra.mxu0 %v1308
  %2779 = vmatpush.msra.mxu0 %v1304
  %2780 = vmatpush.msra.mxu0 %v1300
  %2781 = vmatpush.msra.mxu0 %v1296
  %2782 = vmatpush.msra.mxu0 %v1292
  %2783 = vmatpush.msra.mxu0 %v1288
  %2784 = vmatpush.msra.mxu0 %v1284
  %2785 = vmatpush.msra.mxu0 %v1280
  %2786 = vmatpush.msra.mxu0 %v1276
  %2787 = vmatmul.f32.gmra.mxu0 %v2569
  %v2788 = vpop.f32.mrf.mxu0
  %v2789 = vadd.f32 0.0, %v2788
  %2790 = vdwg.mxu0
  %2791 = vmatpush.msra.mxu0 %v1337
  %2792 = vmatpush.msra.mxu0 %v1333
  %2793 = vmatpush.msra.mxu0 %v1329
  %2794 = vmatpush.msra.mxu0 %v1325
  %2795 = vmatpush.msra.mxu0 %v1321
  %2796 = vmatpush.msra.mxu0 %v1317
  %2797 = vmatpush.msra.mxu0 %v1313
  %2798 = vmatpush.msra.mxu0 %v1309
  %2799 = vmatpush.msra.mxu0 %v1305
  %2800 = vmatpush.msra.mxu0 %v1301
  %2801 = vmatpush.msra.mxu0 %v1297
  %2802 = vmatpush.msra.mxu0 %v1293
  %2803 = vmatpush.msra.mxu0 %v1289
  %2804 = vmatpush.msra.mxu0 %v1285
  %2805 = vmatpush.msra.mxu0 %v1281
  %2806 = vmatpush.msra.mxu0 %v1277
  %2807 = vmatmul.f32.gmra.mxu0 %v2569
  %v2808 = vpop.f32.mrf.mxu0
  %v2809 = vadd.f32 0.0, %v2808
  %2810 = vdwg.mxu0
  %v2811 = vadd.f32 %v2727, %v2749
  %v2812 = vadd.f32 %v2728, %v2769
  %v2813 = vadd.f32 %v2729, %v2789
  %v2814 = vadd.f32 %v2730, %v2809
  %v2815 = vxor.u32 %v2811, 2147483648
  %v2816 = vmul.f32 %v2815, 1.442695
  %v2817 = vpow.pop %v2816
  %v2818 = vadd.f32 %v2817, 1.0
  %v2819 = vrcp.pop %v2818
  %v2820 = vmul.f32 %v2818, %v2819
  %v2821 = vsub.f32 1.0, %v2820
  %v2822 = vmul.f32 %v2819, %v2821
  %v2823 = vadd.f32 %v2819, %v2822
  %vm2824 = vweird.f32 %v2818
  %vm2825 = vweird.f32 %v2819
  %vm2826 = vmor %vm2824, %vm2825
  %v2827 = vsel %vm2826, %v2819, %v2823
  %v2828 = vand.u32 2147483647, %v2818
  %vm2829 = vcmp.eq.f32.partialorder %v2828, 8.507059e+37
  %v2830 = vand.u32 %v2818, 2147483648
  %v2831 = vor.u32 1.1754944e-38, %v2830
  %v2832 = vsel %vm2829, %v2831, %v2827
  %v2833 = vmul.f32 1.0, %v2832
  %v2834 = vxor.u32 %v2812, 2147483648
  %v2835 = vmul.f32 %v2834, 1.442695
  %v2836 = vpow.pop %v2835
  %v2837 = vadd.f32 %v2836, 1.0
  %v2838 = vrcp.pop %v2837
  %v2839 = vmul.f32 %v2837, %v2838
  %v2840 = vsub.f32 1.0, %v2839
  %v2841 = vmul.f32 %v2838, %v2840
  %v2842 = vadd.f32 %v2838, %v2841
  %vm2843 = vweird.f32 %v2837
  %vm2844 = vweird.f32 %v2838
  %vm2845 = vmor %vm2843, %vm2844
  %v2846 = vsel %vm2845, %v2838, %v2842
  %v2847 = vand.u32 2147483647, %v2837
  %vm2848 = vcmp.eq.f32.partialorder %v2847, 8.507059e+37
  %v2849 = vand.u32 %v2837, 2147483648
  %v2850 = vor.u32 1.1754944e-38, %v2849
  %v2851 = vsel %vm2848, %v2850, %v2846
  %v2852 = vmul.f32 1.0, %v2851
  %v2853 = vtanh.pop %v2813
  %v2854 = vxor.u32 %v2814, 2147483648
  %v2855 = vmul.f32 %v2854, 1.442695
  %v2856 = vpow.pop %v2855
  %v2857 = vadd.f32 %v2856, 1.0
  %v2858 = vrcp.pop %v2857
  %v2859 = vmul.f32 %v2857, %v2858
  %v2860 = vsub.f32 1.0, %v2859
  %v2861 = vmul.f32 %v2858, %v2860
  %v2862 = vadd.f32 %v2858, %v2861
  %vm2863 = vweird.f32 %v2857
  %vm2864 = vweird.f32 %v2858
  %vm2865 = vmor %vm2863, %vm2864
  %v2866 = vsel %vm2865, %v2858, %v2862
  %v2867 = vand.u32 2147483647, %v2857
  %vm2868 = vcmp.eq.f32.partialorder %v2867, 8.507059e+37
  %v2869 = vand.u32 %v2857, 2147483648
  %v2870 = vor.u32 1.1754944e-38, %v2869
  %v2871 = vsel %vm2868, %v2870, %v2866
  %v2872 = vmul.f32 1.0, %v2871
  %v2873 = vmul.f32 %v2852, %v2567
  %v2874 = vmul.f32 %v2833, %v2853
  %v2875 = vadd.f32 %v2873, %v2874
  %v2876 = vtanh.pop %v2875
  %v2877 = vmul.f32 %v2872, %v2876
  %s2878 = scalar_lea.vmem %s51, 24
  %2879 = vst [vmem:[%s2878] sm:$0xff] %v2877
  %s2880 = scalar_lea.vmem [#allocation6], 160
  %v2881 = vld [vmem:[%s2880] sm:$0xff]
  %v2882 = vld [vmem:[%s2880 + $0x8] sm:$0xff]
  %v2883 = vld [vmem:[%s2880 + $0x10] sm:$0xff]
  %v2884 = vld [vmem:[%s2880 + $0x18] sm:$0xff]
  %2885 = vmatpush.msra.mxu0 %v1270
  %2886 = vmatpush.msra.mxu0 %v1266
  %2887 = vmatpush.msra.mxu0 %v1262
  %2888 = vmatpush.msra.mxu0 %v1258
  %2889 = vmatpush.msra.mxu0 %v1254
  %2890 = vmatpush.msra.mxu0 %v1250
  %2891 = vmatpush.msra.mxu0 %v1246
  %2892 = vmatpush.msra.mxu0 %v1242
  %2893 = vmatpush.msra.mxu0 %v1238
  %2894 = vmatpush.msra.mxu0 %v1234
  %2895 = vmatpush.msra.mxu0 %v1230
  %2896 = vmatpush.msra.mxu0 %v1226
  %2897 = vmatpush.msra.mxu0 %v1222
  %2898 = vmatpush.msra.mxu0 %v1218
  %2899 = vmatpush.msra.mxu0 %v1214
  %2900 = vmatpush.msra.mxu0 %v1210
  %2901 = vmatmul.f32.gmra.mxu0 %v2723
  %v2902 = vpop.f32.mrf.mxu0
  %v2903 = vadd.f32 0.0, %v2902
  %2904 = vdwg.mxu0
  %2905 = vmatpush.msra.mxu0 %v1271
  %2906 = vmatpush.msra.mxu0 %v1267
  %2907 = vmatpush.msra.mxu0 %v1263
  %2908 = vmatpush.msra.mxu0 %v1259
  %2909 = vmatpush.msra.mxu0 %v1255
  %2910 = vmatpush.msra.mxu0 %v1251
  %2911 = vmatpush.msra.mxu0 %v1247
  %2912 = vmatpush.msra.mxu0 %v1243
  %2913 = vmatpush.msra.mxu0 %v1239
  %2914 = vmatpush.msra.mxu0 %v1235
  %2915 = vmatpush.msra.mxu0 %v1231
  %2916 = vmatpush.msra.mxu0 %v1227
  %2917 = vmatpush.msra.mxu0 %v1223
  %2918 = vmatpush.msra.mxu0 %v1219
  %2919 = vmatpush.msra.mxu0 %v1215
  %2920 = vmatpush.msra.mxu0 %v1211
  %2921 = vmatmul.f32.gmra.mxu0 %v2723
  %v2922 = vpop.f32.mrf.mxu0
  %v2923 = vadd.f32 0.0, %v2922
  %2924 = vdwg.mxu0
  %2925 = vmatpush.msra.mxu0 %v1272
  %2926 = vmatpush.msra.mxu0 %v1268
  %2927 = vmatpush.msra.mxu0 %v1264
  %2928 = vmatpush.msra.mxu0 %v1260
  %2929 = vmatpush.msra.mxu0 %v1256
  %2930 = vmatpush.msra.mxu0 %v1252
  %2931 = vmatpush.msra.mxu0 %v1248
  %2932 = vmatpush.msra.mxu0 %v1244
  %2933 = vmatpush.msra.mxu0 %v1240
  %2934 = vmatpush.msra.mxu0 %v1236
  %2935 = vmatpush.msra.mxu0 %v1232
  %2936 = vmatpush.msra.mxu0 %v1228
  %2937 = vmatpush.msra.mxu0 %v1224
  %2938 = vmatpush.msra.mxu0 %v1220
  %2939 = vmatpush.msra.mxu0 %v1216
  %2940 = vmatpush.msra.mxu0 %v1212
  %2941 = vmatmul.f32.gmra.mxu0 %v2723
  %v2942 = vpop.f32.mrf.mxu0
  %v2943 = vadd.f32 0.0, %v2942
  %2944 = vdwg.mxu0
  %2945 = vmatpush.msra.mxu0 %v1273
  %2946 = vmatpush.msra.mxu0 %v1269
  %2947 = vmatpush.msra.mxu0 %v1265
  %2948 = vmatpush.msra.mxu0 %v1261
  %2949 = vmatpush.msra.mxu0 %v1257
  %2950 = vmatpush.msra.mxu0 %v1253
  %2951 = vmatpush.msra.mxu0 %v1249
  %2952 = vmatpush.msra.mxu0 %v1245
  %2953 = vmatpush.msra.mxu0 %v1241
  %2954 = vmatpush.msra.mxu0 %v1237
  %2955 = vmatpush.msra.mxu0 %v1233
  %2956 = vmatpush.msra.mxu0 %v1229
  %2957 = vmatpush.msra.mxu0 %v1225
  %2958 = vmatpush.msra.mxu0 %v1221
  %2959 = vmatpush.msra.mxu0 %v1217
  %2960 = vmatpush.msra.mxu0 %v1213
  %2961 = vmatmul.f32.gmra.mxu0 %v2723
  %v2962 = vpop.f32.mrf.mxu0
  %v2963 = vadd.f32 0.0, %v2962
  %2964 = vdwg.mxu0
  %v2965 = vadd.f32 %v2881, %v2903
  %v2966 = vadd.f32 %v2882, %v2923
  %v2967 = vadd.f32 %v2883, %v2943
  %v2968 = vadd.f32 %v2884, %v2963
  %v2969 = vxor.u32 %v2965, 2147483648
  %v2970 = vmul.f32 %v2969, 1.442695
  %v2971 = vpow.pop %v2970
  %v2972 = vadd.f32 %v2971, 1.0
  %v2973 = vrcp.pop %v2972
  %v2974 = vmul.f32 %v2972, %v2973
  %v2975 = vsub.f32 1.0, %v2974
  %v2976 = vmul.f32 %v2973, %v2975
  %v2977 = vadd.f32 %v2973, %v2976
  %vm2978 = vweird.f32 %v2972
  %vm2979 = vweird.f32 %v2973
  %vm2980 = vmor %vm2978, %vm2979
  %v2981 = vsel %vm2980, %v2973, %v2977
  %v2982 = vand.u32 2147483647, %v2972
  %vm2983 = vcmp.eq.f32.partialorder %v2982, 8.507059e+37
  %v2984 = vand.u32 %v2972, 2147483648
  %v2985 = vor.u32 1.1754944e-38, %v2984
  %v2986 = vsel %vm2983, %v2985, %v2981
  %v2987 = vmul.f32 1.0, %v2986
  %v2988 = vxor.u32 %v2966, 2147483648
  %v2989 = vmul.f32 %v2988, 1.442695
  %v2990 = vpow.pop %v2989
  %v2991 = vadd.f32 %v2990, 1.0
  %v2992 = vrcp.pop %v2991
  %v2993 = vmul.f32 %v2991, %v2992
  %v2994 = vsub.f32 1.0, %v2993
  %v2995 = vmul.f32 %v2992, %v2994
  %v2996 = vadd.f32 %v2992, %v2995
  %vm2997 = vweird.f32 %v2991
  %vm2998 = vweird.f32 %v2992
  %vm2999 = vmor %vm2997, %vm2998
  %v3000 = vsel %vm2999, %v2992, %v2996
  %v3001 = vand.u32 2147483647, %v2991
  %vm3002 = vcmp.eq.f32.partialorder %v3001, 8.507059e+37
  %v3003 = vand.u32 %v2991, 2147483648
  %v3004 = vor.u32 1.1754944e-38, %v3003
  %v3005 = vsel %vm3002, %v3004, %v3000
  %v3006 = vmul.f32 1.0, %v3005
  %v3007 = vtanh.pop %v2967
  %v3008 = vxor.u32 %v2968, 2147483648
  %v3009 = vmul.f32 %v3008, 1.442695
  %v3010 = vpow.pop %v3009
  %v3011 = vadd.f32 %v3010, 1.0
  %v3012 = vrcp.pop %v3011
  %v3013 = vmul.f32 %v3011, %v3012
  %v3014 = vsub.f32 1.0, %v3013
  %v3015 = vmul.f32 %v3012, %v3014
  %v3016 = vadd.f32 %v3012, %v3015
  %vm3017 = vweird.f32 %v3011
  %vm3018 = vweird.f32 %v3012
  %vm3019 = vmor %vm3017, %vm3018
  %v3020 = vsel %vm3019, %v3012, %v3016
  %v3021 = vand.u32 2147483647, %v3011
  %vm3022 = vcmp.eq.f32.partialorder %v3021, 8.507059e+37
  %v3023 = vand.u32 %v3011, 2147483648
  %v3024 = vor.u32 1.1754944e-38, %v3023
  %v3025 = vsel %vm3022, %v3024, %v3020
  %v3026 = vmul.f32 1.0, %v3025
  %v3027 = vmul.f32 %v3006, %v2721
  %v3028 = vmul.f32 %v2987, %v3007
  %v3029 = vadd.f32 %v3027, %v3028
  %v3030 = vtanh.pop %v3029
  %v3031 = vmul.f32 %v3026, %v3030
  %s3032 = scalar_lea.vmem %s5, 40
  %3033 = vst [vmem:[%s3032] sm:$0xff] %v3031
  %s3034 = scalar_lea.vmem [#allocation7], 64
  %v3035 = vld [vmem:[%s3034] sm:$0xff]
  %v3036 = vld [vmem:[%s3034 + $0x8] sm:$0xff]
  %v3037 = vld [vmem:[%s3034 + $0x10] sm:$0xff]
  %v3038 = vld [vmem:[%s3034 + $0x18] sm:$0xff]
  %3039 = vmatpush.msra.mxu0 %v1334
  %3040 = vmatpush.msra.mxu0 %v1330
  %3041 = vmatpush.msra.mxu0 %v1326
  %3042 = vmatpush.msra.mxu0 %v1322
  %3043 = vmatpush.msra.mxu0 %v1318
  %3044 = vmatpush.msra.mxu0 %v1314
  %3045 = vmatpush.msra.mxu0 %v1310
  %3046 = vmatpush.msra.mxu0 %v1306
  %3047 = vmatpush.msra.mxu0 %v1302
  %3048 = vmatpush.msra.mxu0 %v1298
  %3049 = vmatpush.msra.mxu0 %v1294
  %3050 = vmatpush.msra.mxu0 %v1290
  %3051 = vmatpush.msra.mxu0 %v1286
  %3052 = vmatpush.msra.mxu0 %v1282
  %3053 = vmatpush.msra.mxu0 %v1278
  %3054 = vmatpush.msra.mxu0 %v1274
  %3055 = vmatmul.f32.gmra.mxu0 %v2877
  %v3056 = vpop.f32.mrf.mxu0
  %v3057 = vadd.f32 0.0, %v3056
  %3058 = vdwg.mxu0
  %3059 = vmatpush.msra.mxu0 %v1335
  %3060 = vmatpush.msra.mxu0 %v1331
  %3061 = vmatpush.msra.mxu0 %v1327
  %3062 = vmatpush.msra.mxu0 %v1323
  %3063 = vmatpush.msra.mxu0 %v1319
  %3064 = vmatpush.msra.mxu0 %v1315
  %3065 = vmatpush.msra.mxu0 %v1311
  %3066 = vmatpush.msra.mxu0 %v1307
  %3067 = vmatpush.msra.mxu0 %v1303
  %3068 = vmatpush.msra.mxu0 %v1299
  %3069 = vmatpush.msra.mxu0 %v1295
  %3070 = vmatpush.msra.mxu0 %v1291
  %3071 = vmatpush.msra.mxu0 %v1287
  %3072 = vmatpush.msra.mxu0 %v1283
  %3073 = vmatpush.msra.mxu0 %v1279
  %3074 = vmatpush.msra.mxu0 %v1275
  %3075 = vmatmul.f32.gmra.mxu0 %v2877
  %v3076 = vpop.f32.mrf.mxu0
  %v3077 = vadd.f32 0.0, %v3076
  %3078 = vdwg.mxu0
  %3079 = vmatpush.msra.mxu0 %v1336
  %3080 = vmatpush.msra.mxu0 %v1332
  %3081 = vmatpush.msra.mxu0 %v1328
  %3082 = vmatpush.msra.mxu0 %v1324
  %3083 = vmatpush.msra.mxu0 %v1320
  %3084 = vmatpush.msra.mxu0 %v1316
  %3085 = vmatpush.msra.mxu0 %v1312
  %3086 = vmatpush.msra.mxu0 %v1308
  %3087 = vmatpush.msra.mxu0 %v1304
  %3088 = vmatpush.msra.mxu0 %v1300
  %3089 = vmatpush.msra.mxu0 %v1296
  %3090 = vmatpush.msra.mxu0 %v1292
  %3091 = vmatpush.msra.mxu0 %v1288
  %3092 = vmatpush.msra.mxu0 %v1284
  %3093 = vmatpush.msra.mxu0 %v1280
  %3094 = vmatpush.msra.mxu0 %v1276
  %3095 = vmatmul.f32.gmra.mxu0 %v2877
  %v3096 = vpop.f32.mrf.mxu0
  %v3097 = vadd.f32 0.0, %v3096
  %3098 = vdwg.mxu0
  %3099 = vmatpush.msra.mxu0 %v1337
  %3100 = vmatpush.msra.mxu0 %v1333
  %3101 = vmatpush.msra.mxu0 %v1329
  %3102 = vmatpush.msra.mxu0 %v1325
  %3103 = vmatpush.msra.mxu0 %v1321
  %3104 = vmatpush.msra.mxu0 %v1317
  %3105 = vmatpush.msra.mxu0 %v1313
  %3106 = vmatpush.msra.mxu0 %v1309
  %3107 = vmatpush.msra.mxu0 %v1305
  %3108 = vmatpush.msra.mxu0 %v1301
  %3109 = vmatpush.msra.mxu0 %v1297
  %3110 = vmatpush.msra.mxu0 %v1293
  %3111 = vmatpush.msra.mxu0 %v1289
  %3112 = vmatpush.msra.mxu0 %v1285
  %3113 = vmatpush.msra.mxu0 %v1281
  %3114 = vmatpush.msra.mxu0 %v1277
  %3115 = vmatmul.f32.gmra.mxu0 %v2877
  %v3116 = vpop.f32.mrf.mxu0
  %v3117 = vadd.f32 0.0, %v3116
  %3118 = vdwg.mxu0
  %v3119 = vadd.f32 %v3035, %v3057
  %v3120 = vadd.f32 %v3036, %v3077
  %v3121 = vadd.f32 %v3037, %v3097
  %v3122 = vadd.f32 %v3038, %v3117
  %v3123 = vxor.u32 %v3119, 2147483648
  %v3124 = vmul.f32 %v3123, 1.442695
  %v3125 = vpow.pop %v3124
  %v3126 = vadd.f32 %v3125, 1.0
  %v3127 = vrcp.pop %v3126
  %v3128 = vmul.f32 %v3126, %v3127
  %v3129 = vsub.f32 1.0, %v3128
  %v3130 = vmul.f32 %v3127, %v3129
  %v3131 = vadd.f32 %v3127, %v3130
  %vm3132 = vweird.f32 %v3126
  %vm3133 = vweird.f32 %v3127
  %vm3134 = vmor %vm3132, %vm3133
  %v3135 = vsel %vm3134, %v3127, %v3131
  %v3136 = vand.u32 2147483647, %v3126
  %vm3137 = vcmp.eq.f32.partialorder %v3136, 8.507059e+37
  %v3138 = vand.u32 %v3126, 2147483648
  %v3139 = vor.u32 1.1754944e-38, %v3138
  %v3140 = vsel %vm3137, %v3139, %v3135
  %v3141 = vmul.f32 1.0, %v3140
  %v3142 = vxor.u32 %v3120, 2147483648
  %v3143 = vmul.f32 %v3142, 1.442695
  %v3144 = vpow.pop %v3143
  %v3145 = vadd.f32 %v3144, 1.0
  %v3146 = vrcp.pop %v3145
  %v3147 = vmul.f32 %v3145, %v3146
  %v3148 = vsub.f32 1.0, %v3147
  %v3149 = vmul.f32 %v3146, %v3148
  %v3150 = vadd.f32 %v3146, %v3149
  %vm3151 = vweird.f32 %v3145
  %vm3152 = vweird.f32 %v3146
  %vm3153 = vmor %vm3151, %vm3152
  %v3154 = vsel %vm3153, %v3146, %v3150
  %v3155 = vand.u32 2147483647, %v3145
  %vm3156 = vcmp.eq.f32.partialorder %v3155, 8.507059e+37
  %v3157 = vand.u32 %v3145, 2147483648
  %v3158 = vor.u32 1.1754944e-38, %v3157
  %v3159 = vsel %vm3156, %v3158, %v3154
  %v3160 = vmul.f32 1.0, %v3159
  %v3161 = vtanh.pop %v3121
  %v3162 = vxor.u32 %v3122, 2147483648
  %v3163 = vmul.f32 %v3162, 1.442695
  %v3164 = vpow.pop %v3163
  %v3165 = vadd.f32 %v3164, 1.0
  %v3166 = vrcp.pop %v3165
  %v3167 = vmul.f32 %v3165, %v3166
  %v3168 = vsub.f32 1.0, %v3167
  %v3169 = vmul.f32 %v3166, %v3168
  %v3170 = vadd.f32 %v3166, %v3169
  %vm3171 = vweird.f32 %v3165
  %vm3172 = vweird.f32 %v3166
  %vm3173 = vmor %vm3171, %vm3172
  %v3174 = vsel %vm3173, %v3166, %v3170
  %v3175 = vand.u32 2147483647, %v3165
  %vm3176 = vcmp.eq.f32.partialorder %v3175, 8.507059e+37
  %v3177 = vand.u32 %v3165, 2147483648
  %v3178 = vor.u32 1.1754944e-38, %v3177
  %v3179 = vsel %vm3176, %v3178, %v3174
  %v3180 = vmul.f32 1.0, %v3179
  %v3181 = vmul.f32 %v3160, %v2875
  %v3182 = vmul.f32 %v3141, %v3161
  %v3183 = vadd.f32 %v3181, %v3182
  %v3184 = vtanh.pop %v3183
  %v3185 = vmul.f32 %v3180, %v3184
  %s3186 = scalar_lea.vmem %s51, 16
  %3187 = vst [vmem:[%s3186] sm:$0xff] %v3185
  %s3188 = scalar_lea.vmem [#allocation6], 192
  %v3189 = vld [vmem:[%s3188] sm:$0xff]
  %v3190 = vld [vmem:[%s3188 + $0x8] sm:$0xff]
  %v3191 = vld [vmem:[%s3188 + $0x10] sm:$0xff]
  %v3192 = vld [vmem:[%s3188 + $0x18] sm:$0xff]
  %3193 = vmatpush.msra.mxu0 %v1270
  %3194 = vmatpush.msra.mxu0 %v1266
  %3195 = vmatpush.msra.mxu0 %v1262
  %3196 = vmatpush.msra.mxu0 %v1258
  %3197 = vmatpush.msra.mxu0 %v1254
  %3198 = vmatpush.msra.mxu0 %v1250
  %3199 = vmatpush.msra.mxu0 %v1246
  %3200 = vmatpush.msra.mxu0 %v1242
  %3201 = vmatpush.msra.mxu0 %v1238
  %3202 = vmatpush.msra.mxu0 %v1234
  %3203 = vmatpush.msra.mxu0 %v1230
  %3204 = vmatpush.msra.mxu0 %v1226
  %3205 = vmatpush.msra.mxu0 %v1222
  %3206 = vmatpush.msra.mxu0 %v1218
  %3207 = vmatpush.msra.mxu0 %v1214
  %3208 = vmatpush.msra.mxu0 %v1210
  %3209 = vmatmul.f32.gmra.mxu0 %v3031
  %v3210 = vpop.f32.mrf.mxu0
  %v3211 = vadd.f32 0.0, %v3210
  %3212 = vdwg.mxu0
  %3213 = vmatpush.msra.mxu0 %v1271
  %3214 = vmatpush.msra.mxu0 %v1267
  %3215 = vmatpush.msra.mxu0 %v1263
  %3216 = vmatpush.msra.mxu0 %v1259
  %3217 = vmatpush.msra.mxu0 %v1255
  %3218 = vmatpush.msra.mxu0 %v1251
  %3219 = vmatpush.msra.mxu0 %v1247
  %3220 = vmatpush.msra.mxu0 %v1243
  %3221 = vmatpush.msra.mxu0 %v1239
  %3222 = vmatpush.msra.mxu0 %v1235
  %3223 = vmatpush.msra.mxu0 %v1231
  %3224 = vmatpush.msra.mxu0 %v1227
  %3225 = vmatpush.msra.mxu0 %v1223
  %3226 = vmatpush.msra.mxu0 %v1219
  %3227 = vmatpush.msra.mxu0 %v1215
  %3228 = vmatpush.msra.mxu0 %v1211
  %3229 = vmatmul.f32.gmra.mxu0 %v3031
  %v3230 = vpop.f32.mrf.mxu0
  %v3231 = vadd.f32 0.0, %v3230
  %3232 = vdwg.mxu0
  %3233 = vmatpush.msra.mxu0 %v1272
  %3234 = vmatpush.msra.mxu0 %v1268
  %3235 = vmatpush.msra.mxu0 %v1264
  %3236 = vmatpush.msra.mxu0 %v1260
  %3237 = vmatpush.msra.mxu0 %v1256
  %3238 = vmatpush.msra.mxu0 %v1252
  %3239 = vmatpush.msra.mxu0 %v1248
  %3240 = vmatpush.msra.mxu0 %v1244
  %3241 = vmatpush.msra.mxu0 %v1240
  %3242 = vmatpush.msra.mxu0 %v1236
  %3243 = vmatpush.msra.mxu0 %v1232
  %3244 = vmatpush.msra.mxu0 %v1228
  %3245 = vmatpush.msra.mxu0 %v1224
  %3246 = vmatpush.msra.mxu0 %v1220
  %3247 = vmatpush.msra.mxu0 %v1216
  %3248 = vmatpush.msra.mxu0 %v1212
  %3249 = vmatmul.f32.gmra.mxu0 %v3031
  %v3250 = vpop.f32.mrf.mxu0
  %v3251 = vadd.f32 0.0, %v3250
  %3252 = vdwg.mxu0
  %3253 = vmatpush.msra.mxu0 %v1273
  %3254 = vmatpush.msra.mxu0 %v1269
  %3255 = vmatpush.msra.mxu0 %v1265
  %3256 = vmatpush.msra.mxu0 %v1261
  %3257 = vmatpush.msra.mxu0 %v1257
  %3258 = vmatpush.msra.mxu0 %v1253
  %3259 = vmatpush.msra.mxu0 %v1249
  %3260 = vmatpush.msra.mxu0 %v1245
  %3261 = vmatpush.msra.mxu0 %v1241
  %3262 = vmatpush.msra.mxu0 %v1237
  %3263 = vmatpush.msra.mxu0 %v1233
  %3264 = vmatpush.msra.mxu0 %v1229
  %3265 = vmatpush.msra.mxu0 %v1225
  %3266 = vmatpush.msra.mxu0 %v1221
  %3267 = vmatpush.msra.mxu0 %v1217
  %3268 = vmatpush.msra.mxu0 %v1213
  %3269 = vmatmul.f32.gmra.mxu0 %v3031
  %v3270 = vpop.f32.mrf.mxu0
  %v3271 = vadd.f32 0.0, %v3270
  %3272 = vdwg.mxu0
  %v3273 = vadd.f32 %v3189, %v3211
  %v3274 = vadd.f32 %v3190, %v3231
  %v3275 = vadd.f32 %v3191, %v3251
  %v3276 = vadd.f32 %v3192, %v3271
  %v3277 = vxor.u32 %v3273, 2147483648
  %v3278 = vmul.f32 %v3277, 1.442695
  %v3279 = vpow.pop %v3278
  %v3280 = vadd.f32 %v3279, 1.0
  %v3281 = vrcp.pop %v3280
  %v3282 = vmul.f32 %v3280, %v3281
  %v3283 = vsub.f32 1.0, %v3282
  %v3284 = vmul.f32 %v3281, %v3283
  %v3285 = vadd.f32 %v3281, %v3284
  %vm3286 = vweird.f32 %v3280
  %vm3287 = vweird.f32 %v3281
  %vm3288 = vmor %vm3286, %vm3287
  %v3289 = vsel %vm3288, %v3281, %v3285
  %v3290 = vand.u32 2147483647, %v3280
  %vm3291 = vcmp.eq.f32.partialorder %v3290, 8.507059e+37
  %v3292 = vand.u32 %v3280, 2147483648
  %v3293 = vor.u32 1.1754944e-38, %v3292
  %v3294 = vsel %vm3291, %v3293, %v3289
  %v3295 = vmul.f32 1.0, %v3294
  %v3296 = vxor.u32 %v3274, 2147483648
  %v3297 = vmul.f32 %v3296, 1.442695
  %v3298 = vpow.pop %v3297
  %v3299 = vadd.f32 %v3298, 1.0
  %v3300 = vrcp.pop %v3299
  %v3301 = vmul.f32 %v3299, %v3300
  %v3302 = vsub.f32 1.0, %v3301
  %v3303 = vmul.f32 %v3300, %v3302
  %v3304 = vadd.f32 %v3300, %v3303
  %vm3305 = vweird.f32 %v3299
  %vm3306 = vweird.f32 %v3300
  %vm3307 = vmor %vm3305, %vm3306
  %v3308 = vsel %vm3307, %v3300, %v3304
  %v3309 = vand.u32 2147483647, %v3299
  %vm3310 = vcmp.eq.f32.partialorder %v3309, 8.507059e+37
  %v3311 = vand.u32 %v3299, 2147483648
  %v3312 = vor.u32 1.1754944e-38, %v3311
  %v3313 = vsel %vm3310, %v3312, %v3308
  %v3314 = vmul.f32 1.0, %v3313
  %v3315 = vtanh.pop %v3275
  %v3316 = vxor.u32 %v3276, 2147483648
  %v3317 = vmul.f32 %v3316, 1.442695
  %v3318 = vpow.pop %v3317
  %v3319 = vadd.f32 %v3318, 1.0
  %v3320 = vrcp.pop %v3319
  %v3321 = vmul.f32 %v3319, %v3320
  %v3322 = vsub.f32 1.0, %v3321
  %v3323 = vmul.f32 %v3320, %v3322
  %v3324 = vadd.f32 %v3320, %v3323
  %vm3325 = vweird.f32 %v3319
  %vm3326 = vweird.f32 %v3320
  %vm3327 = vmor %vm3325, %vm3326
  %v3328 = vsel %vm3327, %v3320, %v3324
  %v3329 = vand.u32 2147483647, %v3319
  %vm3330 = vcmp.eq.f32.partialorder %v3329, 8.507059e+37
  %v3331 = vand.u32 %v3319, 2147483648
  %v3332 = vor.u32 1.1754944e-38, %v3331
  %v3333 = vsel %vm3330, %v3332, %v3328
  %v3334 = vmul.f32 1.0, %v3333
  %v3335 = vmul.f32 %v3314, %v3029
  %v3336 = vmul.f32 %v3295, %v3315
  %v3337 = vadd.f32 %v3335, %v3336
  %v3338 = vtanh.pop %v3337
  %v3339 = vmul.f32 %v3334, %v3338
  %s3340 = scalar_lea.vmem %s5, 48
  %3341 = vst [vmem:[%s3340] sm:$0xff] %v3339
  %s3342 = scalar_lea.vmem [#allocation7], 32
  %v3343 = vld [vmem:[%s3342] sm:$0xff]
  %v3344 = vld [vmem:[%s3342 + $0x8] sm:$0xff]
  %v3345 = vld [vmem:[%s3342 + $0x10] sm:$0xff]
  %v3346 = vld [vmem:[%s3342 + $0x18] sm:$0xff]
  %3347 = vmatpush.msra.mxu0 %v1334
  %3348 = vmatpush.msra.mxu0 %v1330
  %3349 = vmatpush.msra.mxu0 %v1326
  %3350 = vmatpush.msra.mxu0 %v1322
  %3351 = vmatpush.msra.mxu0 %v1318
  %3352 = vmatpush.msra.mxu0 %v1314
  %3353 = vmatpush.msra.mxu0 %v1310
  %3354 = vmatpush.msra.mxu0 %v1306
  %3355 = vmatpush.msra.mxu0 %v1302
  %3356 = vmatpush.msra.mxu0 %v1298
  %3357 = vmatpush.msra.mxu0 %v1294
  %3358 = vmatpush.msra.mxu0 %v1290
  %3359 = vmatpush.msra.mxu0 %v1286
  %3360 = vmatpush.msra.mxu0 %v1282
  %3361 = vmatpush.msra.mxu0 %v1278
  %3362 = vmatpush.msra.mxu0 %v1274
  %3363 = vmatmul.f32.gmra.mxu0 %v3185
  %v3364 = vpop.f32.mrf.mxu0
  %v3365 = vadd.f32 0.0, %v3364
  %3366 = vdwg.mxu0
  %3367 = vmatpush.msra.mxu0 %v1335
  %3368 = vmatpush.msra.mxu0 %v1331
  %3369 = vmatpush.msra.mxu0 %v1327
  %3370 = vmatpush.msra.mxu0 %v1323
  %3371 = vmatpush.msra.mxu0 %v1319
  %3372 = vmatpush.msra.mxu0 %v1315
  %3373 = vmatpush.msra.mxu0 %v1311
  %3374 = vmatpush.msra.mxu0 %v1307
  %3375 = vmatpush.msra.mxu0 %v1303
  %3376 = vmatpush.msra.mxu0 %v1299
  %3377 = vmatpush.msra.mxu0 %v1295
  %3378 = vmatpush.msra.mxu0 %v1291
  %3379 = vmatpush.msra.mxu0 %v1287
  %3380 = vmatpush.msra.mxu0 %v1283
  %3381 = vmatpush.msra.mxu0 %v1279
  %3382 = vmatpush.msra.mxu0 %v1275
  %3383 = vmatmul.f32.gmra.mxu0 %v3185
  %v3384 = vpop.f32.mrf.mxu0
  %v3385 = vadd.f32 0.0, %v3384
  %3386 = vdwg.mxu0
  %3387 = vmatpush.msra.mxu0 %v1336
  %3388 = vmatpush.msra.mxu0 %v1332
  %3389 = vmatpush.msra.mxu0 %v1328
  %3390 = vmatpush.msra.mxu0 %v1324
  %3391 = vmatpush.msra.mxu0 %v1320
  %3392 = vmatpush.msra.mxu0 %v1316
  %3393 = vmatpush.msra.mxu0 %v1312
  %3394 = vmatpush.msra.mxu0 %v1308
  %3395 = vmatpush.msra.mxu0 %v1304
  %3396 = vmatpush.msra.mxu0 %v1300
  %3397 = vmatpush.msra.mxu0 %v1296
  %3398 = vmatpush.msra.mxu0 %v1292
  %3399 = vmatpush.msra.mxu0 %v1288
  %3400 = vmatpush.msra.mxu0 %v1284
  %3401 = vmatpush.msra.mxu0 %v1280
  %3402 = vmatpush.msra.mxu0 %v1276
  %3403 = vmatmul.f32.gmra.mxu0 %v3185
  %v3404 = vpop.f32.mrf.mxu0
  %v3405 = vadd.f32 0.0, %v3404
  %3406 = vdwg.mxu0
  %3407 = vmatpush.msra.mxu0 %v1337
  %3408 = vmatpush.msra.mxu0 %v1333
  %3409 = vmatpush.msra.mxu0 %v1329
  %3410 = vmatpush.msra.mxu0 %v1325
  %3411 = vmatpush.msra.mxu0 %v1321
  %3412 = vmatpush.msra.mxu0 %v1317
  %3413 = vmatpush.msra.mxu0 %v1313
  %3414 = vmatpush.msra.mxu0 %v1309
  %3415 = vmatpush.msra.mxu0 %v1305
  %3416 = vmatpush.msra.mxu0 %v1301
  %3417 = vmatpush.msra.mxu0 %v1297
  %3418 = vmatpush.msra.mxu0 %v1293
  %3419 = vmatpush.msra.mxu0 %v1289
  %3420 = vmatpush.msra.mxu0 %v1285
  %3421 = vmatpush.msra.mxu0 %v1281
  %3422 = vmatpush.msra.mxu0 %v1277
  %3423 = vmatmul.f32.gmra.mxu0 %v3185
  %v3424 = vpop.f32.mrf.mxu0
  %v3425 = vadd.f32 0.0, %v3424
  %3426 = vdwg.mxu0
  %v3427 = vadd.f32 %v3343, %v3365
  %v3428 = vadd.f32 %v3344, %v3385
  %v3429 = vadd.f32 %v3345, %v3405
  %v3430 = vadd.f32 %v3346, %v3425
  %v3431 = vxor.u32 %v3427, 2147483648
  %v3432 = vmul.f32 %v3431, 1.442695
  %v3433 = vpow.pop %v3432
  %v3434 = vadd.f32 %v3433, 1.0
  %v3435 = vrcp.pop %v3434
  %v3436 = vmul.f32 %v3434, %v3435
  %v3437 = vsub.f32 1.0, %v3436
  %v3438 = vmul.f32 %v3435, %v3437
  %v3439 = vadd.f32 %v3435, %v3438
  %vm3440 = vweird.f32 %v3434
  %vm3441 = vweird.f32 %v3435
  %vm3442 = vmor %vm3440, %vm3441
  %v3443 = vsel %vm3442, %v3435, %v3439
  %v3444 = vand.u32 2147483647, %v3434
  %vm3445 = vcmp.eq.f32.partialorder %v3444, 8.507059e+37
  %v3446 = vand.u32 %v3434, 2147483648
  %v3447 = vor.u32 1.1754944e-38, %v3446
  %v3448 = vsel %vm3445, %v3447, %v3443
  %v3449 = vmul.f32 1.0, %v3448
  %v3450 = vxor.u32 %v3428, 2147483648
  %v3451 = vmul.f32 %v3450, 1.442695
  %v3452 = vpow.pop %v3451
  %v3453 = vadd.f32 %v3452, 1.0
  %v3454 = vrcp.pop %v3453
  %v3455 = vmul.f32 %v3453, %v3454
  %v3456 = vsub.f32 1.0, %v3455
  %v3457 = vmul.f32 %v3454, %v3456
  %v3458 = vadd.f32 %v3454, %v3457
  %vm3459 = vweird.f32 %v3453
  %vm3460 = vweird.f32 %v3454
  %vm3461 = vmor %vm3459, %vm3460
  %v3462 = vsel %vm3461, %v3454, %v3458
  %v3463 = vand.u32 2147483647, %v3453
  %vm3464 = vcmp.eq.f32.partialorder %v3463, 8.507059e+37
  %v3465 = vand.u32 %v3453, 2147483648
  %v3466 = vor.u32 1.1754944e-38, %v3465
  %v3467 = vsel %vm3464, %v3466, %v3462
  %v3468 = vmul.f32 1.0, %v3467
  %v3469 = vtanh.pop %v3429
  %v3470 = vxor.u32 %v3430, 2147483648
  %v3471 = vmul.f32 %v3470, 1.442695
  %v3472 = vpow.pop %v3471
  %v3473 = vadd.f32 %v3472, 1.0
  %v3474 = vrcp.pop %v3473
  %v3475 = vmul.f32 %v3473, %v3474
  %v3476 = vsub.f32 1.0, %v3475
  %v3477 = vmul.f32 %v3474, %v3476
  %v3478 = vadd.f32 %v3474, %v3477
  %vm3479 = vweird.f32 %v3473
  %vm3480 = vweird.f32 %v3474
  %vm3481 = vmor %vm3479, %vm3480
  %v3482 = vsel %vm3481, %v3474, %v3478
  %v3483 = vand.u32 2147483647, %v3473
  %vm3484 = vcmp.eq.f32.partialorder %v3483, 8.507059e+37
  %v3485 = vand.u32 %v3473, 2147483648
  %v3486 = vor.u32 1.1754944e-38, %v3485
  %v3487 = vsel %vm3484, %v3486, %v3482
  %v3488 = vmul.f32 1.0, %v3487
  %v3489 = vmul.f32 %v3468, %v3183
  %v3490 = vmul.f32 %v3449, %v3469
  %v3491 = vadd.f32 %v3489, %v3490
  %v3492 = vtanh.pop %v3491
  %v3493 = vmul.f32 %v3488, %v3492
  %s3494 = scalar_lea.vmem %s51, 8
  %3495 = vst [vmem:[%s3494] sm:$0xff] %v3493
  %s3496 = scalar_lea.vmem [#allocation6], 224
  %v3497 = vld [vmem:[%s3496] sm:$0xff]
  %v3498 = vld [vmem:[%s3496 + $0x8] sm:$0xff]
  %v3499 = vld [vmem:[%s3496 + $0x10] sm:$0xff]
  %v3500 = vld [vmem:[%s3496 + $0x18] sm:$0xff]
  %3501 = vmatpush.msra.mxu0 %v1270
  %3502 = vmatpush.msra.mxu0 %v1266
  %3503 = vmatpush.msra.mxu0 %v1262
  %3504 = vmatpush.msra.mxu0 %v1258
  %3505 = vmatpush.msra.mxu0 %v1254
  %3506 = vmatpush.msra.mxu0 %v1250
  %3507 = vmatpush.msra.mxu0 %v1246
  %3508 = vmatpush.msra.mxu0 %v1242
  %3509 = vmatpush.msra.mxu0 %v1238
  %3510 = vmatpush.msra.mxu0 %v1234
  %3511 = vmatpush.msra.mxu0 %v1230
  %3512 = vmatpush.msra.mxu0 %v1226
  %3513 = vmatpush.msra.mxu0 %v1222
  %3514 = vmatpush.msra.mxu0 %v1218
  %3515 = vmatpush.msra.mxu0 %v1214
  %3516 = vmatpush.msra.mxu0 %v1210
  %3517 = vmatmul.f32.gmra.mxu0 %v3339
  %v3518 = vpop.f32.mrf.mxu0
  %v3519 = vadd.f32 0.0, %v3518
  %3520 = vdwg.mxu0
  %3521 = vmatpush.msra.mxu0 %v1271
  %3522 = vmatpush.msra.mxu0 %v1267
  %3523 = vmatpush.msra.mxu0 %v1263
  %3524 = vmatpush.msra.mxu0 %v1259
  %3525 = vmatpush.msra.mxu0 %v1255
  %3526 = vmatpush.msra.mxu0 %v1251
  %3527 = vmatpush.msra.mxu0 %v1247
  %3528 = vmatpush.msra.mxu0 %v1243
  %3529 = vmatpush.msra.mxu0 %v1239
  %3530 = vmatpush.msra.mxu0 %v1235
  %3531 = vmatpush.msra.mxu0 %v1231
  %3532 = vmatpush.msra.mxu0 %v1227
  %3533 = vmatpush.msra.mxu0 %v1223
  %3534 = vmatpush.msra.mxu0 %v1219
  %3535 = vmatpush.msra.mxu0 %v1215
  %3536 = vmatpush.msra.mxu0 %v1211
  %3537 = vmatmul.f32.gmra.mxu0 %v3339
  %v3538 = vpop.f32.mrf.mxu0
  %v3539 = vadd.f32 0.0, %v3538
  %3540 = vdwg.mxu0
  %3541 = vmatpush.msra.mxu0 %v1272
  %3542 = vmatpush.msra.mxu0 %v1268
  %3543 = vmatpush.msra.mxu0 %v1264
  %3544 = vmatpush.msra.mxu0 %v1260
  %3545 = vmatpush.msra.mxu0 %v1256
  %3546 = vmatpush.msra.mxu0 %v1252
  %3547 = vmatpush.msra.mxu0 %v1248
  %3548 = vmatpush.msra.mxu0 %v1244
  %3549 = vmatpush.msra.mxu0 %v1240
  %3550 = vmatpush.msra.mxu0 %v1236
  %3551 = vmatpush.msra.mxu0 %v1232
  %3552 = vmatpush.msra.mxu0 %v1228
  %3553 = vmatpush.msra.mxu0 %v1224
  %3554 = vmatpush.msra.mxu0 %v1220
  %3555 = vmatpush.msra.mxu0 %v1216
  %3556 = vmatpush.msra.mxu0 %v1212
  %3557 = vmatmul.f32.gmra.mxu0 %v3339
  %v3558 = vpop.f32.mrf.mxu0
  %v3559 = vadd.f32 0.0, %v3558
  %3560 = vdwg.mxu0
  %3561 = vmatpush.msra.mxu0 %v1273
  %3562 = vmatpush.msra.mxu0 %v1269
  %3563 = vmatpush.msra.mxu0 %v1265
  %3564 = vmatpush.msra.mxu0 %v1261
  %3565 = vmatpush.msra.mxu0 %v1257
  %3566 = vmatpush.msra.mxu0 %v1253
  %3567 = vmatpush.msra.mxu0 %v1249
  %3568 = vmatpush.msra.mxu0 %v1245
  %3569 = vmatpush.msra.mxu0 %v1241
  %3570 = vmatpush.msra.mxu0 %v1237
  %3571 = vmatpush.msra.mxu0 %v1233
  %3572 = vmatpush.msra.mxu0 %v1229
  %3573 = vmatpush.msra.mxu0 %v1225
  %3574 = vmatpush.msra.mxu0 %v1221
  %3575 = vmatpush.msra.mxu0 %v1217
  %3576 = vmatpush.msra.mxu0 %v1213
  %3577 = vmatmul.f32.gmra.mxu0 %v3339
  %v3578 = vpop.f32.mrf.mxu0
  %v3579 = vadd.f32 0.0, %v3578
  %3580 = vdwg.mxu0
  %v3581 = vadd.f32 %v3497, %v3519
  %v3582 = vadd.f32 %v3498, %v3539
  %v3583 = vadd.f32 %v3499, %v3559
  %v3584 = vadd.f32 %v3500, %v3579
  %v3585 = vxor.u32 %v3581, 2147483648
  %v3586 = vmul.f32 %v3585, 1.442695
  %v3587 = vpow.pop %v3586
  %v3588 = vadd.f32 %v3587, 1.0
  %v3589 = vrcp.pop %v3588
  %v3590 = vmul.f32 %v3588, %v3589
  %v3591 = vsub.f32 1.0, %v3590
  %v3592 = vmul.f32 %v3589, %v3591
  %v3593 = vadd.f32 %v3589, %v3592
  %vm3594 = vweird.f32 %v3588
  %vm3595 = vweird.f32 %v3589
  %vm3596 = vmor %vm3594, %vm3595
  %v3597 = vsel %vm3596, %v3589, %v3593
  %v3598 = vand.u32 2147483647, %v3588
  %vm3599 = vcmp.eq.f32.partialorder %v3598, 8.507059e+37
  %v3600 = vand.u32 %v3588, 2147483648
  %v3601 = vor.u32 1.1754944e-38, %v3600
  %v3602 = vsel %vm3599, %v3601, %v3597
  %v3603 = vmul.f32 1.0, %v3602
  %v3604 = vxor.u32 %v3582, 2147483648
  %v3605 = vmul.f32 %v3604, 1.442695
  %v3606 = vpow.pop %v3605
  %v3607 = vadd.f32 %v3606, 1.0
  %v3608 = vrcp.pop %v3607
  %v3609 = vmul.f32 %v3607, %v3608
  %v3610 = vsub.f32 1.0, %v3609
  %v3611 = vmul.f32 %v3608, %v3610
  %v3612 = vadd.f32 %v3608, %v3611
  %vm3613 = vweird.f32 %v3607
  %vm3614 = vweird.f32 %v3608
  %vm3615 = vmor %vm3613, %vm3614
  %v3616 = vsel %vm3615, %v3608, %v3612
  %v3617 = vand.u32 2147483647, %v3607
  %vm3618 = vcmp.eq.f32.partialorder %v3617, 8.507059e+37
  %v3619 = vand.u32 %v3607, 2147483648
  %v3620 = vor.u32 1.1754944e-38, %v3619
  %v3621 = vsel %vm3618, %v3620, %v3616
  %v3622 = vmul.f32 1.0, %v3621
  %v3623 = vtanh.pop %v3583
  %v3624 = vxor.u32 %v3584, 2147483648
  %v3625 = vmul.f32 %v3624, 1.442695
  %v3626 = vpow.pop %v3625
  %v3627 = vadd.f32 %v3626, 1.0
  %v3628 = vrcp.pop %v3627
  %v3629 = vmul.f32 %v3627, %v3628
  %v3630 = vsub.f32 1.0, %v3629
  %v3631 = vmul.f32 %v3628, %v3630
  %v3632 = vadd.f32 %v3628, %v3631
  %vm3633 = vweird.f32 %v3627
  %vm3634 = vweird.f32 %v3628
  %vm3635 = vmor %vm3633, %vm3634
  %v3636 = vsel %vm3635, %v3628, %v3632
  %v3637 = vand.u32 2147483647, %v3627
  %vm3638 = vcmp.eq.f32.partialorder %v3637, 8.507059e+37
  %v3639 = vand.u32 %v3627, 2147483648
  %v3640 = vor.u32 1.1754944e-38, %v3639
  %v3641 = vsel %vm3638, %v3640, %v3636
  %v3642 = vmul.f32 1.0, %v3641
  %v3643 = vmul.f32 %v3622, %v3337
  %v3644 = vmul.f32 %v3603, %v3623
  %v3645 = vadd.f32 %v3643, %v3644
  %v3646 = vtanh.pop %v3645
  %v3647 = vmul.f32 %v3642, %v3646
  %s3648 = scalar_lea.vmem %s5, 56
  %3649 = vst [vmem:[%s3648] sm:$0xff] %v3647
  %v3650 = vld [vmem:[#allocation7] sm:$0xff]
  %v3651 = vld [vmem:[#allocation7 + $0x8] sm:$0xff]
  %v3652 = vld [vmem:[#allocation7 + $0x10] sm:$0xff]
  %v3653 = vld [vmem:[#allocation7 + $0x18] sm:$0xff]
  %3654 = vmatpush.msra.mxu0 %v1334
  %3655 = vmatpush.msra.mxu0 %v1330
  %3656 = vmatpush.msra.mxu0 %v1326
  %3657 = vmatpush.msra.mxu0 %v1322
  %3658 = vmatpush.msra.mxu0 %v1318
  %3659 = vmatpush.msra.mxu0 %v1314
  %3660 = vmatpush.msra.mxu0 %v1310
  %3661 = vmatpush.msra.mxu0 %v1306
  %3662 = vmatpush.msra.mxu0 %v1302
  %3663 = vmatpush.msra.mxu0 %v1298
  %3664 = vmatpush.msra.mxu0 %v1294
  %3665 = vmatpush.msra.mxu0 %v1290
  %3666 = vmatpush.msra.mxu0 %v1286
  %3667 = vmatpush.msra.mxu0 %v1282
  %3668 = vmatpush.msra.mxu0 %v1278
  %3669 = vmatpush.msra.mxu0 %v1274
  %3670 = vmatmul.f32.gmra.mxu0 %v3493
  %v3671 = vpop.f32.mrf.mxu0
  %v3672 = vadd.f32 0.0, %v3671
  %3673 = vdwg.mxu0
  %3674 = vmatpush.msra.mxu0 %v1335
  %3675 = vmatpush.msra.mxu0 %v1331
  %3676 = vmatpush.msra.mxu0 %v1327
  %3677 = vmatpush.msra.mxu0 %v1323
  %3678 = vmatpush.msra.mxu0 %v1319
  %3679 = vmatpush.msra.mxu0 %v1315
  %3680 = vmatpush.msra.mxu0 %v1311
  %3681 = vmatpush.msra.mxu0 %v1307
  %3682 = vmatpush.msra.mxu0 %v1303
  %3683 = vmatpush.msra.mxu0 %v1299
  %3684 = vmatpush.msra.mxu0 %v1295
  %3685 = vmatpush.msra.mxu0 %v1291
  %3686 = vmatpush.msra.mxu0 %v1287
  %3687 = vmatpush.msra.mxu0 %v1283
  %3688 = vmatpush.msra.mxu0 %v1279
  %3689 = vmatpush.msra.mxu0 %v1275
  %3690 = vmatmul.f32.gmra.mxu0 %v3493
  %v3691 = vpop.f32.mrf.mxu0
  %v3692 = vadd.f32 0.0, %v3691
  %3693 = vdwg.mxu0
  %3694 = vmatpush.msra.mxu0 %v1336
  %3695 = vmatpush.msra.mxu0 %v1332
  %3696 = vmatpush.msra.mxu0 %v1328
  %3697 = vmatpush.msra.mxu0 %v1324
  %3698 = vmatpush.msra.mxu0 %v1320
  %3699 = vmatpush.msra.mxu0 %v1316
  %3700 = vmatpush.msra.mxu0 %v1312
  %3701 = vmatpush.msra.mxu0 %v1308
  %3702 = vmatpush.msra.mxu0 %v1304
  %3703 = vmatpush.msra.mxu0 %v1300
  %3704 = vmatpush.msra.mxu0 %v1296
  %3705 = vmatpush.msra.mxu0 %v1292
  %3706 = vmatpush.msra.mxu0 %v1288
  %3707 = vmatpush.msra.mxu0 %v1284
  %3708 = vmatpush.msra.mxu0 %v1280
  %3709 = vmatpush.msra.mxu0 %v1276
  %3710 = vmatmul.f32.gmra.mxu0 %v3493
  %v3711 = vpop.f32.mrf.mxu0
  %v3712 = vadd.f32 0.0, %v3711
  %3713 = vdwg.mxu0
  %3714 = vmatpush.msra.mxu0 %v1337
  %3715 = vmatpush.msra.mxu0 %v1333
  %3716 = vmatpush.msra.mxu0 %v1329
  %3717 = vmatpush.msra.mxu0 %v1325
  %3718 = vmatpush.msra.mxu0 %v1321
  %3719 = vmatpush.msra.mxu0 %v1317
  %3720 = vmatpush.msra.mxu0 %v1313
  %3721 = vmatpush.msra.mxu0 %v1309
  %3722 = vmatpush.msra.mxu0 %v1305
  %3723 = vmatpush.msra.mxu0 %v1301
  %3724 = vmatpush.msra.mxu0 %v1297
  %3725 = vmatpush.msra.mxu0 %v1293
  %3726 = vmatpush.msra.mxu0 %v1289
  %3727 = vmatpush.msra.mxu0 %v1285
  %3728 = vmatpush.msra.mxu0 %v1281
  %3729 = vmatpush.msra.mxu0 %v1277
  %3730 = vmatmul.f32.gmra.mxu0 %v3493
  %v3731 = vpop.f32.mrf.mxu0
  %v3732 = vadd.f32 0.0, %v3731
  %3733 = vdwg.mxu0
  %v3734 = vadd.f32 %v3650, %v3672
  %v3735 = vadd.f32 %v3651, %v3692
  %v3736 = vadd.f32 %v3652, %v3712
  %v3737 = vadd.f32 %v3653, %v3732
  %v3738 = vxor.u32 %v3734, 2147483648
  %v3739 = vmul.f32 %v3738, 1.442695
  %v3740 = vpow.pop %v3739
  %v3741 = vadd.f32 %v3740, 1.0
  %v3742 = vrcp.pop %v3741
  %v3743 = vmul.f32 %v3741, %v3742
  %v3744 = vsub.f32 1.0, %v3743
  %v3745 = vmul.f32 %v3742, %v3744
  %v3746 = vadd.f32 %v3742, %v3745
  %vm3747 = vweird.f32 %v3741
  %vm3748 = vweird.f32 %v3742
  %vm3749 = vmor %vm3747, %vm3748
  %v3750 = vsel %vm3749, %v3742, %v3746
  %v3751 = vand.u32 2147483647, %v3741
  %vm3752 = vcmp.eq.f32.partialorder %v3751, 8.507059e+37
  %v3753 = vand.u32 %v3741, 2147483648
  %v3754 = vor.u32 1.1754944e-38, %v3753
  %v3755 = vsel %vm3752, %v3754, %v3750
  %v3756 = vmul.f32 1.0, %v3755
  %v3757 = vxor.u32 %v3735, 2147483648
  %v3758 = vmul.f32 %v3757, 1.442695
  %v3759 = vpow.pop %v3758
  %v3760 = vadd.f32 %v3759, 1.0
  %v3761 = vrcp.pop %v3760
  %v3762 = vmul.f32 %v3760, %v3761
  %v3763 = vsub.f32 1.0, %v3762
  %v3764 = vmul.f32 %v3761, %v3763
  %v3765 = vadd.f32 %v3761, %v3764
  %vm3766 = vweird.f32 %v3760
  %vm3767 = vweird.f32 %v3761
  %vm3768 = vmor %vm3766, %vm3767
  %v3769 = vsel %vm3768, %v3761, %v3765
  %v3770 = vand.u32 2147483647, %v3760
  %vm3771 = vcmp.eq.f32.partialorder %v3770, 8.507059e+37
  %v3772 = vand.u32 %v3760, 2147483648
  %v3773 = vor.u32 1.1754944e-38, %v3772
  %v3774 = vsel %vm3771, %v3773, %v3769
  %v3775 = vmul.f32 1.0, %v3774
  %v3776 = vtanh.pop %v3736
  %v3777 = vxor.u32 %v3737, 2147483648
  %v3778 = vmul.f32 %v3777, 1.442695
  %v3779 = vpow.pop %v3778
  %v3780 = vadd.f32 %v3779, 1.0
  %v3781 = vrcp.pop %v3780
  %v3782 = vmul.f32 %v3780, %v3781
  %v3783 = vsub.f32 1.0, %v3782
  %v3784 = vmul.f32 %v3781, %v3783
  %v3785 = vadd.f32 %v3781, %v3784
  %vm3786 = vweird.f32 %v3780
  %vm3787 = vweird.f32 %v3781
  %vm3788 = vmor %vm3786, %vm3787
  %v3789 = vsel %vm3788, %v3781, %v3785
  %v3790 = vand.u32 2147483647, %v3780
  %vm3791 = vcmp.eq.f32.partialorder %v3790, 8.507059e+37
  %v3792 = vand.u32 %v3780, 2147483648
  %v3793 = vor.u32 1.1754944e-38, %v3792
  %v3794 = vsel %vm3791, %v3793, %v3789
  %v3795 = vmul.f32 1.0, %v3794
  %v3796 = vmul.f32 %v3775, %v3491
  %v3797 = vmul.f32 %v3756, %v3776
  %v3798 = vadd.f32 %v3796, %v3797
  %v3799 = vtanh.pop %v3798
  %v3800 = vmul.f32 %v3795, %v3799
  %3801 = vst [vmem:[%s51] sm:$0xff] %v3800
  %3802 = vst [vmem:[#allocation8] sm:$0xff] %v3647
  %3803 = vst [vmem:[#allocation9] sm:$0xff] %v3645
  %3804 = vst [vmem:[#allocation10] sm:$0xff] %v3800
  %3805 = vst [vmem:[#allocation11] sm:$0xff] %v3798
  %s3806 = ssub.s32 0, 0
  %s3807 = smul.u32 8, %s3806
  %p3808 = scmp.lt.s32.totalorder %s3807, 7
  %s3809 = scalar_select %p3808, %s3807, 7
  %s3810 = smul.addr %s3809, 8
  %s3811 = scalar_lea.vmem %s6, %s3810
  // Predicated region
  $region94: #{_lambda_.3} parent=0 // pred_check
    _
  $region95: #{_lambda_.3} parent=0 // pred_check_branch
    %3813 = sbr.rel (0) target = $region97
  $region96: #{_lambda_.3} parent=0 // pred_region
    _
  $region97: #{_lambda_.3} parent=0 // pred_fallthru
    _
  // Predicated region
  $region98: #{_lambda_.3} parent=0 // pred_check
    _
  $region99: #{_lambda_.3} parent=0 // pred_check_branch
    %3815 = sbr.rel (0) target = $region101
  $region100: #{_lambda_.3} parent=0 // pred_region
    %s3816 = ssub.s32 0, 0
    %s3817 = smul.u32 8, %s3816
  $region101: #{_lambda_.3} parent=0 // pred_fallthru
    _
  // Predicated region
  $region102: #{_lambda_.3} parent=0 // pred_check
    _
  $region103: #{_lambda_.3} parent=0 // pred_check_branch
    %3819 = sbr.rel (0) target = $region105
  $region104: #{_lambda_.3} parent=0 // pred_region
    _
  $region105: #{_lambda_.3} parent=0 // pred_fallthru
    _
  // Predicated region
  $region106: #{_lambda_.3} parent=0 // pred_check
    _
  $region107: #{_lambda_.3} parent=0 // pred_check_branch
    %3821 = sbr.rel (0) target = $region109
  $region108: #{_lambda_.3} parent=0 // pred_region
    %s3822 = ssub.s32 0, 0
    %s3823 = smul.u32 8, %s3822
    %p3824 = scmp.lt.s32.totalorder %s3823, 7
    %s3825 = scalar_select %p3824, %s3823, 7
    %s3826 = smul.addr %s3825, 8
    %s3827 = scalar_lea.vmem %s6, %s3826
  $region109: #{_lambda_.3} parent=0 // pred_fallthru
    _
  %3828 = vsyncmov [#allocation12]
  %s3829 = vpop.sfrf %3828
  %p3830 = scmp.eq.s32.totalorder %s3829, 0
  %p3831 = pneg %p3830
  %3833 = shalt.err (%p3831)
  %s3834 = scalar_lea.sflag [#allocation12], 1
  %3835 = vsyncmov %s3834
  %s3836 = vpop.sfrf %3835
  %p3837 = scmp.eq.s32.totalorder %s3836, 0
  %p3838 = pneg %p3837
  %3840 = shalt.err (%p3838)
  %s3841 = scalar_lea.sflag [#allocation12], 2
  %3842 = vsyncmov %s3841
  %s3843 = vpop.sfrf %3842
  %p3844 = scmp.eq.s32.totalorder %s3843, 0
  %p3845 = pneg %p3844
  %3847 = shalt.err (%p3845)
  %s3848 = scalar_lea.sflag [#allocation12], 3
  %3849 = vsyncmov %s3848
  %s3850 = vpop.sfrf %3849
  %p3851 = scmp.eq.s32.totalorder %s3850, 0
  %p3852 = pneg %p3851
  %3854 = shalt.err (%p3852)

</llo_original>
